<compile_context>
chip_gen: v7x
topology: tpu7x:2x2x1
jax: 0.10.0
libtpu: 0.0.40
codegen_flags: <defaults>
</compile_context>

<pallas_src>
from functools import partial

import jax
import jax.numpy as jnp
from jax.experimental import pallas as pl
from jax.experimental.pallas import tpu as pltpu

EPS = 1e-5


def resblock_kernel(x_ref, vec_ref, w_ref, o_ref, hpad_ref, *, kw, phases):
    # x_ref:    (N, Tp, CP)        f32   polyphase-packed input, CP = AR*C
    # vec_ref:  (8, CP)            f32   rows: g1, b1, cb1, g2, b2, cb2, 0, 0
    #                                    (each per-channel vector tiled AR times)
    # w_ref:    (2, KW, CP, CP)    bf16  per-tap block-diagonal conv weights
    # o_ref:    (N, Tp, CP)        f32
    # hpad_ref: (N, Tp+2*halo, CP) bf16  VMEM scratch (padded conv input)
    N, Tp, CP = x_ref.shape
    halo = (hpad_ref.shape[1] - Tp) // 2        # per-side pad rows (8-aligned)
    pk = (kw - 1) // 2                          # 'same' padding in packed rows
    base = halo - pk                            # row offset of tap k = 0

    x = x_ref[...]                              # (N, Tp, CP) f32
    vec = vec_ref[...]                          # (8, CP)     f32
    g1, b1, cb1 = vec[0:1], vec[1:2], vec[2:3]
    g2, b2, cb2 = vec[3:4], vec[4:5], vec[5:6]

    # Zero the scratch pad rows once (aligned stores); both convs only rewrite
    # the interior, so the pads stay zero.
    zpad = jnp.zeros((N, halo, CP), jnp.bfloat16)
    hpad_ref[:, 0:halo, :] = zpad
    hpad_ref[:, halo + Tp:halo + Tp + halo, :] = zpad

    def fold_phases(s):
        # s: (1, CP) per-lane statistic, lane a*C + c  (a = phase, c = channel).
        # Returns the per-channel average over the AR phase groups, already
        # broadcast back to all CP lanes, via (phases-1) XLU lane rotations.
        group = CP // phases
        acc = s
        for a in range(1, phases):
            acc = acc + pltpu.roll(s, a * group, axis=1)
        return acc * (1.0 / phases)

    def bn_relu(v, gamma, beta):
        # Training-mode BatchNorm1d folded into one FMA per element:
        #   scale = gamma * rsqrt(var + eps), shift = beta - mean * scale
        m = fold_phases(jnp.mean(v, axis=(0, 1), keepdims=True)[0])      # (1,CP)
        cen = v - m
        var = fold_phases(jnp.mean(cen * cen, axis=(0, 1), keepdims=True)[0])
        scale = gamma * jax.lax.rsqrt(var + EPS)                         # EUP
        shift = beta - m * scale
        return jnp.maximum(v * scale + shift, 0.0)

    def dilated_conv(h, conv_idx, cbias):
        # Write the conv input (bf16) into the padded scratch interior, then
        # accumulate KW per-tap MXU matmuls: tap k is just a k-row shift of
        # the packed axis read straight from the scratch ref (no im2col slab).
        hpad_ref[:, halo:halo + Tp, :] = h.astype(jnp.bfloat16)
        acc = None
        for k in range(kw):                               # static -> unrolled
            tap = hpad_ref[:, base + k:base + k + Tp, :]  # (N,Tp,CP) bf16
            y = jax.lax.dot_general(
                tap, w_ref[conv_idx, k],                  # (CP,CP) block-diag
                (((2,), (0,)), ((), ())),
                preferred_element_type=jnp.float32)       # (N,Tp,CP) f32
            acc = y if acc is None else acc + y
        return acc + cbias

    h = dilated_conv(bn_relu(x, g1, b1), 0, cb1)
    h = dilated_conv(bn_relu(h, g2, b2), 1, cb2)
    o_ref[...] = h + x                                    # residual, lane-dense


def resblock_forward(x_packed, vec_pack, w_pack, *, kw, phases):
    N, Tp, CP = x_packed.shape
    pk = (kw - 1) // 2
    halo = max(8, ((pk + 7) // 8) * 8)                    # sublane-aligned pad
    return pl.pallas_call(
        partial(resblock_kernel, kw=kw, phases=phases),
        out_shape=jax.ShapeDtypeStruct((N, Tp, CP), jnp.float32),
        grid=(1,),
        in_specs=[pl.BlockSpec((N, Tp, CP), lambda i: (0, 0, 0)),
                  pl.BlockSpec(vec_pack.shape, lambda i: (0, 0)),
                  pl.BlockSpec(w_pack.shape, lambda i: (0, 0, 0, 0))],
        out_specs=pl.BlockSpec((N, Tp, CP), lambda i: (0, 0, 0)),
        scratch_shapes=[pltpu.VMEM((N, Tp + 2 * halo, CP), jnp.bfloat16)],
        compiler_params=pltpu.CompilerParams(
            dimension_semantics=("arbitrary",)),
    )(x_packed, vec_pack, w_pack)


# ---------------- wrapper-side packing (layout plumbing, no compute) --------
def pack_activations(x_ncl, phases):
    # (N, C, T) NCL -> polyphase (N, T//phases, phases*C);
    # lane a*C + c holds channel c at time offset a within the packed row.
    N, C, T = x_ncl.shape
    assert T % phases == 0
    return jnp.transpose(x_ncl, (0, 2, 1)).reshape(N, T // phases, phases * C)


def unpack_activations(x_packed, channels):
    N, Tp, CP = x_packed.shape
    phases = CP // channels
    return jnp.transpose(x_packed.reshape(N, Tp * phases, channels), (0, 2, 1))


def pack_conv_weight(w_oik, phases):
    # PyTorch Conv1d weight (C_out, C_in, KW) -> per-tap block-diagonal
    # (KW, phases*C_in, phases*C_out) bf16 matrices for the polyphase layout.
    C_out, C_in, KW = w_oik.shape
    w_kio = jnp.transpose(w_oik, (2, 1, 0))                     # (KW, ci, co)
    eye = jnp.eye(phases, dtype=w_oik.dtype)
    bd = jnp.einsum('ab,kio->kaibo', eye, w_kio)                # (KW,AR,ci,AR,co)
    return bd.reshape(KW, phases * C_in, phases * C_out).astype(jnp.bfloat16)


# ---------------- pure-JAX reference (NCL layout, mirrors PyTorch) ----------
def ref_forward(x_ncl, raw, *, dilation, pad, bf16_operands=False):
    # bf16_operands=True rounds the conv operands to bf16 (f32 accumulation),
    # exactly mirroring the kernel's MXU path, for a tight structural check.
    def rnd(v):
        return v.astype(jnp.bfloat16).astype(jnp.float32) if bf16_operands else v

    def bn_relu(v, g, b):
        mean = jnp.mean(v, axis=(0, 2), keepdims=True)
        var = jnp.mean((v - mean) ** 2, axis=(0, 2), keepdims=True)
        vhat = (v - mean) * jax.lax.rsqrt(var + EPS)
        return jax.nn.relu(vhat * g[None, :, None] + b[None, :, None])

    def conv(v, w_oik, bias):
        y = jax.lax.conv_general_dilated(
            rnd(v), rnd(w_oik), window_strides=(1,), padding=[(pad, pad)],
            rhs_dilation=(dilation,), dimension_numbers=("NCH", "OIH", "NCH"))
        return y + bias[None, :, None]

    h = bn_relu(x_ncl, raw["g1"], raw["b1"])
    h = conv(h, raw["w1_oik"], raw["cb1"])
    h = bn_relu(h, raw["g2"], raw["b2"])
    h = conv(h, raw["w2_oik"], raw["cb2"])
    return h + x_ncl


if __name__ == "__main__":
    # Module-consistent small sizes: L (channels) = 32 fixed by the module,
    # block index 4 of the AR/W tables -> W = 11, AR (dilation) = 4, so the
    # polyphase-packed minor dim is AR*L = 128 lanes.
    L = 32
    KW = 11
    AR = 4
    PAD = AR * (KW - 1) // 2          # int(0.5*(1 - L + AR*(W-1) - 1 + L)) = 20
    N, T = 2, 64                      # T % AR == 0

    key = jax.random.PRNGKey(0)
    ks = jax.random.split(key, 9)

    x_ncl = jax.random.normal(ks[0], (N, L, T), dtype=jnp.float32)

    raw = {
        "g1": 1.0 + 0.1 * jax.random.normal(ks[1], (L,), jnp.float32),
        "b1": 0.1 * jax.random.normal(ks[2], (L,), jnp.float32),
        "w1_oik": 0.1 * jax.random.normal(ks[3], (L, L, KW), jnp.float32),
        "cb1": 0.1 * jax.random.normal(ks[4], (L,), jnp.float32),
        "g2": 1.0 + 0.1 * jax.random.normal(ks[5], (L,), jnp.float32),
        "b2": 0.1 * jax.random.normal(ks[6], (L,), jnp.float32),
        "w2_oik": 0.1 * jax.random.normal(ks[7], (L, L, KW), jnp.float32),
        "cb2": 0.1 * jax.random.normal(ks[8], (L,), jnp.float32),
    }

    # Kernel-side packing: per-channel vectors tiled AR times -> (8, 128);
    # conv weights -> per-tap block-diagonal (2, KW, 128, 128) bf16.
    def tile_c(v):
        return jnp.tile(v, AR)

    vec_pack = jnp.stack(
        [tile_c(raw["g1"]), tile_c(raw["b1"]), tile_c(raw["cb1"]),
         tile_c(raw["g2"]), tile_c(raw["b2"]), tile_c(raw["cb2"]),
         jnp.zeros((AR * L,), jnp.float32), jnp.zeros((AR * L,), jnp.float32)],
        axis=0)
    w_pack = jnp.stack([pack_conv_weight(raw["w1_oik"], AR),
                        pack_conv_weight(raw["w2_oik"], AR)], axis=0)

    x_packed = pack_activations(x_ncl, AR)                  # (N, T//AR, 128)
    out_packed = resblock_forward(x_packed, vec_pack, w_pack, kw=KW, phases=AR)
    out_ncl = unpack_activations(out_packed, L)             # back to (N, L, T)
    jax.block_until_ready(out_ncl)
    assert out_ncl.shape == (N, L, T)

    # Tight check vs a reference with bf16-rounded conv operands (same MXU
    # numerics as the kernel) -> validates polyphase packing / taps / BN /
    # residual indexing.
    ref_bf16 = ref_forward(x_ncl, raw, dilation=AR, pad=PAD, bf16_operands=True)
    err_bf16 = float(jnp.max(jnp.abs(out_ncl - ref_bf16)))
    assert jnp.allclose(out_ncl, ref_bf16, rtol=5e-3, atol=5e-3), err_bf16

    # Loose check vs the exact f32 PyTorch-mirroring reference: the only
    # deviation is the bf16 rounding of the MXU matmul operands.
    ref_f32 = ref_forward(x_ncl, raw, dilation=AR, pad=PAD, bf16_operands=False)
    err_f32 = float(jnp.max(jnp.abs(out_ncl - ref_f32)))
    assert jnp.allclose(out_ncl, ref_f32, rtol=5e-2, atol=5e-2), err_f32

    print("KERNEL_OK")
</pallas_src>

<mosaic_0001>
module attributes {stable_mosaic.version = 11 : i64} {
  func.func @resblock_kernel(%arg0: i32, %arg1: memref<2x16x128xf32, #tpu.memory_space<vmem>>, %arg2: memref<8x128xf32, #tpu.memory_space<vmem>>, %arg3: memref<2x11x128x128xbf16, #tpu.memory_space<vmem>>, %arg4: memref<2x16x128xf32, #tpu.memory_space<vmem>>, %arg5: memref<2x32x128xbf16, #tpu.memory_space<vmem>>) attributes {dimension_semantics = [#tpu.dimension_semantics<arbitrary>], iteration_bounds = array<i64: 1>, scalar_prefetch = 0 : i64, scratch_operands = 1 : i64, tpu.core_type = #tpu.core_type<tc>, window_params = [{pipeline_mode = #tpu.pipeline_mode<synchronous>, transform_indices = @transform_0, window_bounds = array<i64: 2, 16, 128>}, {pipeline_mode = #tpu.pipeline_mode<synchronous>, transform_indices = @transform_1, window_bounds = array<i64: 8, 128>}, {pipeline_mode = #tpu.pipeline_mode<synchronous>, transform_indices = @transform_2, window_bounds = array<i64: 2, 11, 128, 128>}, {pipeline_mode = #tpu.pipeline_mode<synchronous>, transform_indices = @transform_3, window_bounds = array<i64: 2, 16, 128>}]} {
    %c0 = arith.constant 0 : index
    %c0_0 = arith.constant 0 : index
    %c0_1 = arith.constant 0 : index
    %0 = vector.load %arg1[%c0, %c0_0, %c0_1] : memref<2x16x128xf32, #tpu.memory_space<vmem>>, vector<2x16x128xf32>
    %c0_2 = arith.constant 0 : index
    %c0_3 = arith.constant 0 : index
    %1 = vector.load %arg2[%c0_2, %c0_3] : memref<8x128xf32, #tpu.memory_space<vmem>>, vector<8x128xf32>
    %2 = vector.extract_strided_slice %1 {offsets = [0, 0], sizes = [1, 128], strides = [1, 1]} : vector<8x128xf32> to vector<1x128xf32>
    %3 = vector.extract_strided_slice %1 {offsets = [1, 0], sizes = [1, 128], strides = [1, 1]} : vector<8x128xf32> to vector<1x128xf32>
    %4 = vector.extract_strided_slice %1 {offsets = [2, 0], sizes = [1, 128], strides = [1, 1]} : vector<8x128xf32> to vector<1x128xf32>
    %5 = vector.extract_strided_slice %1 {offsets = [3, 0], sizes = [1, 128], strides = [1, 1]} : vector<8x128xf32> to vector<1x128xf32>
    %6 = vector.extract_strided_slice %1 {offsets = [4, 0], sizes = [1, 128], strides = [1, 1]} : vector<8x128xf32> to vector<1x128xf32>
    %7 = vector.extract_strided_slice %1 {offsets = [5, 0], sizes = [1, 128], strides = [1, 1]} : vector<8x128xf32> to vector<1x128xf32>
    %cst = arith.constant 0.000000e+00 : bf16
    %8 = vector.broadcast %cst : bf16 to vector<2x8x128xbf16>
    %c0_4 = arith.constant 0 : index
    %c0_5 = arith.constant 0 : index
    %c0_6 = arith.constant 0 : index
    %9 = vector.load %arg5[%c0_4, %c0_5, %c0_6] : memref<2x32x128xbf16, #tpu.memory_space<vmem>>, vector<2x8x128xbf16>
    tpu.vector_store %arg5[%c0_4, %c0_5, %c0_6], %8 {strides = array<i32>} : memref<2x32x128xbf16, #tpu.memory_space<vmem>>, vector<2x8x128xbf16>,
    %c0_7 = arith.constant 0 : index
    %c24 = arith.constant 24 : index
    %c0_8 = arith.constant 0 : index
    %10 = vector.load %arg5[%c0_7, %c24, %c0_8] : memref<2x32x128xbf16, #tpu.memory_space<vmem>>, vector<2x8x128xbf16>
    tpu.vector_store %arg5[%c0_7, %c24, %c0_8], %8 {strides = array<i32>} : memref<2x32x128xbf16, #tpu.memory_space<vmem>>, vector<2x8x128xbf16>,
    %cst_9 = arith.constant dense<0.000000e+00> : vector<128xf32>
    %11 = vector.multi_reduction <add>, %0, %cst_9 [0, 1] : vector<2x16x128xf32> to vector<128xf32>
    %12 = vector.shape_cast %11 : vector<128xf32> to vector<1x1x128xf32>
    %cst_10 = arith.constant 3.200000e+01 : f32
    %13 = vector.broadcast %cst_10 : f32 to vector<1x1x128xf32>
    %14 = arith.divf %12, %13 : vector<1x1x128xf32>
    %15 = vector.shape_cast %14 : vector<1x1x128xf32> to vector<1x128xf32>
    %c32_i32 = arith.constant 32 : i32
    %16 = tpu.dynamic_rotate %15 by %c32_i32 dim 1 : vector<1x128xf32>, i32 -> vector<1x128xf32>
    %17 = arith.addf %15, %16 : vector<1x128xf32>
    %c64_i32 = arith.constant 64 : i32
    %18 = tpu.dynamic_rotate %15 by %c64_i32 dim 1 : vector<1x128xf32>, i32 -> vector<1x128xf32>
    %19 = arith.addf %17, %18 : vector<1x128xf32>
    %c96_i32 = arith.constant 96 : i32
    %20 = tpu.dynamic_rotate %15 by %c96_i32 dim 1 : vector<1x128xf32>, i32 -> vector<1x128xf32>
    %21 = arith.addf %19, %20 : vector<1x128xf32>
    %cst_11 = arith.constant 2.500000e-01 : f32
    %22 = vector.broadcast %cst_11 : f32 to vector<1x128xf32>
    %23 = arith.mulf %21, %22 : vector<1x128xf32>
    %24 = vector.shape_cast %23 : vector<1x128xf32> to vector<1x1x128xf32>
    %25 = vector.broadcast %24 : vector<1x1x128xf32> to vector<2x16x128xf32>
    %26 = arith.subf %0, %25 : vector<2x16x128xf32>
    %27 = arith.mulf %26, %26 : vector<2x16x128xf32>
    %cst_12 = arith.constant dense<0.000000e+00> : vector<128xf32>
    %28 = vector.multi_reduction <add>, %27, %cst_12 [0, 1] : vector<2x16x128xf32> to vector<128xf32>
    %29 = vector.shape_cast %28 : vector<128xf32> to vector<1x1x128xf32>
    %cst_13 = arith.constant 3.200000e+01 : f32
    %30 = vector.broadcast %cst_13 : f32 to vector<1x1x128xf32>
    %31 = arith.divf %29, %30 : vector<1x1x128xf32>
    %32 = vector.shape_cast %31 : vector<1x1x128xf32> to vector<1x128xf32>
    %c32_i32_14 = arith.constant 32 : i32
    %33 = tpu.dynamic_rotate %32 by %c32_i32_14 dim 1 : vector<1x128xf32>, i32 -> vector<1x128xf32>
    %34 = arith.addf %32, %33 : vector<1x128xf32>
    %c64_i32_15 = arith.constant 64 : i32
    %35 = tpu.dynamic_rotate %32 by %c64_i32_15 dim 1 : vector<1x128xf32>, i32 -> vector<1x128xf32>
    %36 = arith.addf %34, %35 : vector<1x128xf32>
    %c96_i32_16 = arith.constant 96 : i32
    %37 = tpu.dynamic_rotate %32 by %c96_i32_16 dim 1 : vector<1x128xf32>, i32 -> vector<1x128xf32>
    %38 = arith.addf %36, %37 : vector<1x128xf32>
    %cst_17 = arith.constant 2.500000e-01 : f32
    %39 = vector.broadcast %cst_17 : f32 to vector<1x128xf32>
    %40 = arith.mulf %38, %39 : vector<1x128xf32>
    %cst_18 = arith.constant 9.99999974E-6 : f32
    %41 = vector.broadcast %cst_18 : f32 to vector<1x128xf32>
    %42 = arith.addf %40, %41 : vector<1x128xf32>
    %43 = math.rsqrt %42 : vector<1x128xf32>
    %44 = arith.mulf %2, %43 : vector<1x128xf32>
    %45 = arith.mulf %23, %44 : vector<1x128xf32>
    %46 = arith.subf %3, %45 : vector<1x128xf32>
    %47 = vector.shape_cast %44 : vector<1x128xf32> to vector<1x1x128xf32>
    %48 = vector.broadcast %47 : vector<1x1x128xf32> to vector<2x16x128xf32>
    %49 = arith.mulf %0, %48 : vector<2x16x128xf32>
    %50 = vector.shape_cast %46 : vector<1x128xf32> to vector<1x1x128xf32>
    %51 = vector.broadcast %50 : vector<1x1x128xf32> to vector<2x16x128xf32>
    %52 = arith.addf %49, %51 : vector<2x16x128xf32>
    %cst_19 = arith.constant 0.000000e+00 : f32
    %53 = vector.broadcast %cst_19 : f32 to vector<2x16x128xf32>
    %54 = arith.maximumf %52, %53 : vector<2x16x128xf32>
    %55 = arith.truncf %54 : vector<2x16x128xf32> to vector<2x16x128xbf16>
    %c0_20 = arith.constant 0 : index
    %c8 = arith.constant 8 : index
    %c0_21 = arith.constant 0 : index
    %56 = vector.load %arg5[%c0_20, %c8, %c0_21] : memref<2x32x128xbf16, #tpu.memory_space<vmem>>, vector<2x16x128xbf16>
    tpu.vector_store %arg5[%c0_20, %c8, %c0_21], %55 {strides = array<i32>} : memref<2x32x128xbf16, #tpu.memory_space<vmem>>, vector<2x16x128xbf16>,
    %c0_22 = arith.constant 0 : index
    %c3 = arith.constant 3 : index
    %c0_23 = arith.constant 0 : index
    %57 = vector.load %arg5[%c0_22, %c3, %c0_23] : memref<2x32x128xbf16, #tpu.memory_space<vmem>>, vector<2x16x128xbf16>
    %c0_24 = arith.constant 0 : index
    %c0_25 = arith.constant 0 : index
    %c0_26 = arith.constant 0 : index
    %c0_27 = arith.constant 0 : index
    %58 = vector.load %arg3[%c0_24, %c0_25, %c0_26, %c0_27] : memref<2x11x128x128xbf16, #tpu.memory_space<vmem>>, vector<1x1x128x128xbf16>
    %59 = vector.shape_cast %58 : vector<1x1x128x128xbf16> to vector<128x128xbf16>
    %cst_28 = arith.constant dense<0.000000e+00> : vector<2x16x128xf32>
    %60 = tpu.matmul %57, %59, %cst_28 {dimension_numbers = #tpu.dot_dimension_numbers<[2], [0], [0, 1], [1], [0, 0, 0, 1, 1, 1], [], []>} : vector<2x16x128xbf16>, vector<128x128xbf16>, vector<2x16x128xf32> -> vector<2x16x128xf32>
    %c0_29 = arith.constant 0 : index
    %c4 = arith.constant 4 : index
    %c0_30 = arith.constant 0 : index
    %61 = vector.load %arg5[%c0_29, %c4, %c0_30] : memref<2x32x128xbf16, #tpu.memory_space<vmem>>, vector<2x16x128xbf16>
    %c0_31 = arith.constant 0 : index
    %c1 = arith.constant 1 : index
    %c0_32 = arith.constant 0 : index
    %c0_33 = arith.constant 0 : index
    %62 = vector.load %arg3[%c0_31, %c1, %c0_32, %c0_33] : memref<2x11x128x128xbf16, #tpu.memory_space<vmem>>, vector<1x1x128x128xbf16>
    %63 = vector.shape_cast %62 : vector<1x1x128x128xbf16> to vector<128x128xbf16>
    %cst_34 = arith.constant dense<0.000000e+00> : vector<2x16x128xf32>
    %64 = tpu.matmul %61, %63, %cst_34 {dimension_numbers = #tpu.dot_dimension_numbers<[2], [0], [0, 1], [1], [0, 0, 0, 1, 1, 1], [], []>} : vector<2x16x128xbf16>, vector<128x128xbf16>, vector<2x16x128xf32> -> vector<2x16x128xf32>
    %65 = arith.addf %60, %64 : vector<2x16x128xf32>
    %c0_35 = arith.constant 0 : index
    %c5 = arith.constant 5 : index
    %c0_36 = arith.constant 0 : index
    %66 = vector.load %arg5[%c0_35, %c5, %c0_36] : memref<2x32x128xbf16, #tpu.memory_space<vmem>>, vector<2x16x128xbf16>
    %c0_37 = arith.constant 0 : index
    %c2 = arith.constant 2 : index
    %c0_38 = arith.constant 0 : index
    %c0_39 = arith.constant 0 : index
    %67 = vector.load %arg3[%c0_37, %c2, %c0_38, %c0_39] : memref<2x11x128x128xbf16, #tpu.memory_space<vmem>>, vector<1x1x128x128xbf16>
    %68 = vector.shape_cast %67 : vector<1x1x128x128xbf16> to vector<128x128xbf16>
    %cst_40 = arith.constant dense<0.000000e+00> : vector<2x16x128xf32>
    %69 = tpu.matmul %66, %68, %cst_40 {dimension_numbers = #tpu.dot_dimension_numbers<[2], [0], [0, 1], [1], [0, 0, 0, 1, 1, 1], [], []>} : vector<2x16x128xbf16>, vector<128x128xbf16>, vector<2x16x128xf32> -> vector<2x16x128xf32>
    %70 = arith.addf %65, %69 : vector<2x16x128xf32>
    %c0_41 = arith.constant 0 : index
    %c6 = arith.constant 6 : index
    %c0_42 = arith.constant 0 : index
    %71 = vector.load %arg5[%c0_41, %c6, %c0_42] : memref<2x32x128xbf16, #tpu.memory_space<vmem>>, vector<2x16x128xbf16>
    %c0_43 = arith.constant 0 : index
    %c3_44 = arith.constant 3 : index
    %c0_45 = arith.constant 0 : index
    %c0_46 = arith.constant 0 : index
    %72 = vector.load %arg3[%c0_43, %c3_44, %c0_45, %c0_46] : memref<2x11x128x128xbf16, #tpu.memory_space<vmem>>, vector<1x1x128x128xbf16>
    %73 = vector.shape_cast %72 : vector<1x1x128x128xbf16> to vector<128x128xbf16>
    %cst_47 = arith.constant dense<0.000000e+00> : vector<2x16x128xf32>
    %74 = tpu.matmul %71, %73, %cst_47 {dimension_numbers = #tpu.dot_dimension_numbers<[2], [0], [0, 1], [1], [0, 0, 0, 1, 1, 1], [], []>} : vector<2x16x128xbf16>, vector<128x128xbf16>, vector<2x16x128xf32> -> vector<2x16x128xf32>
    %75 = arith.addf %70, %74 : vector<2x16x128xf32>
    %c0_48 = arith.constant 0 : index
    %c7 = arith.constant 7 : index
    %c0_49 = arith.constant 0 : index
    %76 = vector.load %arg5[%c0_48, %c7, %c0_49] : memref<2x32x128xbf16, #tpu.memory_space<vmem>>, vector<2x16x128xbf16>
    %c0_50 = arith.constant 0 : index
    %c4_51 = arith.constant 4 : index
    %c0_52 = arith.constant 0 : index
    %c0_53 = arith.constant 0 : index
    %77 = vector.load %arg3[%c0_50, %c4_51, %c0_52, %c0_53] : memref<2x11x128x128xbf16, #tpu.memory_space<vmem>>, vector<1x1x128x128xbf16>
    %78 = vector.shape_cast %77 : vector<1x1x128x128xbf16> to vector<128x128xbf16>
    %cst_54 = arith.constant dense<0.000000e+00> : vector<2x16x128xf32>
    %79 = tpu.matmul %76, %78, %cst_54 {dimension_numbers = #tpu.dot_dimension_numbers<[2], [0], [0, 1], [1], [0, 0, 0, 1, 1, 1], [], []>} : vector<2x16x128xbf16>, vector<128x128xbf16>, vector<2x16x128xf32> -> vector<2x16x128xf32>
    %80 = arith.addf %75, %79 : vector<2x16x128xf32>
    %c0_55 = arith.constant 0 : index
    %c8_56 = arith.constant 8 : index
    %c0_57 = arith.constant 0 : index
    %81 = vector.load %arg5[%c0_55, %c8_56, %c0_57] : memref<2x32x128xbf16, #tpu.memory_space<vmem>>, vector<2x16x128xbf16>
    %c0_58 = arith.constant 0 : index
    %c5_59 = arith.constant 5 : index
    %c0_60 = arith.constant 0 : index
    %c0_61 = arith.constant 0 : index
    %82 = vector.load %arg3[%c0_58, %c5_59, %c0_60, %c0_61] : memref<2x11x128x128xbf16, #tpu.memory_space<vmem>>, vector<1x1x128x128xbf16>
    %83 = vector.shape_cast %82 : vector<1x1x128x128xbf16> to vector<128x128xbf16>
    %cst_62 = arith.constant dense<0.000000e+00> : vector<2x16x128xf32>
    %84 = tpu.matmul %81, %83, %cst_62 {dimension_numbers = #tpu.dot_dimension_numbers<[2], [0], [0, 1], [1], [0, 0, 0, 1, 1, 1], [], []>} : vector<2x16x128xbf16>, vector<128x128xbf16>, vector<2x16x128xf32> -> vector<2x16x128xf32>
    %85 = arith.addf %80, %84 : vector<2x16x128xf32>
    %c0_63 = arith.constant 0 : index
    %c9 = arith.constant 9 : index
    %c0_64 = arith.constant 0 : index
    %86 = vector.load %arg5[%c0_63, %c9, %c0_64] : memref<2x32x128xbf16, #tpu.memory_space<vmem>>, vector<2x16x128xbf16>
    %c0_65 = arith.constant 0 : index
    %c6_66 = arith.constant 6 : index
    %c0_67 = arith.constant 0 : index
    %c0_68 = arith.constant 0 : index
    %87 = vector.load %arg3[%c0_65, %c6_66, %c0_67, %c0_68] : memref<2x11x128x128xbf16, #tpu.memory_space<vmem>>, vector<1x1x128x128xbf16>
    %88 = vector.shape_cast %87 : vector<1x1x128x128xbf16> to vector<128x128xbf16>
    %cst_69 = arith.constant dense<0.000000e+00> : vector<2x16x128xf32>
    %89 = tpu.matmul %86, %88, %cst_69 {dimension_numbers = #tpu.dot_dimension_numbers<[2], [0], [0, 1], [1], [0, 0, 0, 1, 1, 1], [], []>} : vector<2x16x128xbf16>, vector<128x128xbf16>, vector<2x16x128xf32> -> vector<2x16x128xf32>
    %90 = arith.addf %85, %89 : vector<2x16x128xf32>
    %c0_70 = arith.constant 0 : index
    %c10 = arith.constant 10 : index
    %c0_71 = arith.constant 0 : index
    %91 = vector.load %arg5[%c0_70, %c10, %c0_71] : memref<2x32x128xbf16, #tpu.memory_space<vmem>>, vector<2x16x128xbf16>
    %c0_72 = arith.constant 0 : index
    %c7_73 = arith.constant 7 : index
    %c0_74 = arith.constant 0 : index
    %c0_75 = arith.constant 0 : index
    %92 = vector.load %arg3[%c0_72, %c7_73, %c0_74, %c0_75] : memref<2x11x128x128xbf16, #tpu.memory_space<vmem>>, vector<1x1x128x128xbf16>
    %93 = vector.shape_cast %92 : vector<1x1x128x128xbf16> to vector<128x128xbf16>
    %cst_76 = arith.constant dense<0.000000e+00> : vector<2x16x128xf32>
    %94 = tpu.matmul %91, %93, %cst_76 {dimension_numbers = #tpu.dot_dimension_numbers<[2], [0], [0, 1], [1], [0, 0, 0, 1, 1, 1], [], []>} : vector<2x16x128xbf16>, vector<128x128xbf16>, vector<2x16x128xf32> -> vector<2x16x128xf32>
    %95 = arith.addf %90, %94 : vector<2x16x128xf32>
    %c0_77 = arith.constant 0 : index
    %c11 = arith.constant 11 : index
    %c0_78 = arith.constant 0 : index
    %96 = vector.load %arg5[%c0_77, %c11, %c0_78] : memref<2x32x128xbf16, #tpu.memory_space<vmem>>, vector<2x16x128xbf16>
    %c0_79 = arith.constant 0 : index
    %c8_80 = arith.constant 8 : index
    %c0_81 = arith.constant 0 : index
    %c0_82 = arith.constant 0 : index
    %97 = vector.load %arg3[%c0_79, %c8_80, %c0_81, %c0_82] : memref<2x11x128x128xbf16, #tpu.memory_space<vmem>>, vector<1x1x128x128xbf16>
    %98 = vector.shape_cast %97 : vector<1x1x128x128xbf16> to vector<128x128xbf16>
    %cst_83 = arith.constant dense<0.000000e+00> : vector<2x16x128xf32>
    %99 = tpu.matmul %96, %98, %cst_83 {dimension_numbers = #tpu.dot_dimension_numbers<[2], [0], [0, 1], [1], [0, 0, 0, 1, 1, 1], [], []>} : vector<2x16x128xbf16>, vector<128x128xbf16>, vector<2x16x128xf32> -> vector<2x16x128xf32>
    %100 = arith.addf %95, %99 : vector<2x16x128xf32>
    %c0_84 = arith.constant 0 : index
    %c12 = arith.constant 12 : index
    %c0_85 = arith.constant 0 : index
    %101 = vector.load %arg5[%c0_84, %c12, %c0_85] : memref<2x32x128xbf16, #tpu.memory_space<vmem>>, vector<2x16x128xbf16>
    %c0_86 = arith.constant 0 : index
    %c9_87 = arith.constant 9 : index
    %c0_88 = arith.constant 0 : index
    %c0_89 = arith.constant 0 : index
    %102 = vector.load %arg3[%c0_86, %c9_87, %c0_88, %c0_89] : memref<2x11x128x128xbf16, #tpu.memory_space<vmem>>, vector<1x1x128x128xbf16>
    %103 = vector.shape_cast %102 : vector<1x1x128x128xbf16> to vector<128x128xbf16>
    %cst_90 = arith.constant dense<0.000000e+00> : vector<2x16x128xf32>
    %104 = tpu.matmul %101, %103, %cst_90 {dimension_numbers = #tpu.dot_dimension_numbers<[2], [0], [0, 1], [1], [0, 0, 0, 1, 1, 1], [], []>} : vector<2x16x128xbf16>, vector<128x128xbf16>, vector<2x16x128xf32> -> vector<2x16x128xf32>
    %105 = arith.addf %100, %104 : vector<2x16x128xf32>
    %c0_91 = arith.constant 0 : index
    %c13 = arith.constant 13 : index
    %c0_92 = arith.constant 0 : index
    %106 = vector.load %arg5[%c0_91, %c13, %c0_92] : memref<2x32x128xbf16, #tpu.memory_space<vmem>>, vector<2x16x128xbf16>
    %c0_93 = arith.constant 0 : index
    %c10_94 = arith.constant 10 : index
    %c0_95 = arith.constant 0 : index
    %c0_96 = arith.constant 0 : index
    %107 = vector.load %arg3[%c0_93, %c10_94, %c0_95, %c0_96] : memref<2x11x128x128xbf16, #tpu.memory_space<vmem>>, vector<1x1x128x128xbf16>
    %108 = vector.shape_cast %107 : vector<1x1x128x128xbf16> to vector<128x128xbf16>
    %cst_97 = arith.constant dense<0.000000e+00> : vector<2x16x128xf32>
    %109 = tpu.matmul %106, %108, %cst_97 {dimension_numbers = #tpu.dot_dimension_numbers<[2], [0], [0, 1], [1], [0, 0, 0, 1, 1, 1], [], []>} : vector<2x16x128xbf16>, vector<128x128xbf16>, vector<2x16x128xf32> -> vector<2x16x128xf32>
    %110 = arith.addf %105, %109 : vector<2x16x128xf32>
    %111 = vector.shape_cast %4 : vector<1x128xf32> to vector<1x1x128xf32>
    %112 = vector.broadcast %111 : vector<1x1x128xf32> to vector<2x16x128xf32>
    %113 = arith.addf %110, %112 : vector<2x16x128xf32>
    %cst_98 = arith.constant dense<0.000000e+00> : vector<128xf32>
    %114 = vector.multi_reduction <add>, %113, %cst_98 [0, 1] : vector<2x16x128xf32> to vector<128xf32>
    %115 = vector.shape_cast %114 : vector<128xf32> to vector<1x1x128xf32>
    %cst_99 = arith.constant 3.200000e+01 : f32
    %116 = vector.broadcast %cst_99 : f32 to vector<1x1x128xf32>
    %117 = arith.divf %115, %116 : vector<1x1x128xf32>
    %118 = vector.shape_cast %117 : vector<1x1x128xf32> to vector<1x128xf32>
    %c32_i32_100 = arith.constant 32 : i32
    %119 = tpu.dynamic_rotate %118 by %c32_i32_100 dim 1 : vector<1x128xf32>, i32 -> vector<1x128xf32>
    %120 = arith.addf %118, %119 : vector<1x128xf32>
    %c64_i32_101 = arith.constant 64 : i32
    %121 = tpu.dynamic_rotate %118 by %c64_i32_101 dim 1 : vector<1x128xf32>, i32 -> vector<1x128xf32>
    %122 = arith.addf %120, %121 : vector<1x128xf32>
    %c96_i32_102 = arith.constant 96 : i32
    %123 = tpu.dynamic_rotate %118 by %c96_i32_102 dim 1 : vector<1x128xf32>, i32 -> vector<1x128xf32>
    %124 = arith.addf %122, %123 : vector<1x128xf32>
    %cst_103 = arith.constant 2.500000e-01 : f32
    %125 = vector.broadcast %cst_103 : f32 to vector<1x128xf32>
    %126 = arith.mulf %124, %125 : vector<1x128xf32>
    %127 = vector.shape_cast %126 : vector<1x128xf32> to vector<1x1x128xf32>
    %128 = vector.broadcast %127 : vector<1x1x128xf32> to vector<2x16x128xf32>
    %129 = arith.subf %113, %128 : vector<2x16x128xf32>
    %130 = arith.mulf %129, %129 : vector<2x16x128xf32>
    %cst_104 = arith.constant dense<0.000000e+00> : vector<128xf32>
    %131 = vector.multi_reduction <add>, %130, %cst_104 [0, 1] : vector<2x16x128xf32> to vector<128xf32>
    %132 = vector.shape_cast %131 : vector<128xf32> to vector<1x1x128xf32>
    %cst_105 = arith.constant 3.200000e+01 : f32
    %133 = vector.broadcast %cst_105 : f32 to vector<1x1x128xf32>
    %134 = arith.divf %132, %133 : vector<1x1x128xf32>
    %135 = vector.shape_cast %134 : vector<1x1x128xf32> to vector<1x128xf32>
    %c32_i32_106 = arith.constant 32 : i32
    %136 = tpu.dynamic_rotate %135 by %c32_i32_106 dim 1 : vector<1x128xf32>, i32 -> vector<1x128xf32>
    %137 = arith.addf %135, %136 : vector<1x128xf32>
    %c64_i32_107 = arith.constant 64 : i32
    %138 = tpu.dynamic_rotate %135 by %c64_i32_107 dim 1 : vector<1x128xf32>, i32 -> vector<1x128xf32>
    %139 = arith.addf %137, %138 : vector<1x128xf32>
    %c96_i32_108 = arith.constant 96 : i32
    %140 = tpu.dynamic_rotate %135 by %c96_i32_108 dim 1 : vector<1x128xf32>, i32 -> vector<1x128xf32>
    %141 = arith.addf %139, %140 : vector<1x128xf32>
    %cst_109 = arith.constant 2.500000e-01 : f32
    %142 = vector.broadcast %cst_109 : f32 to vector<1x128xf32>
    %143 = arith.mulf %141, %142 : vector<1x128xf32>
    %cst_110 = arith.constant 9.99999974E-6 : f32
    %144 = vector.broadcast %cst_110 : f32 to vector<1x128xf32>
    %145 = arith.addf %143, %144 : vector<1x128xf32>
    %146 = math.rsqrt %145 : vector<1x128xf32>
    %147 = arith.mulf %5, %146 : vector<1x128xf32>
    %148 = arith.mulf %126, %147 : vector<1x128xf32>
    %149 = arith.subf %6, %148 : vector<1x128xf32>
    %150 = vector.shape_cast %147 : vector<1x128xf32> to vector<1x1x128xf32>
    %151 = vector.broadcast %150 : vector<1x1x128xf32> to vector<2x16x128xf32>
    %152 = arith.mulf %113, %151 : vector<2x16x128xf32>
    %153 = vector.shape_cast %149 : vector<1x128xf32> to vector<1x1x128xf32>
    %154 = vector.broadcast %153 : vector<1x1x128xf32> to vector<2x16x128xf32>
    %155 = arith.addf %152, %154 : vector<2x16x128xf32>
    %cst_111 = arith.constant 0.000000e+00 : f32
    %156 = vector.broadcast %cst_111 : f32 to vector<2x16x128xf32>
    %157 = arith.maximumf %155, %156 : vector<2x16x128xf32>
    %158 = arith.truncf %157 : vector<2x16x128xf32> to vector<2x16x128xbf16>
    %c0_112 = arith.constant 0 : index
    %c8_113 = arith.constant 8 : index
    %c0_114 = arith.constant 0 : index
    %159 = vector.load %arg5[%c0_112, %c8_113, %c0_114] : memref<2x32x128xbf16, #tpu.memory_space<vmem>>, vector<2x16x128xbf16>
    tpu.vector_store %arg5[%c0_112, %c8_113, %c0_114], %158 {strides = array<i32>} : memref<2x32x128xbf16, #tpu.memory_space<vmem>>, vector<2x16x128xbf16>,
    %c0_115 = arith.constant 0 : index
    %c3_116 = arith.constant 3 : index
    %c0_117 = arith.constant 0 : index
    %160 = vector.load %arg5[%c0_115, %c3_116, %c0_117] : memref<2x32x128xbf16, #tpu.memory_space<vmem>>, vector<2x16x128xbf16>
    %c1_118 = arith.constant 1 : index
    %c0_119 = arith.constant 0 : index
    %c0_120 = arith.constant 0 : index
    %c0_121 = arith.constant 0 : index
    %161 = vector.load %arg3[%c1_118, %c0_119, %c0_120, %c0_121] : memref<2x11x128x128xbf16, #tpu.memory_space<vmem>>, vector<1x1x128x128xbf16>
    %162 = vector.shape_cast %161 : vector<1x1x128x128xbf16> to vector<128x128xbf16>
    %cst_122 = arith.constant dense<0.000000e+00> : vector<2x16x128xf32>
    %163 = tpu.matmul %160, %162, %cst_122 {dimension_numbers = #tpu.dot_dimension_numbers<[2], [0], [0, 1], [1], [0, 0, 0, 1, 1, 1], [], []>} : vector<2x16x128xbf16>, vector<128x128xbf16>, vector<2x16x128xf32> -> vector<2x16x128xf32>
    %c0_123 = arith.constant 0 : index
    %c4_124 = arith.constant 4 : index
    %c0_125 = arith.constant 0 : index
    %164 = vector.load %arg5[%c0_123, %c4_124, %c0_125] : memref<2x32x128xbf16, #tpu.memory_space<vmem>>, vector<2x16x128xbf16>
    %c1_126 = arith.constant 1 : index
    %c1_127 = arith.constant 1 : index
    %c0_128 = arith.constant 0 : index
    %c0_129 = arith.constant 0 : index
    %165 = vector.load %arg3[%c1_126, %c1_127, %c0_128, %c0_129] : memref<2x11x128x128xbf16, #tpu.memory_space<vmem>>, vector<1x1x128x128xbf16>
    %166 = vector.shape_cast %165 : vector<1x1x128x128xbf16> to vector<128x128xbf16>
    %cst_130 = arith.constant dense<0.000000e+00> : vector<2x16x128xf32>
    %167 = tpu.matmul %164, %166, %cst_130 {dimension_numbers = #tpu.dot_dimension_numbers<[2], [0], [0, 1], [1], [0, 0, 0, 1, 1, 1], [], []>} : vector<2x16x128xbf16>, vector<128x128xbf16>, vector<2x16x128xf32> -> vector<2x16x128xf32>
    %168 = arith.addf %163, %167 : vector<2x16x128xf32>
    %c0_131 = arith.constant 0 : index
    %c5_132 = arith.constant 5 : index
    %c0_133 = arith.constant 0 : index
    %169 = vector.load %arg5[%c0_131, %c5_132, %c0_133] : memref<2x32x128xbf16, #tpu.memory_space<vmem>>, vector<2x16x128xbf16>
    %c1_134 = arith.constant 1 : index
    %c2_135 = arith.constant 2 : index
    %c0_136 = arith.constant 0 : index
    %c0_137 = arith.constant 0 : index
    %170 = vector.load %arg3[%c1_134, %c2_135, %c0_136, %c0_137] : memref<2x11x128x128xbf16, #tpu.memory_space<vmem>>, vector<1x1x128x128xbf16>
    %171 = vector.shape_cast %170 : vector<1x1x128x128xbf16> to vector<128x128xbf16>
    %cst_138 = arith.constant dense<0.000000e+00> : vector<2x16x128xf32>
    %172 = tpu.matmul %169, %171, %cst_138 {dimension_numbers = #tpu.dot_dimension_numbers<[2], [0], [0, 1], [1], [0, 0, 0, 1, 1, 1], [], []>} : vector<2x16x128xbf16>, vector<128x128xbf16>, vector<2x16x128xf32> -> vector<2x16x128xf32>
    %173 = arith.addf %168, %172 : vector<2x16x128xf32>
    %c0_139 = arith.constant 0 : index
    %c6_140 = arith.constant 6 : index
    %c0_141 = arith.constant 0 : index
    %174 = vector.load %arg5[%c0_139, %c6_140, %c0_141] : memref<2x32x128xbf16, #tpu.memory_space<vmem>>, vector<2x16x128xbf16>
    %c1_142 = arith.constant 1 : index
    %c3_143 = arith.constant 3 : index
    %c0_144 = arith.constant 0 : index
    %c0_145 = arith.constant 0 : index
    %175 = vector.load %arg3[%c1_142, %c3_143, %c0_144, %c0_145] : memref<2x11x128x128xbf16, #tpu.memory_space<vmem>>, vector<1x1x128x128xbf16>
    %176 = vector.shape_cast %175 : vector<1x1x128x128xbf16> to vector<128x128xbf16>
    %cst_146 = arith.constant dense<0.000000e+00> : vector<2x16x128xf32>
    %177 = tpu.matmul %174, %176, %cst_146 {dimension_numbers = #tpu.dot_dimension_numbers<[2], [0], [0, 1], [1], [0, 0, 0, 1, 1, 1], [], []>} : vector<2x16x128xbf16>, vector<128x128xbf16>, vector<2x16x128xf32> -> vector<2x16x128xf32>
    %178 = arith.addf %173, %177 : vector<2x16x128xf32>
    %c0_147 = arith.constant 0 : index
    %c7_148 = arith.constant 7 : index
    %c0_149 = arith.constant 0 : index
    %179 = vector.load %arg5[%c0_147, %c7_148, %c0_149] : memref<2x32x128xbf16, #tpu.memory_space<vmem>>, vector<2x16x128xbf16>
    %c1_150 = arith.constant 1 : index
    %c4_151 = arith.constant 4 : index
    %c0_152 = arith.constant 0 : index
    %c0_153 = arith.constant 0 : index
    %180 = vector.load %arg3[%c1_150, %c4_151, %c0_152, %c0_153] : memref<2x11x128x128xbf16, #tpu.memory_space<vmem>>, vector<1x1x128x128xbf16>
    %181 = vector.shape_cast %180 : vector<1x1x128x128xbf16> to vector<128x128xbf16>
    %cst_154 = arith.constant dense<0.000000e+00> : vector<2x16x128xf32>
    %182 = tpu.matmul %179, %181, %cst_154 {dimension_numbers = #tpu.dot_dimension_numbers<[2], [0], [0, 1], [1], [0, 0, 0, 1, 1, 1], [], []>} : vector<2x16x128xbf16>, vector<128x128xbf16>, vector<2x16x128xf32> -> vector<2x16x128xf32>
    %183 = arith.addf %178, %182 : vector<2x16x128xf32>
    %c0_155 = arith.constant 0 : index
    %c8_156 = arith.constant 8 : index
    %c0_157 = arith.constant 0 : index
    %184 = vector.load %arg5[%c0_155, %c8_156, %c0_157] : memref<2x32x128xbf16, #tpu.memory_space<vmem>>, vector<2x16x128xbf16>
    %c1_158 = arith.constant 1 : index
    %c5_159 = arith.constant 5 : index
    %c0_160 = arith.constant 0 : index
    %c0_161 = arith.constant 0 : index
    %185 = vector.load %arg3[%c1_158, %c5_159, %c0_160, %c0_161] : memref<2x11x128x128xbf16, #tpu.memory_space<vmem>>, vector<1x1x128x128xbf16>
    %186 = vector.shape_cast %185 : vector<1x1x128x128xbf16> to vector<128x128xbf16>
    %cst_162 = arith.constant dense<0.000000e+00> : vector<2x16x128xf32>
    %187 = tpu.matmul %184, %186, %cst_162 {dimension_numbers = #tpu.dot_dimension_numbers<[2], [0], [0, 1], [1], [0, 0, 0, 1, 1, 1], [], []>} : vector<2x16x128xbf16>, vector<128x128xbf16>, vector<2x16x128xf32> -> vector<2x16x128xf32>
    %188 = arith.addf %183, %187 : vector<2x16x128xf32>
    %c0_163 = arith.constant 0 : index
    %c9_164 = arith.constant 9 : index
    %c0_165 = arith.constant 0 : index
    %189 = vector.load %arg5[%c0_163, %c9_164, %c0_165] : memref<2x32x128xbf16, #tpu.memory_space<vmem>>, vector<2x16x128xbf16>
    %c1_166 = arith.constant 1 : index
    %c6_167 = arith.constant 6 : index
    %c0_168 = arith.constant 0 : index
    %c0_169 = arith.constant 0 : index
    %190 = vector.load %arg3[%c1_166, %c6_167, %c0_168, %c0_169] : memref<2x11x128x128xbf16, #tpu.memory_space<vmem>>, vector<1x1x128x128xbf16>
    %191 = vector.shape_cast %190 : vector<1x1x128x128xbf16> to vector<128x128xbf16>
    %cst_170 = arith.constant dense<0.000000e+00> : vector<2x16x128xf32>
    %192 = tpu.matmul %189, %191, %cst_170 {dimension_numbers = #tpu.dot_dimension_numbers<[2], [0], [0, 1], [1], [0, 0, 0, 1, 1, 1], [], []>} : vector<2x16x128xbf16>, vector<128x128xbf16>, vector<2x16x128xf32> -> vector<2x16x128xf32>
    %193 = arith.addf %188, %192 : vector<2x16x128xf32>
    %c0_171 = arith.constant 0 : index
    %c10_172 = arith.constant 10 : index
    %c0_173 = arith.constant 0 : index
    %194 = vector.load %arg5[%c0_171, %c10_172, %c0_173] : memref<2x32x128xbf16, #tpu.memory_space<vmem>>, vector<2x16x128xbf16>
    %c1_174 = arith.constant 1 : index
    %c7_175 = arith.constant 7 : index
    %c0_176 = arith.constant 0 : index
    %c0_177 = arith.constant 0 : index
    %195 = vector.load %arg3[%c1_174, %c7_175, %c0_176, %c0_177] : memref<2x11x128x128xbf16, #tpu.memory_space<vmem>>, vector<1x1x128x128xbf16>
    %196 = vector.shape_cast %195 : vector<1x1x128x128xbf16> to vector<128x128xbf16>
    %cst_178 = arith.constant dense<0.000000e+00> : vector<2x16x128xf32>
    %197 = tpu.matmul %194, %196, %cst_178 {dimension_numbers = #tpu.dot_dimension_numbers<[2], [0], [0, 1], [1], [0, 0, 0, 1, 1, 1], [], []>} : vector<2x16x128xbf16>, vector<128x128xbf16>, vector<2x16x128xf32> -> vector<2x16x128xf32>
    %198 = arith.addf %193, %197 : vector<2x16x128xf32>
    %c0_179 = arith.constant 0 : index
    %c11_180 = arith.constant 11 : index
    %c0_181 = arith.constant 0 : index
    %199 = vector.load %arg5[%c0_179, %c11_180, %c0_181] : memref<2x32x128xbf16, #tpu.memory_space<vmem>>, vector<2x16x128xbf16>
    %c1_182 = arith.constant 1 : index
    %c8_183 = arith.constant 8 : index
    %c0_184 = arith.constant 0 : index
    %c0_185 = arith.constant 0 : index
    %200 = vector.load %arg3[%c1_182, %c8_183, %c0_184, %c0_185] : memref<2x11x128x128xbf16, #tpu.memory_space<vmem>>, vector<1x1x128x128xbf16>
    %201 = vector.shape_cast %200 : vector<1x1x128x128xbf16> to vector<128x128xbf16>
    %cst_186 = arith.constant dense<0.000000e+00> : vector<2x16x128xf32>
    %202 = tpu.matmul %199, %201, %cst_186 {dimension_numbers = #tpu.dot_dimension_numbers<[2], [0], [0, 1], [1], [0, 0, 0, 1, 1, 1], [], []>} : vector<2x16x128xbf16>, vector<128x128xbf16>, vector<2x16x128xf32> -> vector<2x16x128xf32>
    %203 = arith.addf %198, %202 : vector<2x16x128xf32>
    %c0_187 = arith.constant 0 : index
    %c12_188 = arith.constant 12 : index
    %c0_189 = arith.constant 0 : index
    %204 = vector.load %arg5[%c0_187, %c12_188, %c0_189] : memref<2x32x128xbf16, #tpu.memory_space<vmem>>, vector<2x16x128xbf16>
    %c1_190 = arith.constant 1 : index
    %c9_191 = arith.constant 9 : index
    %c0_192 = arith.constant 0 : index
    %c0_193 = arith.constant 0 : index
    %205 = vector.load %arg3[%c1_190, %c9_191, %c0_192, %c0_193] : memref<2x11x128x128xbf16, #tpu.memory_space<vmem>>, vector<1x1x128x128xbf16>
    %206 = vector.shape_cast %205 : vector<1x1x128x128xbf16> to vector<128x128xbf16>
    %cst_194 = arith.constant dense<0.000000e+00> : vector<2x16x128xf32>
    %207 = tpu.matmul %204, %206, %cst_194 {dimension_numbers = #tpu.dot_dimension_numbers<[2], [0], [0, 1], [1], [0, 0, 0, 1, 1, 1], [], []>} : vector<2x16x128xbf16>, vector<128x128xbf16>, vector<2x16x128xf32> -> vector<2x16x128xf32>
    %208 = arith.addf %203, %207 : vector<2x16x128xf32>
    %c0_195 = arith.constant 0 : index
    %c13_196 = arith.constant 13 : index
    %c0_197 = arith.constant 0 : index
    %209 = vector.load %arg5[%c0_195, %c13_196, %c0_197] : memref<2x32x128xbf16, #tpu.memory_space<vmem>>, vector<2x16x128xbf16>
    %c1_198 = arith.constant 1 : index
    %c10_199 = arith.constant 10 : index
    %c0_200 = arith.constant 0 : index
    %c0_201 = arith.constant 0 : index
    %210 = vector.load %arg3[%c1_198, %c10_199, %c0_200, %c0_201] : memref<2x11x128x128xbf16, #tpu.memory_space<vmem>>, vector<1x1x128x128xbf16>
    %211 = vector.shape_cast %210 : vector<1x1x128x128xbf16> to vector<128x128xbf16>
    %cst_202 = arith.constant dense<0.000000e+00> : vector<2x16x128xf32>
    %212 = tpu.matmul %209, %211, %cst_202 {dimension_numbers = #tpu.dot_dimension_numbers<[2], [0], [0, 1], [1], [0, 0, 0, 1, 1, 1], [], []>} : vector<2x16x128xbf16>, vector<128x128xbf16>, vector<2x16x128xf32> -> vector<2x16x128xf32>
    %213 = arith.addf %208, %212 : vector<2x16x128xf32>
    %214 = vector.shape_cast %7 : vector<1x128xf32> to vector<1x1x128xf32>
    %215 = vector.broadcast %214 : vector<1x1x128xf32> to vector<2x16x128xf32>
    %216 = arith.addf %213, %215 : vector<2x16x128xf32>
    %217 = arith.addf %216, %0 : vector<2x16x128xf32>
    %c0_203 = arith.constant 0 : index
    %c0_204 = arith.constant 0 : index
    %c0_205 = arith.constant 0 : index
    %218 = vector.load %arg4[%c0_203, %c0_204, %c0_205] : memref<2x16x128xf32, #tpu.memory_space<vmem>>, vector<2x16x128xf32>
    tpu.vector_store %arg4[%c0_203, %c0_204, %c0_205], %217 {strides = array<i32>} : memref<2x16x128xf32, #tpu.memory_space<vmem>>, vector<2x16x128xf32>,
    return
  }
  func.func @transform_0(%arg0: i32) -> (i32, i32, i32) {
    %c0_i32 = arith.constant 0 : i32
    %c0_i32_0 = arith.constant 0 : i32
    %c0_i32_1 = arith.constant 0 : i32
    %c0_i32_2 = arith.constant 0 : i32
    return %c0_i32, %c0_i32_0, %c0_i32_1 : i32, i32, i32
  }
  func.func @transform_1(%arg0: i32) -> (i32, i32) {
    %c0_i32 = arith.constant 0 : i32
    %c0_i32_0 = arith.constant 0 : i32
    %c0_i32_1 = arith.constant 0 : i32
    return %c0_i32, %c0_i32_0 : i32, i32
  }
  func.func @transform_2(%arg0: i32) -> (i32, i32, i32, i32) {
    %c0_i32 = arith.constant 0 : i32
    %c0_i32_0 = arith.constant 0 : i32
    %c0_i32_1 = arith.constant 0 : i32
    %c0_i32_2 = arith.constant 0 : i32
    %c0_i32_3 = arith.constant 0 : i32
    return %c0_i32, %c0_i32_0, %c0_i32_1, %c0_i32_2 : i32, i32, i32, i32
  }
  func.func @transform_3(%arg0: i32) -> (i32, i32, i32) {
    %c0_i32 = arith.constant 0 : i32
    %c0_i32_0 = arith.constant 0 : i32
    %c0_i32_1 = arith.constant 0 : i32
    %c0_i32_2 = arith.constant 0 : i32
    return %c0_i32, %c0_i32_0, %c0_i32_1 : i32, i32, i32
  }
}

</mosaic_0001>

<llo_original>
// kernel: tpu_custom_call.1
$region0: #{tpu_custom_call.1}
  #allocation0 [shape = 'u32[]', space=smem, size = 0x4, offset = 0x4, fixed_abs, tag = 'smem constant byte address 0x4 - core index']
  #allocation1 [shape = 'u32[144,128]{1,0:T(1,128)}', space=vmem, size = 0x12000, scoped, tag = 'internal scratch']
  #allocation2 [shape = 'bf16[2,32,128]{2,1,0:T(16,128)(2,1)}', space=vmem, size = 0x4000, scoped, tag = 'scratch operand']
  %s0 = inlined_call_operand.hbm [shape: f32[2,16,128], index: 0, kind: input, shape index: {}]
  %s1 = inlined_call_operand.hbm [shape: f32[8,128], index: 1, kind: input, shape index: {}]
  %s2 = inlined_call_operand.hbm [shape: bf16[2,11,128,128], index: 2, kind: input, shape index: {}]
  %s3 = inlined_call_operand.hbm [shape: f32[2,16,128], index: 3, kind: output, shape index: {}]
  %s4 = sld [smem:[#allocation0]]
  $region34: #{tpu_custom_call.1} parent=0
    _
  %s6 = ssub.s32 1, %s4
  %s7 = scalar_select 0, %s6, %s4
  $region1: #{tpu_custom_call.1} parent=0
    #allocation3 [shape = 'u8[16384]{0}', space=vmem, size = 0x4000, scoped, tag = 'input window, operand 0, single buffered']
    #allocation4 [shape = 's32[1]{0}', space=sflag, size = 0x4, scoped, tag = 'scoped memory for tpu_custom_call.1']
    #allocation5 [shape = 's32[1]{0}', space=sflag, size = 0x4, scoped, tag = 'scoped memory for tpu_custom_call.1']
    #allocation6 [shape = 'u8[4096]{0}', space=vmem, size = 0x1000, scoped, tag = 'input window, operand 1, single buffered']
    #allocation7 [shape = 's32[1]{0}', space=sflag, size = 0x4, scoped, tag = 'scoped memory for tpu_custom_call.1']
    #allocation8 [shape = 'u8[720896]{0}', space=vmem, size = 0xb0000, scoped, tag = 'input window, operand 2, single buffered']
    #allocation9 [shape = 'u8[16384]{0}', space=vmem, size = 0x4000, scoped, tag = 'output window, operand 0, single buffered']
    %8 = vsyncpa [#allocation4], 0
    %9 = vsyncpa [#allocation7], 0
    %10 = vsyncpa [#allocation5], 0
    // Predicated region
    $region2: #{tpu_custom_call.1} parent=1 // pred_check
      _
    $region3: #{tpu_custom_call.1} parent=1 // pred_check_branch
      %12 = sbr.rel (0) target = $region5
    $region4: #{tpu_custom_call.1} parent=1 // pred_region
      %s14 = ssub.s32 512, 512
      %15 = vsyncadd [#allocation4], %s14
      %s16 = sshll.u32 [#allocation3], 4
      %s17 = int_to_ptr.vmem [resolvable:$true] %s16
      %22 = dma.hbm_to_vmem [thread:$0]  %s0, 512, %s17, [#allocation4], 128, 128, 8
    $region5: #{tpu_custom_call.1} parent=1 // pred_fallthru
      _
    // Predicated region
    $region6: #{tpu_custom_call.1} parent=1 // pred_check
      _
    $region7: #{tpu_custom_call.1} parent=1 // pred_check_branch
      %24 = sbr.rel (0) target = $region9
    $region8: #{tpu_custom_call.1} parent=1 // pred_region
      %s26 = ssub.s32 128, 128
      %27 = vsyncadd [#allocation7], %s26
      %s29 = sshll.u32 [#allocation6], 4
      %s30 = int_to_ptr.vmem [resolvable:$true] %s29
      %32 = dma.hbm_to_vmem [thread:$0]  %s1, 128, %s30, [#allocation7]
    $region9: #{tpu_custom_call.1} parent=1 // pred_fallthru
      _
    // Predicated region
    $region10: #{tpu_custom_call.1} parent=1 // pred_check
      _
    $region11: #{tpu_custom_call.1} parent=1 // pred_check_branch
      %34 = sbr.rel (0) target = $region13
    $region12: #{tpu_custom_call.1} parent=1 // pred_region
      %s36 = ssub.s32 22528, 22528
      %37 = vsyncadd [#allocation7], %s36
      %s38 = sshll.u32 [#allocation8], 4
      %s39 = int_to_ptr.vmem [resolvable:$true] %s38
      %44 = dma.hbm_to_vmem [thread:$0]  %s2, 22528, %s39, [#allocation7], 64, 64, 4
    $region13: #{tpu_custom_call.1} parent=1 // pred_fallthru
      _
    // Predicated region
    $region14: #{tpu_custom_call.1} parent=1 // pred_check
      _
    $region15: #{tpu_custom_call.1} parent=1 // pred_check_branch
      %46 = sbr.rel (0) target = $region17
    $region16: #{tpu_custom_call.1} parent=1 // pred_region
      %47 = dma.done [#allocation4], 512
    $region17: #{tpu_custom_call.1} parent=1 // pred_fallthru
      _
    // Predicated region
    $region18: #{tpu_custom_call.1} parent=1 // pred_check
      _
    $region19: #{tpu_custom_call.1} parent=1 // pred_check_branch
      %49 = sbr.rel (0) target = $region21
    $region20: #{tpu_custom_call.1} parent=1 // pred_region
      %50 = dma.done [#allocation7], 128
    $region21: #{tpu_custom_call.1} parent=1 // pred_fallthru
      _
    // Predicated region
    $region22: #{tpu_custom_call.1} parent=1 // pred_check
      _
    $region23: #{tpu_custom_call.1} parent=1 // pred_check_branch
      %52 = sbr.rel (0) target = $region25
    $region24: #{tpu_custom_call.1} parent=1 // pred_region
      %53 = dma.done [#allocation7], 22528
    $region25: #{tpu_custom_call.1} parent=1 // pred_fallthru
      _
    %v55 = vld [vmem:[#allocation3] sm:$0xff]
    %v56 = vld [vmem:[#allocation3 + $0x8] sm:$0xff]
    %v57 = vld [vmem:[#allocation3 + $0x10] sm:$0xff]
    %v58 = vld [vmem:[#allocation3 + $0x18] sm:$0xff]
    %v59 = vld [vmem:[#allocation6] sm:$0xff]
    %60 = vst [vmem:[#allocation2] sm:$0xf] 0
    %61 = vst [vmem:[#allocation2 + $0x10] sm:$0xf] 0
    %62 = vst [vmem:[#allocation2 + $0x8] sm:$0xf0] 0
    %63 = vst [vmem:[#allocation2 + $0x18] sm:$0xf0] 0
    %v64 = vadd.f32 %v55, %v56
    %v65 = vadd.f32 %v64, %v57
    %v66 = vadd.f32 %v65, %v58
    %v67 = vrot.slane %v66, 4
    %v68 = vadd.f32 %v66, %v67
    %v69 = vrot.slane %v68, 2
    %v70 = vadd.f32 %v68, %v69
    %v71 = vrot.slane %v70, 1
    %v72 = vadd.f32 %v70, %v71
    %v73 = vrcp.pop 32.0
    %v74 = vmul.f32 %v72, %v73
    %75 = vrot.lane.b32.xlu0 %v74, 32
    %v76 = vpop.permute.xlu0 %75
    %v77 = vadd.f32 %v74, %v76
    %78 = vrot.lane.b32.xlu0 %v74, 64
    %v79 = vpop.permute.xlu0 %78
    %v80 = vadd.f32 %v77, %v79
    %81 = vrot.lane.b32.xlu0 %v74, 96
    %v82 = vpop.permute.xlu0 %81
    %v83 = vadd.f32 %v80, %v82
    %v84 = vmul.f32 %v83, 0.25
    %v85 = vlaneseq
    %v86 = vshrl.u32 %v85, 7
    %v87 = vsub.s32 0, %v86
    %v88 = vrot.slane %v84, %v87
    %v89 = vsub.f32 %v55, %v88
    %v90 = vsub.f32 %v56, %v88
    %v91 = vsub.f32 %v57, %v88
    %v92 = vsub.f32 %v58, %v88
    %v93 = vmul.f32 %v89, %v89
    %v94 = vmul.f32 %v90, %v90
    %v95 = vmul.f32 %v91, %v91
    %v96 = vmul.f32 %v92, %v92
    %v97 = vadd.f32 %v93, %v94
    %v98 = vadd.f32 %v97, %v95
    %v99 = vadd.f32 %v98, %v96
    %v100 = vrot.slane %v99, 4
    %v101 = vadd.f32 %v99, %v100
    %v102 = vrot.slane %v101, 2
    %v103 = vadd.f32 %v101, %v102
    %v104 = vrot.slane %v103, 1
    %v105 = vadd.f32 %v103, %v104
    %v106 = vmul.f32 %v105, %v73
    %107 = vrot.lane.b32.xlu0 %v106, 32
    %v108 = vpop.permute.xlu0 %107
    %v109 = vadd.f32 %v106, %v108
    %110 = vrot.lane.b32.xlu0 %v106, 64
    %v111 = vpop.permute.xlu0 %110
    %v112 = vadd.f32 %v109, %v111
    %113 = vrot.lane.b32.xlu0 %v106, 96
    %v114 = vpop.permute.xlu0 %113
    %v115 = vadd.f32 %v112, %v114
    %v116 = vmul.f32 %v115, 0.25
    %v117 = vadd.f32 %v116, 1e-05
    %v118 = vrsqrt.pop %v117
    %v119 = vmul.f32 %v59, %v118
    %v120 = vmul.f32 %v84, %v119
    %v122 = vrot.slane %v120, 7
    %v124 = vsub.f32 %v59, %v122
    %v125 = vlaneseq
    %v126 = vshrl.u32 %v125, 7
    %v127 = vsub.s32 0, %v126
    %v128 = vrot.slane %v119, %v127
    %v129 = vmul.f32 %v55, %v128
    %v130 = vmul.f32 %v56, %v128
    %v131 = vmul.f32 %v57, %v128
    %v132 = vmul.f32 %v58, %v128
    %v133 = vlaneseq
    %v134 = vshrl.u32 %v133, 7
    %v135 = vsub.s32 1, %v134
    %v136 = vrot.slane %v124, %v135
    %v137 = vadd.f32 %v129, %v136
    %v138 = vadd.f32 %v130, %v136
    %v139 = vadd.f32 %v131, %v136
    %v140 = vadd.f32 %v132, %v136
    %v141 = vmax.f32 %v137, 0.0
    %v142 = vmax.f32 %v138, 0.0
    %v143 = vmax.f32 %v139, 0.0
    %v144 = vmax.f32 %v140, 0.0
    %v145 = vpack.c.bf16 %v142, %v141
    %v146 = vpack.c.bf16 %v144, %v143
    %v149 = vrot.slane %v145, 4
    %v150 = vrot.slane %v146, 4
    %153 = vst [vmem:[#allocation2] sm:$0xf0] %v149
    %154 = vst [vmem:[#allocation2 + $0x8] sm:$0xf] %v149
    %155 = vst [vmem:[#allocation2 + $0x10] sm:$0xf0] %v150
    %156 = vst [vmem:[#allocation2 + $0x18] sm:$0xf] %v150
    %v157 = vld [vmem:[#allocation2] sm:$0xfe]
    %v158 = vld [vmem:[#allocation2 + $0x8] sm:$0x3]
    %v159 = vld [vmem:[#allocation2 + $0x10] sm:$0xfe]
    %v160 = vld [vmem:[#allocation2 + $0x18] sm:$0x3]
    %v161 = vld [vmem:[#allocation8] sm:$0xf]
    %v162 = vld [vmem:[#allocation8 + $0x4] sm:$0xf]
    %v163 = vld [vmem:[#allocation8 + $0x8] sm:$0xf]
    %v164 = vld [vmem:[#allocation8 + $0xc] sm:$0xf]
    %v165 = vld [vmem:[#allocation8 + $0x10] sm:$0xf]
    %v166 = vld [vmem:[#allocation8 + $0x14] sm:$0xf]
    %v167 = vld [vmem:[#allocation8 + $0x18] sm:$0xf]
    %v168 = vld [vmem:[#allocation8 + $0x1c] sm:$0xf]
    %v169 = vld [vmem:[#allocation8 + $0x20] sm:$0xf]
    %v170 = vld [vmem:[#allocation8 + $0x24] sm:$0xf]
    %v171 = vld [vmem:[#allocation8 + $0x28] sm:$0xf]
    %v172 = vld [vmem:[#allocation8 + $0x2c] sm:$0xf]
    %v173 = vld [vmem:[#allocation8 + $0x30] sm:$0xf]
    %v174 = vld [vmem:[#allocation8 + $0x34] sm:$0xf]
    %v175 = vld [vmem:[#allocation8 + $0x38] sm:$0xf]
    %v176 = vld [vmem:[#allocation8 + $0x3c] sm:$0xf]
    %v177 = vld [vmem:[#allocation2] sm:$0xfc]
    %v178 = vld [vmem:[#allocation2 + $0x10] sm:$0xfc]
    %s179 = scalar_lea.vmem [#allocation8], 64
    %v180 = vld [vmem:[%s179] sm:$0xf]
    %v181 = vld [vmem:[%s179 + $0x4] sm:$0xf]
    %v182 = vld [vmem:[%s179 + $0x8] sm:$0xf]
    %v183 = vld [vmem:[%s179 + $0xc] sm:$0xf]
    %v184 = vld [vmem:[%s179 + $0x10] sm:$0xf]
    %v185 = vld [vmem:[%s179 + $0x14] sm:$0xf]
    %v186 = vld [vmem:[%s179 + $0x18] sm:$0xf]
    %v187 = vld [vmem:[%s179 + $0x1c] sm:$0xf]
    %v188 = vld [vmem:[%s179 + $0x20] sm:$0xf]
    %v189 = vld [vmem:[%s179 + $0x24] sm:$0xf]
    %v190 = vld [vmem:[%s179 + $0x28] sm:$0xf]
    %v191 = vld [vmem:[%s179 + $0x2c] sm:$0xf]
    %v192 = vld [vmem:[%s179 + $0x30] sm:$0xf]
    %v193 = vld [vmem:[%s179 + $0x34] sm:$0xf]
    %v194 = vld [vmem:[%s179 + $0x38] sm:$0xf]
    %v195 = vld [vmem:[%s179 + $0x3c] sm:$0xf]
    %vm200 = vcmask 1045504
    %v201 = vrot.slane %v177, 2
    %v202 = vrot.slane %v158, 2
    %v203 = vsel %vm200, %v201, %v202
    %v204 = vrot.slane %v178, 2
    %v205 = vrot.slane %v160, 2
    %v206 = vsel %vm200, %v204, %v205
    %v225 = vunpack.c.l.b16 %v180
    %v226 = vunpack.c.l.b16 %v181
    %v227 = vunpack.c.l.b16 %v182
    %v228 = vunpack.c.l.b16 %v183
    %v229 = vunpack.c.l.b16 %v184
    %v230 = vunpack.c.l.b16 %v185
    %v231 = vunpack.c.l.b16 %v186
    %v232 = vunpack.c.l.b16 %v187
    %v233 = vunpack.c.l.b16 %v188
    %v234 = vunpack.c.l.b16 %v189
    %v235 = vunpack.c.l.b16 %v190
    %v236 = vunpack.c.l.b16 %v191
    %v237 = vunpack.c.l.b16 %v192
    %v238 = vunpack.c.l.b16 %v193
    %v239 = vunpack.c.l.b16 %v194
    %v240 = vunpack.c.l.b16 %v195
    %v241 = vpack.c.b16 %v226, %v225
    %v242 = vpack.c.b16 %v228, %v227
    %v243 = vpack.c.b16 %v230, %v229
    %v244 = vpack.c.b16 %v232, %v231
    %v245 = vpack.c.b16 %v234, %v233
    %v246 = vpack.c.b16 %v236, %v235
    %v247 = vpack.c.b16 %v238, %v237
    %v248 = vpack.c.b16 %v240, %v239
    %257 = vmatprep.subr.bf16.mxu0 0
    %258 = vmatpush1.bf16.msra.mxu0 %v241
    %259 = vmatprep.subr.bf16.mxu0 0
    %260 = vmatpush1.bf16.msra.mxu0 %v242
    %261 = vmatprep.subr.bf16.mxu0 0
    %262 = vmatpush1.bf16.msra.mxu0 %v243
    %263 = vmatprep.subr.bf16.mxu0 0
    %264 = vmatpush1.bf16.msra.mxu0 %v244
    %265 = vmatprep.subr.bf16.mxu0 0
    %266 = vmatpush1.bf16.msra.mxu0 %v245
    %267 = vmatprep.subr.bf16.mxu0 0
    %268 = vmatpush1.bf16.msra.mxu0 %v246
    %269 = vmatprep.subr.bf16.mxu0 0
    %270 = vmatpush1.bf16.msra.mxu0 %v247
    %271 = vmatprep.subr.bf16.mxu0 0
    %272 = vmatpush1.bf16.msra.mxu0 %v248
    %273 = vmatprep.subr.bf16.mxu0 0
    %274 = vmatpush1.bf16.msra.mxu0 0
    %275 = vmatprep.subr.bf16.mxu0 0
    %276 = vmatpush1.bf16.msra.mxu0 0
    %277 = vmatprep.subr.bf16.mxu0 0
    %278 = vmatpush1.bf16.msra.mxu0 0
    %279 = vmatprep.subr.bf16.mxu0 0
    %280 = vmatpush1.bf16.msra.mxu0 0
    %281 = vmatprep.subr.bf16.mxu0 0
    %282 = vmatpush1.bf16.msra.mxu0 0
    %283 = vmatprep.subr.bf16.mxu0 0
    %284 = vmatpush1.bf16.msra.mxu0 0
    %285 = vmatprep.subr.bf16.mxu0 0
    %286 = vmatpush1.bf16.msra.mxu0 0
    %287 = vmatprep.subr.bf16.mxu0 0
    %288 = vmatpush1.bf16.msra.mxu0 0
    %289 = vmatprep.mubr.bf16.mxu0 0
    %290 = vmatmul.mubr.bf16.gmra.mrb[0].mxu0 %v203
    %v291 = vpop.f32.mrb[0].mxu0
    %v292 = vadd.f32 0.0, %v291
    %v293 = vpop.f32.mrb[0].mxu0
    %v294 = vpop.f32.mrb[0].mxu0
    %v295 = vadd.f32 0.0, %v294
    %v296 = vpop.f32.mrb[0].mxu0
    %297 = vmatprep.mubr.bf16.mxu0 0
    %298 = vmatmul.mubr.bf16.gmra.mrb[0].mxu0 %v206
    %v299 = vpop.f32.mrb[0].mxu0
    %v300 = vadd.f32 0.0, %v299
    %v301 = vpop.f32.mrb[0].mxu0
    %v302 = vpop.f32.mrb[0].mxu0
    %v303 = vadd.f32 0.0, %v302
    %v304 = vpop.f32.mrb[0].mxu0
    %305 = vdwg.mxu0
    %vm306 = vsmask.f32 6400
    %v308 = vshrl.u32 %v157, 16
    %v310 = vrot.slane %v308, 1
    %v311 = vshll.u32 %v157, 16
    %v313 = vrot.slane %v311, 2
    %v314 = vor.u32 %v310, %v313
    %v316 = vshrl.u32 %v158, 16
    %v318 = vrot.slane %v316, 1
    %v319 = vshll.u32 %v158, 16
    %v321 = vrot.slane %v319, 2
    %v322 = vor.u32 %v318, %v321
    %v323 = vsel %vm306, %v314, %v322
    %v325 = vshrl.u32 %v159, 16
    %v327 = vrot.slane %v325, 1
    %v328 = vshll.u32 %v159, 16
    %v330 = vrot.slane %v328, 2
    %v331 = vor.u32 %v327, %v330
    %v333 = vshrl.u32 %v160, 16
    %v335 = vrot.slane %v333, 1
    %v336 = vshll.u32 %v160, 16
    %v338 = vrot.slane %v336, 2
    %v339 = vor.u32 %v335, %v338
    %v340 = vsel %vm306, %v331, %v339
    %v359 = vunpack.c.l.b16 %v161
    %v360 = vunpack.c.l.b16 %v162
    %v361 = vunpack.c.l.b16 %v163
    %v362 = vunpack.c.l.b16 %v164
    %v363 = vunpack.c.l.b16 %v165
    %v364 = vunpack.c.l.b16 %v166
    %v365 = vunpack.c.l.b16 %v167
    %v366 = vunpack.c.l.b16 %v168
    %v367 = vunpack.c.l.b16 %v169
    %v368 = vunpack.c.l.b16 %v170
    %v369 = vunpack.c.l.b16 %v171
    %v370 = vunpack.c.l.b16 %v172
    %v371 = vunpack.c.l.b16 %v173
    %v372 = vunpack.c.l.b16 %v174
    %v373 = vunpack.c.l.b16 %v175
    %v374 = vunpack.c.l.b16 %v176
    %v375 = vpack.c.b16 %v360, %v359
    %v376 = vpack.c.b16 %v362, %v361
    %v377 = vpack.c.b16 %v364, %v363
    %v378 = vpack.c.b16 %v366, %v365
    %v379 = vpack.c.b16 %v368, %v367
    %v380 = vpack.c.b16 %v370, %v369
    %v381 = vpack.c.b16 %v372, %v371
    %v382 = vpack.c.b16 %v374, %v373
    %391 = vmatprep.subr.bf16.mxu0 0
    %392 = vmatpush1.bf16.msra.mxu0 %v375
    %393 = vmatprep.subr.bf16.mxu0 0
    %394 = vmatpush1.bf16.msra.mxu0 %v376
    %395 = vmatprep.subr.bf16.mxu0 0
    %396 = vmatpush1.bf16.msra.mxu0 %v377
    %397 = vmatprep.subr.bf16.mxu0 0
    %398 = vmatpush1.bf16.msra.mxu0 %v378
    %399 = vmatprep.subr.bf16.mxu0 0
    %400 = vmatpush1.bf16.msra.mxu0 %v379
    %401 = vmatprep.subr.bf16.mxu0 0
    %402 = vmatpush1.bf16.msra.mxu0 %v380
    %403 = vmatprep.subr.bf16.mxu0 0
    %404 = vmatpush1.bf16.msra.mxu0 %v381
    %405 = vmatprep.subr.bf16.mxu0 0
    %406 = vmatpush1.bf16.msra.mxu0 %v382
    %407 = vmatprep.subr.bf16.mxu0 0
    %408 = vmatpush1.bf16.msra.mxu0 0
    %409 = vmatprep.subr.bf16.mxu0 0
    %410 = vmatpush1.bf16.msra.mxu0 0
    %411 = vmatprep.subr.bf16.mxu0 0
    %412 = vmatpush1.bf16.msra.mxu0 0
    %413 = vmatprep.subr.bf16.mxu0 0
    %414 = vmatpush1.bf16.msra.mxu0 0
    %415 = vmatprep.subr.bf16.mxu0 0
    %416 = vmatpush1.bf16.msra.mxu0 0
    %417 = vmatprep.subr.bf16.mxu0 0
    %418 = vmatpush1.bf16.msra.mxu0 0
    %419 = vmatprep.subr.bf16.mxu0 0
    %420 = vmatpush1.bf16.msra.mxu0 0
    %421 = vmatprep.subr.bf16.mxu0 0
    %422 = vmatpush1.bf16.msra.mxu0 0
    %423 = vmatprep.mubr.bf16.mxu0 0
    %424 = vmatmul.mubr.bf16.gmra.mrb[0].mxu0 %v323
    %v425 = vpop.f32.mrb[0].mxu0
    %v426 = vadd.f32 %v292, %v425
    %v427 = vpop.f32.mrb[0].mxu0
    %v428 = vpop.f32.mrb[0].mxu0
    %v429 = vadd.f32 %v295, %v428
    %v430 = vpop.f32.mrb[0].mxu0
    %431 = vmatprep.mubr.bf16.mxu0 0
    %432 = vmatmul.mubr.bf16.gmra.mrb[0].mxu0 %v340
    %v433 = vpop.f32.mrb[0].mxu0
    %v434 = vadd.f32 %v300, %v433
    %v435 = vpop.f32.mrb[0].mxu0
    %v436 = vpop.f32.mrb[0].mxu0
    %v437 = vadd.f32 %v303, %v436
    %v438 = vpop.f32.mrb[0].mxu0
    %439 = vdwg.mxu0
    %v440 = vld [vmem:[#allocation2 + $0x8] sm:$0x7]
    %v441 = vld [vmem:[#allocation2 + $0x18] sm:$0x7]
    %s442 = scalar_lea.vmem [#allocation8], 128
    %v443 = vld [vmem:[%s442] sm:$0xf]
    %v444 = vld [vmem:[%s442 + $0x4] sm:$0xf]
    %v445 = vld [vmem:[%s442 + $0x8] sm:$0xf]
    %v446 = vld [vmem:[%s442 + $0xc] sm:$0xf]
    %v447 = vld [vmem:[%s442 + $0x10] sm:$0xf]
    %v448 = vld [vmem:[%s442 + $0x14] sm:$0xf]
    %v449 = vld [vmem:[%s442 + $0x18] sm:$0xf]
    %v450 = vld [vmem:[%s442 + $0x1c] sm:$0xf]
    %v451 = vld [vmem:[%s442 + $0x20] sm:$0xf]
    %v452 = vld [vmem:[%s442 + $0x24] sm:$0xf]
    %v453 = vld [vmem:[%s442 + $0x28] sm:$0xf]
    %v454 = vld [vmem:[%s442 + $0x2c] sm:$0xf]
    %v455 = vld [vmem:[%s442 + $0x30] sm:$0xf]
    %v456 = vld [vmem:[%s442 + $0x34] sm:$0xf]
    %v457 = vld [vmem:[%s442 + $0x38] sm:$0xf]
    %v458 = vld [vmem:[%s442 + $0x3c] sm:$0xf]
    %vm459 = vsmask.f32 5376
    %v461 = vshrl.u32 %v177, 16
    %v463 = vrot.slane %v461, 2
    %v464 = vshll.u32 %v177, 16
    %v466 = vrot.slane %v464, 3
    %v467 = vor.u32 %v463, %v466
    %v469 = vshrl.u32 %v440, 16
    %v471 = vrot.slane %v469, 2
    %v472 = vshll.u32 %v440, 16
    %v474 = vrot.slane %v472, 3
    %v475 = vor.u32 %v471, %v474
    %v476 = vsel %vm459, %v467, %v475
    %v478 = vshrl.u32 %v178, 16
    %v480 = vrot.slane %v478, 2
    %v481 = vshll.u32 %v178, 16
    %v483 = vrot.slane %v481, 3
    %v484 = vor.u32 %v480, %v483
    %v486 = vshrl.u32 %v441, 16
    %v488 = vrot.slane %v486, 2
    %v489 = vshll.u32 %v441, 16
    %v491 = vrot.slane %v489, 3
    %v492 = vor.u32 %v488, %v491
    %v493 = vsel %vm459, %v484, %v492
    %v512 = vunpack.c.l.b16 %v443
    %v513 = vunpack.c.l.b16 %v444
    %v514 = vunpack.c.l.b16 %v445
    %v515 = vunpack.c.l.b16 %v446
    %v516 = vunpack.c.l.b16 %v447
    %v517 = vunpack.c.l.b16 %v448
    %v518 = vunpack.c.l.b16 %v449
    %v519 = vunpack.c.l.b16 %v450
    %v520 = vunpack.c.l.b16 %v451
    %v521 = vunpack.c.l.b16 %v452
    %v522 = vunpack.c.l.b16 %v453
    %v523 = vunpack.c.l.b16 %v454
    %v524 = vunpack.c.l.b16 %v455
    %v525 = vunpack.c.l.b16 %v456
    %v526 = vunpack.c.l.b16 %v457
    %v527 = vunpack.c.l.b16 %v458
    %v528 = vpack.c.b16 %v513, %v512
    %v529 = vpack.c.b16 %v515, %v514
    %v530 = vpack.c.b16 %v517, %v516
    %v531 = vpack.c.b16 %v519, %v518
    %v532 = vpack.c.b16 %v521, %v520
    %v533 = vpack.c.b16 %v523, %v522
    %v534 = vpack.c.b16 %v525, %v524
    %v535 = vpack.c.b16 %v527, %v526
    %544 = vmatprep.subr.bf16.mxu0 0
    %545 = vmatpush1.bf16.msra.mxu0 %v528
    %546 = vmatprep.subr.bf16.mxu0 0
    %547 = vmatpush1.bf16.msra.mxu0 %v529
    %548 = vmatprep.subr.bf16.mxu0 0
    %549 = vmatpush1.bf16.msra.mxu0 %v530
    %550 = vmatprep.subr.bf16.mxu0 0
    %551 = vmatpush1.bf16.msra.mxu0 %v531
    %552 = vmatprep.subr.bf16.mxu0 0
    %553 = vmatpush1.bf16.msra.mxu0 %v532
    %554 = vmatprep.subr.bf16.mxu0 0
    %555 = vmatpush1.bf16.msra.mxu0 %v533
    %556 = vmatprep.subr.bf16.mxu0 0
    %557 = vmatpush1.bf16.msra.mxu0 %v534
    %558 = vmatprep.subr.bf16.mxu0 0
    %559 = vmatpush1.bf16.msra.mxu0 %v535
    %560 = vmatprep.subr.bf16.mxu0 0
    %561 = vmatpush1.bf16.msra.mxu0 0
    %562 = vmatprep.subr.bf16.mxu0 0
    %563 = vmatpush1.bf16.msra.mxu0 0
    %564 = vmatprep.subr.bf16.mxu0 0
    %565 = vmatpush1.bf16.msra.mxu0 0
    %566 = vmatprep.subr.bf16.mxu0 0
    %567 = vmatpush1.bf16.msra.mxu0 0
    %568 = vmatprep.subr.bf16.mxu0 0
    %569 = vmatpush1.bf16.msra.mxu0 0
    %570 = vmatprep.subr.bf16.mxu0 0
    %571 = vmatpush1.bf16.msra.mxu0 0
    %572 = vmatprep.subr.bf16.mxu0 0
    %573 = vmatpush1.bf16.msra.mxu0 0
    %574 = vmatprep.subr.bf16.mxu0 0
    %575 = vmatpush1.bf16.msra.mxu0 0
    %576 = vmatprep.mubr.bf16.mxu0 0
    %577 = vmatmul.mubr.bf16.gmra.mrb[0].mxu0 %v476
    %v578 = vpop.f32.mrb[0].mxu0
    %v579 = vadd.f32 0.0, %v578
    %v580 = vpop.f32.mrb[0].mxu0
    %v581 = vpop.f32.mrb[0].mxu0
    %v582 = vadd.f32 0.0, %v581
    %v583 = vpop.f32.mrb[0].mxu0
    %584 = vmatprep.mubr.bf16.mxu0 0
    %585 = vmatmul.mubr.bf16.gmra.mrb[0].mxu0 %v493
    %v586 = vpop.f32.mrb[0].mxu0
    %v587 = vadd.f32 0.0, %v586
    %v588 = vpop.f32.mrb[0].mxu0
    %v589 = vpop.f32.mrb[0].mxu0
    %v590 = vadd.f32 0.0, %v589
    %v591 = vpop.f32.mrb[0].mxu0
    %592 = vdwg.mxu0
    %v593 = vadd.f32 %v426, %v579
    %v594 = vadd.f32 %v429, %v582
    %v595 = vadd.f32 %v434, %v587
    %v596 = vadd.f32 %v437, %v590
    %v597 = vld [vmem:[#allocation2] sm:$0xf8]
    %v598 = vld [vmem:[#allocation2 + $0x10] sm:$0xf8]
    %s599 = scalar_lea.vmem [#allocation8], 192
    %v600 = vld [vmem:[%s599] sm:$0xf]
    %v601 = vld [vmem:[%s599 + $0x4] sm:$0xf]
    %v602 = vld [vmem:[%s599 + $0x8] sm:$0xf]
    %v603 = vld [vmem:[%s599 + $0xc] sm:$0xf]
    %v604 = vld [vmem:[%s599 + $0x10] sm:$0xf]
    %v605 = vld [vmem:[%s599 + $0x14] sm:$0xf]
    %v606 = vld [vmem:[%s599 + $0x18] sm:$0xf]
    %v607 = vld [vmem:[%s599 + $0x1c] sm:$0xf]
    %v608 = vld [vmem:[%s599 + $0x20] sm:$0xf]
    %v609 = vld [vmem:[%s599 + $0x24] sm:$0xf]
    %v610 = vld [vmem:[%s599 + $0x28] sm:$0xf]
    %v611 = vld [vmem:[%s599 + $0x2c] sm:$0xf]
    %v612 = vld [vmem:[%s599 + $0x30] sm:$0xf]
    %v613 = vld [vmem:[%s599 + $0x34] sm:$0xf]
    %v614 = vld [vmem:[%s599 + $0x38] sm:$0xf]
    %v615 = vld [vmem:[%s599 + $0x3c] sm:$0xf]
    %vm620 = vcmask 1044480
    %v621 = vrot.slane %v597, 3
    %v622 = vrot.slane %v440, 3
    %v623 = vsel %vm620, %v621, %v622
    %v624 = vrot.slane %v598, 3
    %v625 = vrot.slane %v441, 3
    %v626 = vsel %vm620, %v624, %v625
    %v645 = vunpack.c.l.b16 %v600
    %v646 = vunpack.c.l.b16 %v601
    %v647 = vunpack.c.l.b16 %v602
    %v648 = vunpack.c.l.b16 %v603
    %v649 = vunpack.c.l.b16 %v604
    %v650 = vunpack.c.l.b16 %v605
    %v651 = vunpack.c.l.b16 %v606
    %v652 = vunpack.c.l.b16 %v607
    %v653 = vunpack.c.l.b16 %v608
    %v654 = vunpack.c.l.b16 %v609
    %v655 = vunpack.c.l.b16 %v610
    %v656 = vunpack.c.l.b16 %v611
    %v657 = vunpack.c.l.b16 %v612
    %v658 = vunpack.c.l.b16 %v613
    %v659 = vunpack.c.l.b16 %v614
    %v660 = vunpack.c.l.b16 %v615
    %v661 = vpack.c.b16 %v646, %v645
    %v662 = vpack.c.b16 %v648, %v647
    %v663 = vpack.c.b16 %v650, %v649
    %v664 = vpack.c.b16 %v652, %v651
    %v665 = vpack.c.b16 %v654, %v653
    %v666 = vpack.c.b16 %v656, %v655
    %v667 = vpack.c.b16 %v658, %v657
    %v668 = vpack.c.b16 %v660, %v659
    %677 = vmatprep.subr.bf16.mxu0 0
    %678 = vmatpush1.bf16.msra.mxu0 %v661
    %679 = vmatprep.subr.bf16.mxu0 0
    %680 = vmatpush1.bf16.msra.mxu0 %v662
    %681 = vmatprep.subr.bf16.mxu0 0
    %682 = vmatpush1.bf16.msra.mxu0 %v663
    %683 = vmatprep.subr.bf16.mxu0 0
    %684 = vmatpush1.bf16.msra.mxu0 %v664
    %685 = vmatprep.subr.bf16.mxu0 0
    %686 = vmatpush1.bf16.msra.mxu0 %v665
    %687 = vmatprep.subr.bf16.mxu0 0
    %688 = vmatpush1.bf16.msra.mxu0 %v666
    %689 = vmatprep.subr.bf16.mxu0 0
    %690 = vmatpush1.bf16.msra.mxu0 %v667
    %691 = vmatprep.subr.bf16.mxu0 0
    %692 = vmatpush1.bf16.msra.mxu0 %v668
    %693 = vmatprep.subr.bf16.mxu0 0
    %694 = vmatpush1.bf16.msra.mxu0 0
    %695 = vmatprep.subr.bf16.mxu0 0
    %696 = vmatpush1.bf16.msra.mxu0 0
    %697 = vmatprep.subr.bf16.mxu0 0
    %698 = vmatpush1.bf16.msra.mxu0 0
    %699 = vmatprep.subr.bf16.mxu0 0
    %700 = vmatpush1.bf16.msra.mxu0 0
    %701 = vmatprep.subr.bf16.mxu0 0
    %702 = vmatpush1.bf16.msra.mxu0 0
    %703 = vmatprep.subr.bf16.mxu0 0
    %704 = vmatpush1.bf16.msra.mxu0 0
    %705 = vmatprep.subr.bf16.mxu0 0
    %706 = vmatpush1.bf16.msra.mxu0 0
    %707 = vmatprep.subr.bf16.mxu0 0
    %708 = vmatpush1.bf16.msra.mxu0 0
    %709 = vmatprep.mubr.bf16.mxu0 0
    %710 = vmatmul.mubr.bf16.gmra.mrb[0].mxu0 %v623
    %v711 = vpop.f32.mrb[0].mxu0
    %v712 = vadd.f32 0.0, %v711
    %v713 = vpop.f32.mrb[0].mxu0
    %v714 = vpop.f32.mrb[0].mxu0
    %v715 = vadd.f32 0.0, %v714
    %v716 = vpop.f32.mrb[0].mxu0
    %717 = vmatprep.mubr.bf16.mxu0 0
    %718 = vmatmul.mubr.bf16.gmra.mrb[0].mxu0 %v626
    %v719 = vpop.f32.mrb[0].mxu0
    %v720 = vadd.f32 0.0, %v719
    %v721 = vpop.f32.mrb[0].mxu0
    %v722 = vpop.f32.mrb[0].mxu0
    %v723 = vadd.f32 0.0, %v722
    %v724 = vpop.f32.mrb[0].mxu0
    %725 = vdwg.mxu0
    %v726 = vadd.f32 %v593, %v712
    %v727 = vadd.f32 %v594, %v715
    %v728 = vadd.f32 %v595, %v720
    %v729 = vadd.f32 %v596, %v723
    %v730 = vld [vmem:[#allocation2 + $0x8] sm:$0xf]
    %v731 = vld [vmem:[#allocation2 + $0x18] sm:$0xf]
    %s732 = scalar_lea.vmem [#allocation8], 256
    %v733 = vld [vmem:[%s732] sm:$0xf]
    %v734 = vld [vmem:[%s732 + $0x4] sm:$0xf]
    %v735 = vld [vmem:[%s732 + $0x8] sm:$0xf]
    %v736 = vld [vmem:[%s732 + $0xc] sm:$0xf]
    %v737 = vld [vmem:[%s732 + $0x10] sm:$0xf]
    %v738 = vld [vmem:[%s732 + $0x14] sm:$0xf]
    %v739 = vld [vmem:[%s732 + $0x18] sm:$0xf]
    %v740 = vld [vmem:[%s732 + $0x1c] sm:$0xf]
    %v741 = vld [vmem:[%s732 + $0x20] sm:$0xf]
    %v742 = vld [vmem:[%s732 + $0x24] sm:$0xf]
    %v743 = vld [vmem:[%s732 + $0x28] sm:$0xf]
    %v744 = vld [vmem:[%s732 + $0x2c] sm:$0xf]
    %v745 = vld [vmem:[%s732 + $0x30] sm:$0xf]
    %v746 = vld [vmem:[%s732 + $0x34] sm:$0xf]
    %v747 = vld [vmem:[%s732 + $0x38] sm:$0xf]
    %v748 = vld [vmem:[%s732 + $0x3c] sm:$0xf]
    %vm749 = vsmask.f32 4352
    %v751 = vshrl.u32 %v597, 16
    %v753 = vrot.slane %v751, 3
    %v754 = vshll.u32 %v597, 16
    %v756 = vrot.slane %v754, 4
    %v757 = vor.u32 %v753, %v756
    %v759 = vshrl.u32 %v730, 16
    %v761 = vrot.slane %v759, 3
    %v762 = vshll.u32 %v730, 16
    %v764 = vrot.slane %v762, 4
    %v765 = vor.u32 %v761, %v764
    %v766 = vsel %vm749, %v757, %v765
    %v768 = vshrl.u32 %v598, 16
    %v770 = vrot.slane %v768, 3
    %v771 = vshll.u32 %v598, 16
    %v773 = vrot.slane %v771, 4
    %v774 = vor.u32 %v770, %v773
    %v776 = vshrl.u32 %v731, 16
    %v778 = vrot.slane %v776, 3
    %v779 = vshll.u32 %v731, 16
    %v781 = vrot.slane %v779, 4
    %v782 = vor.u32 %v778, %v781
    %v783 = vsel %vm749, %v774, %v782
    %v802 = vunpack.c.l.b16 %v733
    %v803 = vunpack.c.l.b16 %v734
    %v804 = vunpack.c.l.b16 %v735
    %v805 = vunpack.c.l.b16 %v736
    %v806 = vunpack.c.l.b16 %v737
    %v807 = vunpack.c.l.b16 %v738
    %v808 = vunpack.c.l.b16 %v739
    %v809 = vunpack.c.l.b16 %v740
    %v810 = vunpack.c.l.b16 %v741
    %v811 = vunpack.c.l.b16 %v742
    %v812 = vunpack.c.l.b16 %v743
    %v813 = vunpack.c.l.b16 %v744
    %v814 = vunpack.c.l.b16 %v745
    %v815 = vunpack.c.l.b16 %v746
    %v816 = vunpack.c.l.b16 %v747
    %v817 = vunpack.c.l.b16 %v748
    %v818 = vpack.c.b16 %v803, %v802
    %v819 = vpack.c.b16 %v805, %v804
    %v820 = vpack.c.b16 %v807, %v806
    %v821 = vpack.c.b16 %v809, %v808
    %v822 = vpack.c.b16 %v811, %v810
    %v823 = vpack.c.b16 %v813, %v812
    %v824 = vpack.c.b16 %v815, %v814
    %v825 = vpack.c.b16 %v817, %v816
    %834 = vmatprep.subr.bf16.mxu0 0
    %835 = vmatpush1.bf16.msra.mxu0 %v818
    %836 = vmatprep.subr.bf16.mxu0 0
    %837 = vmatpush1.bf16.msra.mxu0 %v819
    %838 = vmatprep.subr.bf16.mxu0 0
    %839 = vmatpush1.bf16.msra.mxu0 %v820
    %840 = vmatprep.subr.bf16.mxu0 0
    %841 = vmatpush1.bf16.msra.mxu0 %v821
    %842 = vmatprep.subr.bf16.mxu0 0
    %843 = vmatpush1.bf16.msra.mxu0 %v822
    %844 = vmatprep.subr.bf16.mxu0 0
    %845 = vmatpush1.bf16.msra.mxu0 %v823
    %846 = vmatprep.subr.bf16.mxu0 0
    %847 = vmatpush1.bf16.msra.mxu0 %v824
    %848 = vmatprep.subr.bf16.mxu0 0
    %849 = vmatpush1.bf16.msra.mxu0 %v825
    %850 = vmatprep.subr.bf16.mxu0 0
    %851 = vmatpush1.bf16.msra.mxu0 0
    %852 = vmatprep.subr.bf16.mxu0 0
    %853 = vmatpush1.bf16.msra.mxu0 0
    %854 = vmatprep.subr.bf16.mxu0 0
    %855 = vmatpush1.bf16.msra.mxu0 0
    %856 = vmatprep.subr.bf16.mxu0 0
    %857 = vmatpush1.bf16.msra.mxu0 0
    %858 = vmatprep.subr.bf16.mxu0 0
    %859 = vmatpush1.bf16.msra.mxu0 0
    %860 = vmatprep.subr.bf16.mxu0 0
    %861 = vmatpush1.bf16.msra.mxu0 0
    %862 = vmatprep.subr.bf16.mxu0 0
    %863 = vmatpush1.bf16.msra.mxu0 0
    %864 = vmatprep.subr.bf16.mxu0 0
    %865 = vmatpush1.bf16.msra.mxu0 0
    %866 = vmatprep.mubr.bf16.mxu0 0
    %867 = vmatmul.mubr.bf16.gmra.mrb[0].mxu0 %v766
    %v868 = vpop.f32.mrb[0].mxu0
    %v869 = vadd.f32 0.0, %v868
    %v870 = vpop.f32.mrb[0].mxu0
    %v871 = vpop.f32.mrb[0].mxu0
    %v872 = vadd.f32 0.0, %v871
    %v873 = vpop.f32.mrb[0].mxu0
    %874 = vmatprep.mubr.bf16.mxu0 0
    %875 = vmatmul.mubr.bf16.gmra.mrb[0].mxu0 %v783
    %v876 = vpop.f32.mrb[0].mxu0
    %v877 = vadd.f32 0.0, %v876
    %v878 = vpop.f32.mrb[0].mxu0
    %v879 = vpop.f32.mrb[0].mxu0
    %v880 = vadd.f32 0.0, %v879
    %v881 = vpop.f32.mrb[0].mxu0
    %882 = vdwg.mxu0
    %v883 = vadd.f32 %v726, %v869
    %v884 = vadd.f32 %v727, %v872
    %v885 = vadd.f32 %v728, %v877
    %v886 = vadd.f32 %v729, %v880
    %v887 = vld [vmem:[#allocation2] sm:$0xf0]
    %v888 = vld [vmem:[#allocation2 + $0x10] sm:$0xf0]
    %s889 = scalar_lea.vmem [#allocation8], 320
    %v890 = vld [vmem:[%s889] sm:$0xf]
    %v891 = vld [vmem:[%s889 + $0x4] sm:$0xf]
    %v892 = vld [vmem:[%s889 + $0x8] sm:$0xf]
    %v893 = vld [vmem:[%s889 + $0xc] sm:$0xf]
    %v894 = vld [vmem:[%s889 + $0x10] sm:$0xf]
    %v895 = vld [vmem:[%s889 + $0x14] sm:$0xf]
    %v896 = vld [vmem:[%s889 + $0x18] sm:$0xf]
    %v897 = vld [vmem:[%s889 + $0x1c] sm:$0xf]
    %v898 = vld [vmem:[%s889 + $0x20] sm:$0xf]
    %v899 = vld [vmem:[%s889 + $0x24] sm:$0xf]
    %v900 = vld [vmem:[%s889 + $0x28] sm:$0xf]
    %v901 = vld [vmem:[%s889 + $0x2c] sm:$0xf]
    %v902 = vld [vmem:[%s889 + $0x30] sm:$0xf]
    %v903 = vld [vmem:[%s889 + $0x34] sm:$0xf]
    %v904 = vld [vmem:[%s889 + $0x38] sm:$0xf]
    %v905 = vld [vmem:[%s889 + $0x3c] sm:$0xf]
    %vm910 = vcmask 1043456
    %v911 = vrot.slane %v887, 4
    %v912 = vrot.slane %v730, 4
    %v913 = vsel %vm910, %v911, %v912
    %v914 = vrot.slane %v888, 4
    %v915 = vrot.slane %v731, 4
    %v916 = vsel %vm910, %v914, %v915
    %v935 = vunpack.c.l.b16 %v890
    %v936 = vunpack.c.l.b16 %v891
    %v937 = vunpack.c.l.b16 %v892
    %v938 = vunpack.c.l.b16 %v893
    %v939 = vunpack.c.l.b16 %v894
    %v940 = vunpack.c.l.b16 %v895
    %v941 = vunpack.c.l.b16 %v896
    %v942 = vunpack.c.l.b16 %v897
    %v943 = vunpack.c.l.b16 %v898
    %v944 = vunpack.c.l.b16 %v899
    %v945 = vunpack.c.l.b16 %v900
    %v946 = vunpack.c.l.b16 %v901
    %v947 = vunpack.c.l.b16 %v902
    %v948 = vunpack.c.l.b16 %v903
    %v949 = vunpack.c.l.b16 %v904
    %v950 = vunpack.c.l.b16 %v905
    %v951 = vpack.c.b16 %v936, %v935
    %v952 = vpack.c.b16 %v938, %v937
    %v953 = vpack.c.b16 %v940, %v939
    %v954 = vpack.c.b16 %v942, %v941
    %v955 = vpack.c.b16 %v944, %v943
    %v956 = vpack.c.b16 %v946, %v945
    %v957 = vpack.c.b16 %v948, %v947
    %v958 = vpack.c.b16 %v950, %v949
    %967 = vmatprep.subr.bf16.mxu0 0
    %968 = vmatpush1.bf16.msra.mxu0 %v951
    %969 = vmatprep.subr.bf16.mxu0 0
    %970 = vmatpush1.bf16.msra.mxu0 %v952
    %971 = vmatprep.subr.bf16.mxu0 0
    %972 = vmatpush1.bf16.msra.mxu0 %v953
    %973 = vmatprep.subr.bf16.mxu0 0
    %974 = vmatpush1.bf16.msra.mxu0 %v954
    %975 = vmatprep.subr.bf16.mxu0 0
    %976 = vmatpush1.bf16.msra.mxu0 %v955
    %977 = vmatprep.subr.bf16.mxu0 0
    %978 = vmatpush1.bf16.msra.mxu0 %v956
    %979 = vmatprep.subr.bf16.mxu0 0
    %980 = vmatpush1.bf16.msra.mxu0 %v957
    %981 = vmatprep.subr.bf16.mxu0 0
    %982 = vmatpush1.bf16.msra.mxu0 %v958
    %983 = vmatprep.subr.bf16.mxu0 0
    %984 = vmatpush1.bf16.msra.mxu0 0
    %985 = vmatprep.subr.bf16.mxu0 0
    %986 = vmatpush1.bf16.msra.mxu0 0
    %987 = vmatprep.subr.bf16.mxu0 0
    %988 = vmatpush1.bf16.msra.mxu0 0
    %989 = vmatprep.subr.bf16.mxu0 0
    %990 = vmatpush1.bf16.msra.mxu0 0
    %991 = vmatprep.subr.bf16.mxu0 0
    %992 = vmatpush1.bf16.msra.mxu0 0
    %993 = vmatprep.subr.bf16.mxu0 0
    %994 = vmatpush1.bf16.msra.mxu0 0
    %995 = vmatprep.subr.bf16.mxu0 0
    %996 = vmatpush1.bf16.msra.mxu0 0
    %997 = vmatprep.subr.bf16.mxu0 0
    %998 = vmatpush1.bf16.msra.mxu0 0
    %999 = vmatprep.mubr.bf16.mxu0 0
    %1000 = vmatmul.mubr.bf16.gmra.mrb[0].mxu0 %v913
    %v1001 = vpop.f32.mrb[0].mxu0
    %v1002 = vadd.f32 0.0, %v1001
    %v1003 = vpop.f32.mrb[0].mxu0
    %v1004 = vpop.f32.mrb[0].mxu0
    %v1005 = vadd.f32 0.0, %v1004
    %v1006 = vpop.f32.mrb[0].mxu0
    %1007 = vmatprep.mubr.bf16.mxu0 0
    %1008 = vmatmul.mubr.bf16.gmra.mrb[0].mxu0 %v916
    %v1009 = vpop.f32.mrb[0].mxu0
    %v1010 = vadd.f32 0.0, %v1009
    %v1011 = vpop.f32.mrb[0].mxu0
    %v1012 = vpop.f32.mrb[0].mxu0
    %v1013 = vadd.f32 0.0, %v1012
    %v1014 = vpop.f32.mrb[0].mxu0
    %1015 = vdwg.mxu0
    %v1016 = vadd.f32 %v883, %v1002
    %v1017 = vadd.f32 %v884, %v1005
    %v1018 = vadd.f32 %v885, %v1010
    %v1019 = vadd.f32 %v886, %v1013
    %v1020 = vld [vmem:[#allocation2 + $0x8] sm:$0x1f]
    %v1021 = vld [vmem:[#allocation2 + $0x18] sm:$0x1f]
    %s1022 = scalar_lea.vmem [#allocation8], 384
    %v1023 = vld [vmem:[%s1022] sm:$0xf]
    %v1024 = vld [vmem:[%s1022 + $0x4] sm:$0xf]
    %v1025 = vld [vmem:[%s1022 + $0x8] sm:$0xf]
    %v1026 = vld [vmem:[%s1022 + $0xc] sm:$0xf]
    %v1027 = vld [vmem:[%s1022 + $0x10] sm:$0xf]
    %v1028 = vld [vmem:[%s1022 + $0x14] sm:$0xf]
    %v1029 = vld [vmem:[%s1022 + $0x18] sm:$0xf]
    %v1030 = vld [vmem:[%s1022 + $0x1c] sm:$0xf]
    %v1031 = vld [vmem:[%s1022 + $0x20] sm:$0xf]
    %v1032 = vld [vmem:[%s1022 + $0x24] sm:$0xf]
    %v1033 = vld [vmem:[%s1022 + $0x28] sm:$0xf]
    %v1034 = vld [vmem:[%s1022 + $0x2c] sm:$0xf]
    %v1035 = vld [vmem:[%s1022 + $0x30] sm:$0xf]
    %v1036 = vld [vmem:[%s1022 + $0x34] sm:$0xf]
    %v1037 = vld [vmem:[%s1022 + $0x38] sm:$0xf]
    %v1038 = vld [vmem:[%s1022 + $0x3c] sm:$0xf]
    %vm1039 = vsmask.f32 3328
    %v1041 = vshrl.u32 %v887, 16
    %v1043 = vrot.slane %v1041, 4
    %v1044 = vshll.u32 %v887, 16
    %v1046 = vrot.slane %v1044, 5
    %v1047 = vor.u32 %v1043, %v1046
    %v1049 = vshrl.u32 %v1020, 16
    %v1051 = vrot.slane %v1049, 4
    %v1052 = vshll.u32 %v1020, 16
    %v1054 = vrot.slane %v1052, 5
    %v1055 = vor.u32 %v1051, %v1054
    %v1056 = vsel %vm1039, %v1047, %v1055
    %v1058 = vshrl.u32 %v888, 16
    %v1060 = vrot.slane %v1058, 4
    %v1061 = vshll.u32 %v888, 16
    %v1063 = vrot.slane %v1061, 5
    %v1064 = vor.u32 %v1060, %v1063
    %v1066 = vshrl.u32 %v1021, 16
    %v1068 = vrot.slane %v1066, 4
    %v1069 = vshll.u32 %v1021, 16
    %v1071 = vrot.slane %v1069, 5
    %v1072 = vor.u32 %v1068, %v1071
    %v1073 = vsel %vm1039, %v1064, %v1072
    %v1092 = vunpack.c.l.b16 %v1023
    %v1093 = vunpack.c.l.b16 %v1024
    %v1094 = vunpack.c.l.b16 %v1025
    %v1095 = vunpack.c.l.b16 %v1026
    %v1096 = vunpack.c.l.b16 %v1027
    %v1097 = vunpack.c.l.b16 %v1028
    %v1098 = vunpack.c.l.b16 %v1029
    %v1099 = vunpack.c.l.b16 %v1030
    %v1100 = vunpack.c.l.b16 %v1031
    %v1101 = vunpack.c.l.b16 %v1032
    %v1102 = vunpack.c.l.b16 %v1033
    %v1103 = vunpack.c.l.b16 %v1034
    %v1104 = vunpack.c.l.b16 %v1035
    %v1105 = vunpack.c.l.b16 %v1036
    %v1106 = vunpack.c.l.b16 %v1037
    %v1107 = vunpack.c.l.b16 %v1038
    %v1108 = vpack.c.b16 %v1093, %v1092
    %v1109 = vpack.c.b16 %v1095, %v1094
    %v1110 = vpack.c.b16 %v1097, %v1096
    %v1111 = vpack.c.b16 %v1099, %v1098
    %v1112 = vpack.c.b16 %v1101, %v1100
    %v1113 = vpack.c.b16 %v1103, %v1102
    %v1114 = vpack.c.b16 %v1105, %v1104
    %v1115 = vpack.c.b16 %v1107, %v1106
    %1124 = vmatprep.subr.bf16.mxu0 0
    %1125 = vmatpush1.bf16.msra.mxu0 %v1108
    %1126 = vmatprep.subr.bf16.mxu0 0
    %1127 = vmatpush1.bf16.msra.mxu0 %v1109
    %1128 = vmatprep.subr.bf16.mxu0 0
    %1129 = vmatpush1.bf16.msra.mxu0 %v1110
    %1130 = vmatprep.subr.bf16.mxu0 0
    %1131 = vmatpush1.bf16.msra.mxu0 %v1111
    %1132 = vmatprep.subr.bf16.mxu0 0
    %1133 = vmatpush1.bf16.msra.mxu0 %v1112
    %1134 = vmatprep.subr.bf16.mxu0 0
    %1135 = vmatpush1.bf16.msra.mxu0 %v1113
    %1136 = vmatprep.subr.bf16.mxu0 0
    %1137 = vmatpush1.bf16.msra.mxu0 %v1114
    %1138 = vmatprep.subr.bf16.mxu0 0
    %1139 = vmatpush1.bf16.msra.mxu0 %v1115
    %1140 = vmatprep.subr.bf16.mxu0 0
    %1141 = vmatpush1.bf16.msra.mxu0 0
    %1142 = vmatprep.subr.bf16.mxu0 0
    %1143 = vmatpush1.bf16.msra.mxu0 0
    %1144 = vmatprep.subr.bf16.mxu0 0
    %1145 = vmatpush1.bf16.msra.mxu0 0
    %1146 = vmatprep.subr.bf16.mxu0 0
    %1147 = vmatpush1.bf16.msra.mxu0 0
    %1148 = vmatprep.subr.bf16.mxu0 0
    %1149 = vmatpush1.bf16.msra.mxu0 0
    %1150 = vmatprep.subr.bf16.mxu0 0
    %1151 = vmatpush1.bf16.msra.mxu0 0
    %1152 = vmatprep.subr.bf16.mxu0 0
    %1153 = vmatpush1.bf16.msra.mxu0 0
    %1154 = vmatprep.subr.bf16.mxu0 0
    %1155 = vmatpush1.bf16.msra.mxu0 0
    %1156 = vmatprep.mubr.bf16.mxu0 0
    %1157 = vmatmul.mubr.bf16.gmra.mrb[0].mxu0 %v1056
    %v1158 = vpop.f32.mrb[0].mxu0
    %v1159 = vadd.f32 0.0, %v1158
    %v1160 = vpop.f32.mrb[0].mxu0
    %v1161 = vpop.f32.mrb[0].mxu0
    %v1162 = vadd.f32 0.0, %v1161
    %v1163 = vpop.f32.mrb[0].mxu0
    %1164 = vmatprep.mubr.bf16.mxu0 0
    %1165 = vmatmul.mubr.bf16.gmra.mrb[0].mxu0 %v1073
    %v1166 = vpop.f32.mrb[0].mxu0
    %v1167 = vadd.f32 0.0, %v1166
    %v1168 = vpop.f32.mrb[0].mxu0
    %v1169 = vpop.f32.mrb[0].mxu0
    %v1170 = vadd.f32 0.0, %v1169
    %v1171 = vpop.f32.mrb[0].mxu0
    %1172 = vdwg.mxu0
    %v1173 = vadd.f32 %v1016, %v1159
    %v1174 = vadd.f32 %v1017, %v1162
    %v1175 = vadd.f32 %v1018, %v1167
    %v1176 = vadd.f32 %v1019, %v1170
    %v1177 = vld [vmem:[#allocation2] sm:$0xe0]
    %v1178 = vld [vmem:[#allocation2 + $0x10] sm:$0xe0]
    %s1179 = scalar_lea.vmem [#allocation8], 448
    %v1180 = vld [vmem:[%s1179] sm:$0xf]
    %v1181 = vld [vmem:[%s1179 + $0x4] sm:$0xf]
    %v1182 = vld [vmem:[%s1179 + $0x8] sm:$0xf]
    %v1183 = vld [vmem:[%s1179 + $0xc] sm:$0xf]
    %v1184 = vld [vmem:[%s1179 + $0x10] sm:$0xf]
    %v1185 = vld [vmem:[%s1179 + $0x14] sm:$0xf]
    %v1186 = vld [vmem:[%s1179 + $0x18] sm:$0xf]
    %v1187 = vld [vmem:[%s1179 + $0x1c] sm:$0xf]
    %v1188 = vld [vmem:[%s1179 + $0x20] sm:$0xf]
    %v1189 = vld [vmem:[%s1179 + $0x24] sm:$0xf]
    %v1190 = vld [vmem:[%s1179 + $0x28] sm:$0xf]
    %v1191 = vld [vmem:[%s1179 + $0x2c] sm:$0xf]
    %v1192 = vld [vmem:[%s1179 + $0x30] sm:$0xf]
    %v1193 = vld [vmem:[%s1179 + $0x34] sm:$0xf]
    %v1194 = vld [vmem:[%s1179 + $0x38] sm:$0xf]
    %v1195 = vld [vmem:[%s1179 + $0x3c] sm:$0xf]
    %vm1200 = vcmask 1042432
    %v1201 = vrot.slane %v1177, 5
    %v1202 = vrot.slane %v1020, 5
    %v1203 = vsel %vm1200, %v1201, %v1202
    %v1204 = vrot.slane %v1178, 5
    %v1205 = vrot.slane %v1021, 5
    %v1206 = vsel %vm1200, %v1204, %v1205
    %v1225 = vunpack.c.l.b16 %v1180
    %v1226 = vunpack.c.l.b16 %v1181
    %v1227 = vunpack.c.l.b16 %v1182
    %v1228 = vunpack.c.l.b16 %v1183
    %v1229 = vunpack.c.l.b16 %v1184
    %v1230 = vunpack.c.l.b16 %v1185
    %v1231 = vunpack.c.l.b16 %v1186
    %v1232 = vunpack.c.l.b16 %v1187
    %v1233 = vunpack.c.l.b16 %v1188
    %v1234 = vunpack.c.l.b16 %v1189
    %v1235 = vunpack.c.l.b16 %v1190
    %v1236 = vunpack.c.l.b16 %v1191
    %v1237 = vunpack.c.l.b16 %v1192
    %v1238 = vunpack.c.l.b16 %v1193
    %v1239 = vunpack.c.l.b16 %v1194
    %v1240 = vunpack.c.l.b16 %v1195
    %v1241 = vpack.c.b16 %v1226, %v1225
    %v1242 = vpack.c.b16 %v1228, %v1227
    %v1243 = vpack.c.b16 %v1230, %v1229
    %v1244 = vpack.c.b16 %v1232, %v1231
    %v1245 = vpack.c.b16 %v1234, %v1233
    %v1246 = vpack.c.b16 %v1236, %v1235
    %v1247 = vpack.c.b16 %v1238, %v1237
    %v1248 = vpack.c.b16 %v1240, %v1239
    %1257 = vmatprep.subr.bf16.mxu0 0
    %1258 = vmatpush1.bf16.msra.mxu0 %v1241
    %1259 = vmatprep.subr.bf16.mxu0 0
    %1260 = vmatpush1.bf16.msra.mxu0 %v1242
    %1261 = vmatprep.subr.bf16.mxu0 0
    %1262 = vmatpush1.bf16.msra.mxu0 %v1243
    %1263 = vmatprep.subr.bf16.mxu0 0
    %1264 = vmatpush1.bf16.msra.mxu0 %v1244
    %1265 = vmatprep.subr.bf16.mxu0 0
    %1266 = vmatpush1.bf16.msra.mxu0 %v1245
    %1267 = vmatprep.subr.bf16.mxu0 0
    %1268 = vmatpush1.bf16.msra.mxu0 %v1246
    %1269 = vmatprep.subr.bf16.mxu0 0
    %1270 = vmatpush1.bf16.msra.mxu0 %v1247
    %1271 = vmatprep.subr.bf16.mxu0 0
    %1272 = vmatpush1.bf16.msra.mxu0 %v1248
    %1273 = vmatprep.subr.bf16.mxu0 0
    %1274 = vmatpush1.bf16.msra.mxu0 0
    %1275 = vmatprep.subr.bf16.mxu0 0
    %1276 = vmatpush1.bf16.msra.mxu0 0
    %1277 = vmatprep.subr.bf16.mxu0 0
    %1278 = vmatpush1.bf16.msra.mxu0 0
    %1279 = vmatprep.subr.bf16.mxu0 0
    %1280 = vmatpush1.bf16.msra.mxu0 0
    %1281 = vmatprep.subr.bf16.mxu0 0
    %1282 = vmatpush1.bf16.msra.mxu0 0
    %1283 = vmatprep.subr.bf16.mxu0 0
    %1284 = vmatpush1.bf16.msra.mxu0 0
    %1285 = vmatprep.subr.bf16.mxu0 0
    %1286 = vmatpush1.bf16.msra.mxu0 0
    %1287 = vmatprep.subr.bf16.mxu0 0
    %1288 = vmatpush1.bf16.msra.mxu0 0
    %1289 = vmatprep.mubr.bf16.mxu0 0
    %1290 = vmatmul.mubr.bf16.gmra.mrb[0].mxu0 %v1203
    %v1291 = vpop.f32.mrb[0].mxu0
    %v1292 = vadd.f32 0.0, %v1291
    %v1293 = vpop.f32.mrb[0].mxu0
    %v1294 = vpop.f32.mrb[0].mxu0
    %v1295 = vadd.f32 0.0, %v1294
    %v1296 = vpop.f32.mrb[0].mxu0
    %1297 = vmatprep.mubr.bf16.mxu0 0
    %1298 = vmatmul.mubr.bf16.gmra.mrb[0].mxu0 %v1206
    %v1299 = vpop.f32.mrb[0].mxu0
    %v1300 = vadd.f32 0.0, %v1299
    %v1301 = vpop.f32.mrb[0].mxu0
    %v1302 = vpop.f32.mrb[0].mxu0
    %v1303 = vadd.f32 0.0, %v1302
    %v1304 = vpop.f32.mrb[0].mxu0
    %1305 = vdwg.mxu0
    %v1306 = vadd.f32 %v1173, %v1292
    %v1307 = vadd.f32 %v1174, %v1295
    %v1308 = vadd.f32 %v1175, %v1300
    %v1309 = vadd.f32 %v1176, %v1303
    %v1310 = vld [vmem:[#allocation2 + $0x8] sm:$0x3f]
    %v1311 = vld [vmem:[#allocation2 + $0x18] sm:$0x3f]
    %s1312 = scalar_lea.vmem [#allocation8], 512
    %v1313 = vld [vmem:[%s1312] sm:$0xf]
    %v1314 = vld [vmem:[%s1312 + $0x4] sm:$0xf]
    %v1315 = vld [vmem:[%s1312 + $0x8] sm:$0xf]
    %v1316 = vld [vmem:[%s1312 + $0xc] sm:$0xf]
    %v1317 = vld [vmem:[%s1312 + $0x10] sm:$0xf]
    %v1318 = vld [vmem:[%s1312 + $0x14] sm:$0xf]
    %v1319 = vld [vmem:[%s1312 + $0x18] sm:$0xf]
    %v1320 = vld [vmem:[%s1312 + $0x1c] sm:$0xf]
    %v1321 = vld [vmem:[%s1312 + $0x20] sm:$0xf]
    %v1322 = vld [vmem:[%s1312 + $0x24] sm:$0xf]
    %v1323 = vld [vmem:[%s1312 + $0x28] sm:$0xf]
    %v1324 = vld [vmem:[%s1312 + $0x2c] sm:$0xf]
    %v1325 = vld [vmem:[%s1312 + $0x30] sm:$0xf]
    %v1326 = vld [vmem:[%s1312 + $0x34] sm:$0xf]
    %v1327 = vld [vmem:[%s1312 + $0x38] sm:$0xf]
    %v1328 = vld [vmem:[%s1312 + $0x3c] sm:$0xf]
    %vm1329 = vsmask.f32 2304
    %v1331 = vshrl.u32 %v1177, 16
    %v1333 = vrot.slane %v1331, 5
    %v1334 = vshll.u32 %v1177, 16
    %v1336 = vrot.slane %v1334, 6
    %v1337 = vor.u32 %v1333, %v1336
    %v1339 = vshrl.u32 %v1310, 16
    %v1341 = vrot.slane %v1339, 5
    %v1342 = vshll.u32 %v1310, 16
    %v1344 = vrot.slane %v1342, 6
    %v1345 = vor.u32 %v1341, %v1344
    %v1346 = vsel %vm1329, %v1337, %v1345
    %v1348 = vshrl.u32 %v1178, 16
    %v1350 = vrot.slane %v1348, 5
    %v1351 = vshll.u32 %v1178, 16
    %v1353 = vrot.slane %v1351, 6
    %v1354 = vor.u32 %v1350, %v1353
    %v1356 = vshrl.u32 %v1311, 16
    %v1358 = vrot.slane %v1356, 5
    %v1359 = vshll.u32 %v1311, 16
    %v1361 = vrot.slane %v1359, 6
    %v1362 = vor.u32 %v1358, %v1361
    %v1363 = vsel %vm1329, %v1354, %v1362
    %v1382 = vunpack.c.l.b16 %v1313
    %v1383 = vunpack.c.l.b16 %v1314
    %v1384 = vunpack.c.l.b16 %v1315
    %v1385 = vunpack.c.l.b16 %v1316
    %v1386 = vunpack.c.l.b16 %v1317
    %v1387 = vunpack.c.l.b16 %v1318
    %v1388 = vunpack.c.l.b16 %v1319
    %v1389 = vunpack.c.l.b16 %v1320
    %v1390 = vunpack.c.l.b16 %v1321
    %v1391 = vunpack.c.l.b16 %v1322
    %v1392 = vunpack.c.l.b16 %v1323
    %v1393 = vunpack.c.l.b16 %v1324
    %v1394 = vunpack.c.l.b16 %v1325
    %v1395 = vunpack.c.l.b16 %v1326
    %v1396 = vunpack.c.l.b16 %v1327
    %v1397 = vunpack.c.l.b16 %v1328
    %v1398 = vpack.c.b16 %v1383, %v1382
    %v1399 = vpack.c.b16 %v1385, %v1384
    %v1400 = vpack.c.b16 %v1387, %v1386
    %v1401 = vpack.c.b16 %v1389, %v1388
    %v1402 = vpack.c.b16 %v1391, %v1390
    %v1403 = vpack.c.b16 %v1393, %v1392
    %v1404 = vpack.c.b16 %v1395, %v1394
    %v1405 = vpack.c.b16 %v1397, %v1396
    %1414 = vmatprep.subr.bf16.mxu0 0
    %1415 = vmatpush1.bf16.msra.mxu0 %v1398
    %1416 = vmatprep.subr.bf16.mxu0 0
    %1417 = vmatpush1.bf16.msra.mxu0 %v1399
    %1418 = vmatprep.subr.bf16.mxu0 0
    %1419 = vmatpush1.bf16.msra.mxu0 %v1400
    %1420 = vmatprep.subr.bf16.mxu0 0
    %1421 = vmatpush1.bf16.msra.mxu0 %v1401
    %1422 = vmatprep.subr.bf16.mxu0 0
    %1423 = vmatpush1.bf16.msra.mxu0 %v1402
    %1424 = vmatprep.subr.bf16.mxu0 0
    %1425 = vmatpush1.bf16.msra.mxu0 %v1403
    %1426 = vmatprep.subr.bf16.mxu0 0
    %1427 = vmatpush1.bf16.msra.mxu0 %v1404
    %1428 = vmatprep.subr.bf16.mxu0 0
    %1429 = vmatpush1.bf16.msra.mxu0 %v1405
    %1430 = vmatprep.subr.bf16.mxu0 0
    %1431 = vmatpush1.bf16.msra.mxu0 0
    %1432 = vmatprep.subr.bf16.mxu0 0
    %1433 = vmatpush1.bf16.msra.mxu0 0
    %1434 = vmatprep.subr.bf16.mxu0 0
    %1435 = vmatpush1.bf16.msra.mxu0 0
    %1436 = vmatprep.subr.bf16.mxu0 0
    %1437 = vmatpush1.bf16.msra.mxu0 0
    %1438 = vmatprep.subr.bf16.mxu0 0
    %1439 = vmatpush1.bf16.msra.mxu0 0
    %1440 = vmatprep.subr.bf16.mxu0 0
    %1441 = vmatpush1.bf16.msra.mxu0 0
    %1442 = vmatprep.subr.bf16.mxu0 0
    %1443 = vmatpush1.bf16.msra.mxu0 0
    %1444 = vmatprep.subr.bf16.mxu0 0
    %1445 = vmatpush1.bf16.msra.mxu0 0
    %1446 = vmatprep.mubr.bf16.mxu0 0
    %1447 = vmatmul.mubr.bf16.gmra.mrb[0].mxu0 %v1346
    %v1448 = vpop.f32.mrb[0].mxu0
    %v1449 = vadd.f32 0.0, %v1448
    %v1450 = vpop.f32.mrb[0].mxu0
    %v1451 = vpop.f32.mrb[0].mxu0
    %v1452 = vadd.f32 0.0, %v1451
    %v1453 = vpop.f32.mrb[0].mxu0
    %1454 = vmatprep.mubr.bf16.mxu0 0
    %1455 = vmatmul.mubr.bf16.gmra.mrb[0].mxu0 %v1363
    %v1456 = vpop.f32.mrb[0].mxu0
    %v1457 = vadd.f32 0.0, %v1456
    %v1458 = vpop.f32.mrb[0].mxu0
    %v1459 = vpop.f32.mrb[0].mxu0
    %v1460 = vadd.f32 0.0, %v1459
    %v1461 = vpop.f32.mrb[0].mxu0
    %1462 = vdwg.mxu0
    %v1463 = vadd.f32 %v1306, %v1449
    %v1464 = vadd.f32 %v1307, %v1452
    %v1465 = vadd.f32 %v1308, %v1457
    %v1466 = vadd.f32 %v1309, %v1460
    %v1467 = vld [vmem:[#allocation2] sm:$0xc0]
    %v1468 = vld [vmem:[#allocation2 + $0x10] sm:$0xc0]
    %s1469 = scalar_lea.vmem [#allocation8], 576
    %v1470 = vld [vmem:[%s1469] sm:$0xf]
    %v1471 = vld [vmem:[%s1469 + $0x4] sm:$0xf]
    %v1472 = vld [vmem:[%s1469 + $0x8] sm:$0xf]
    %v1473 = vld [vmem:[%s1469 + $0xc] sm:$0xf]
    %v1474 = vld [vmem:[%s1469 + $0x10] sm:$0xf]
    %v1475 = vld [vmem:[%s1469 + $0x14] sm:$0xf]
    %v1476 = vld [vmem:[%s1469 + $0x18] sm:$0xf]
    %v1477 = vld [vmem:[%s1469 + $0x1c] sm:$0xf]
    %v1478 = vld [vmem:[%s1469 + $0x20] sm:$0xf]
    %v1479 = vld [vmem:[%s1469 + $0x24] sm:$0xf]
    %v1480 = vld [vmem:[%s1469 + $0x28] sm:$0xf]
    %v1481 = vld [vmem:[%s1469 + $0x2c] sm:$0xf]
    %v1482 = vld [vmem:[%s1469 + $0x30] sm:$0xf]
    %v1483 = vld [vmem:[%s1469 + $0x34] sm:$0xf]
    %v1484 = vld [vmem:[%s1469 + $0x38] sm:$0xf]
    %v1485 = vld [vmem:[%s1469 + $0x3c] sm:$0xf]
    %vm1490 = vcmask 1041408
    %v1491 = vrot.slane %v1467, 6
    %v1492 = vrot.slane %v1310, 6
    %v1493 = vsel %vm1490, %v1491, %v1492
    %v1494 = vrot.slane %v1468, 6
    %v1495 = vrot.slane %v1311, 6
    %v1496 = vsel %vm1490, %v1494, %v1495
    %v1515 = vunpack.c.l.b16 %v1470
    %v1516 = vunpack.c.l.b16 %v1471
    %v1517 = vunpack.c.l.b16 %v1472
    %v1518 = vunpack.c.l.b16 %v1473
    %v1519 = vunpack.c.l.b16 %v1474
    %v1520 = vunpack.c.l.b16 %v1475
    %v1521 = vunpack.c.l.b16 %v1476
    %v1522 = vunpack.c.l.b16 %v1477
    %v1523 = vunpack.c.l.b16 %v1478
    %v1524 = vunpack.c.l.b16 %v1479
    %v1525 = vunpack.c.l.b16 %v1480
    %v1526 = vunpack.c.l.b16 %v1481
    %v1527 = vunpack.c.l.b16 %v1482
    %v1528 = vunpack.c.l.b16 %v1483
    %v1529 = vunpack.c.l.b16 %v1484
    %v1530 = vunpack.c.l.b16 %v1485
    %v1531 = vpack.c.b16 %v1516, %v1515
    %v1532 = vpack.c.b16 %v1518, %v1517
    %v1533 = vpack.c.b16 %v1520, %v1519
    %v1534 = vpack.c.b16 %v1522, %v1521
    %v1535 = vpack.c.b16 %v1524, %v1523
    %v1536 = vpack.c.b16 %v1526, %v1525
    %v1537 = vpack.c.b16 %v1528, %v1527
    %v1538 = vpack.c.b16 %v1530, %v1529
    %1547 = vmatprep.subr.bf16.mxu0 0
    %1548 = vmatpush1.bf16.msra.mxu0 %v1531
    %1549 = vmatprep.subr.bf16.mxu0 0
    %1550 = vmatpush1.bf16.msra.mxu0 %v1532
    %1551 = vmatprep.subr.bf16.mxu0 0
    %1552 = vmatpush1.bf16.msra.mxu0 %v1533
    %1553 = vmatprep.subr.bf16.mxu0 0
    %1554 = vmatpush1.bf16.msra.mxu0 %v1534
    %1555 = vmatprep.subr.bf16.mxu0 0
    %1556 = vmatpush1.bf16.msra.mxu0 %v1535
    %1557 = vmatprep.subr.bf16.mxu0 0
    %1558 = vmatpush1.bf16.msra.mxu0 %v1536
    %1559 = vmatprep.subr.bf16.mxu0 0
    %1560 = vmatpush1.bf16.msra.mxu0 %v1537
    %1561 = vmatprep.subr.bf16.mxu0 0
    %1562 = vmatpush1.bf16.msra.mxu0 %v1538
    %1563 = vmatprep.subr.bf16.mxu0 0
    %1564 = vmatpush1.bf16.msra.mxu0 0
    %1565 = vmatprep.subr.bf16.mxu0 0
    %1566 = vmatpush1.bf16.msra.mxu0 0
    %1567 = vmatprep.subr.bf16.mxu0 0
    %1568 = vmatpush1.bf16.msra.mxu0 0
    %1569 = vmatprep.subr.bf16.mxu0 0
    %1570 = vmatpush1.bf16.msra.mxu0 0
    %1571 = vmatprep.subr.bf16.mxu0 0
    %1572 = vmatpush1.bf16.msra.mxu0 0
    %1573 = vmatprep.subr.bf16.mxu0 0
    %1574 = vmatpush1.bf16.msra.mxu0 0
    %1575 = vmatprep.subr.bf16.mxu0 0
    %1576 = vmatpush1.bf16.msra.mxu0 0
    %1577 = vmatprep.subr.bf16.mxu0 0
    %1578 = vmatpush1.bf16.msra.mxu0 0
    %1579 = vmatprep.mubr.bf16.mxu0 0
    %1580 = vmatmul.mubr.bf16.gmra.mrb[0].mxu0 %v1493
    %v1581 = vpop.f32.mrb[0].mxu0
    %v1582 = vadd.f32 0.0, %v1581
    %v1583 = vpop.f32.mrb[0].mxu0
    %v1584 = vpop.f32.mrb[0].mxu0
    %v1585 = vadd.f32 0.0, %v1584
    %v1586 = vpop.f32.mrb[0].mxu0
    %1587 = vmatprep.mubr.bf16.mxu0 0
    %1588 = vmatmul.mubr.bf16.gmra.mrb[0].mxu0 %v1496
    %v1589 = vpop.f32.mrb[0].mxu0
    %v1590 = vadd.f32 0.0, %v1589
    %v1591 = vpop.f32.mrb[0].mxu0
    %v1592 = vpop.f32.mrb[0].mxu0
    %v1593 = vadd.f32 0.0, %v1592
    %v1594 = vpop.f32.mrb[0].mxu0
    %1595 = vdwg.mxu0
    %v1596 = vadd.f32 %v1463, %v1582
    %v1597 = vadd.f32 %v1464, %v1585
    %v1598 = vadd.f32 %v1465, %v1590
    %v1599 = vadd.f32 %v1466, %v1593
    %v1600 = vld [vmem:[#allocation2 + $0x8] sm:$0x7f]
    %v1601 = vld [vmem:[#allocation2 + $0x18] sm:$0x7f]
    %s1602 = scalar_lea.vmem [#allocation8], 640
    %v1603 = vld [vmem:[%s1602] sm:$0xf]
    %v1604 = vld [vmem:[%s1602 + $0x4] sm:$0xf]
    %v1605 = vld [vmem:[%s1602 + $0x8] sm:$0xf]
    %v1606 = vld [vmem:[%s1602 + $0xc] sm:$0xf]
    %v1607 = vld [vmem:[%s1602 + $0x10] sm:$0xf]
    %v1608 = vld [vmem:[%s1602 + $0x14] sm:$0xf]
    %v1609 = vld [vmem:[%s1602 + $0x18] sm:$0xf]
    %v1610 = vld [vmem:[%s1602 + $0x1c] sm:$0xf]
    %v1611 = vld [vmem:[%s1602 + $0x20] sm:$0xf]
    %v1612 = vld [vmem:[%s1602 + $0x24] sm:$0xf]
    %v1613 = vld [vmem:[%s1602 + $0x28] sm:$0xf]
    %v1614 = vld [vmem:[%s1602 + $0x2c] sm:$0xf]
    %v1615 = vld [vmem:[%s1602 + $0x30] sm:$0xf]
    %v1616 = vld [vmem:[%s1602 + $0x34] sm:$0xf]
    %v1617 = vld [vmem:[%s1602 + $0x38] sm:$0xf]
    %v1618 = vld [vmem:[%s1602 + $0x3c] sm:$0xf]
    %vm1619 = vsmask.f32 1280
    %v1621 = vshrl.u32 %v1467, 16
    %v1623 = vrot.slane %v1621, 6
    %v1624 = vshll.u32 %v1467, 16
    %v1626 = vrot.slane %v1624, 7
    %v1627 = vor.u32 %v1623, %v1626
    %v1629 = vshrl.u32 %v1600, 16
    %v1631 = vrot.slane %v1629, 6
    %v1632 = vshll.u32 %v1600, 16
    %v1634 = vrot.slane %v1632, 7
    %v1635 = vor.u32 %v1631, %v1634
    %v1636 = vsel %vm1619, %v1627, %v1635
    %v1638 = vshrl.u32 %v1468, 16
    %v1640 = vrot.slane %v1638, 6
    %v1641 = vshll.u32 %v1468, 16
    %v1643 = vrot.slane %v1641, 7
    %v1644 = vor.u32 %v1640, %v1643
    %v1646 = vshrl.u32 %v1601, 16
    %v1648 = vrot.slane %v1646, 6
    %v1649 = vshll.u32 %v1601, 16
    %v1651 = vrot.slane %v1649, 7
    %v1652 = vor.u32 %v1648, %v1651
    %v1653 = vsel %vm1619, %v1644, %v1652
    %v1672 = vunpack.c.l.b16 %v1603
    %v1673 = vunpack.c.l.b16 %v1604
    %v1674 = vunpack.c.l.b16 %v1605
    %v1675 = vunpack.c.l.b16 %v1606
    %v1676 = vunpack.c.l.b16 %v1607
    %v1677 = vunpack.c.l.b16 %v1608
    %v1678 = vunpack.c.l.b16 %v1609
    %v1679 = vunpack.c.l.b16 %v1610
    %v1680 = vunpack.c.l.b16 %v1611
    %v1681 = vunpack.c.l.b16 %v1612
    %v1682 = vunpack.c.l.b16 %v1613
    %v1683 = vunpack.c.l.b16 %v1614
    %v1684 = vunpack.c.l.b16 %v1615
    %v1685 = vunpack.c.l.b16 %v1616
    %v1686 = vunpack.c.l.b16 %v1617
    %v1687 = vunpack.c.l.b16 %v1618
    %v1688 = vpack.c.b16 %v1673, %v1672
    %v1689 = vpack.c.b16 %v1675, %v1674
    %v1690 = vpack.c.b16 %v1677, %v1676
    %v1691 = vpack.c.b16 %v1679, %v1678
    %v1692 = vpack.c.b16 %v1681, %v1680
    %v1693 = vpack.c.b16 %v1683, %v1682
    %v1694 = vpack.c.b16 %v1685, %v1684
    %v1695 = vpack.c.b16 %v1687, %v1686
    %1704 = vmatprep.subr.bf16.mxu0 0
    %1705 = vmatpush1.bf16.msra.mxu0 %v1688
    %1706 = vmatprep.subr.bf16.mxu0 0
    %1707 = vmatpush1.bf16.msra.mxu0 %v1689
    %1708 = vmatprep.subr.bf16.mxu0 0
    %1709 = vmatpush1.bf16.msra.mxu0 %v1690
    %1710 = vmatprep.subr.bf16.mxu0 0
    %1711 = vmatpush1.bf16.msra.mxu0 %v1691
    %1712 = vmatprep.subr.bf16.mxu0 0
    %1713 = vmatpush1.bf16.msra.mxu0 %v1692
    %1714 = vmatprep.subr.bf16.mxu0 0
    %1715 = vmatpush1.bf16.msra.mxu0 %v1693
    %1716 = vmatprep.subr.bf16.mxu0 0
    %1717 = vmatpush1.bf16.msra.mxu0 %v1694
    %1718 = vmatprep.subr.bf16.mxu0 0
    %1719 = vmatpush1.bf16.msra.mxu0 %v1695
    %1720 = vmatprep.subr.bf16.mxu0 0
    %1721 = vmatpush1.bf16.msra.mxu0 0
    %1722 = vmatprep.subr.bf16.mxu0 0
    %1723 = vmatpush1.bf16.msra.mxu0 0
    %1724 = vmatprep.subr.bf16.mxu0 0
    %1725 = vmatpush1.bf16.msra.mxu0 0
    %1726 = vmatprep.subr.bf16.mxu0 0
    %1727 = vmatpush1.bf16.msra.mxu0 0
    %1728 = vmatprep.subr.bf16.mxu0 0
    %1729 = vmatpush1.bf16.msra.mxu0 0
    %1730 = vmatprep.subr.bf16.mxu0 0
    %1731 = vmatpush1.bf16.msra.mxu0 0
    %1732 = vmatprep.subr.bf16.mxu0 0
    %1733 = vmatpush1.bf16.msra.mxu0 0
    %1734 = vmatprep.subr.bf16.mxu0 0
    %1735 = vmatpush1.bf16.msra.mxu0 0
    %1736 = vmatprep.mubr.bf16.mxu0 0
    %1737 = vmatmul.mubr.bf16.gmra.mrb[0].mxu0 %v1636
    %v1738 = vpop.f32.mrb[0].mxu0
    %v1739 = vadd.f32 0.0, %v1738
    %v1740 = vpop.f32.mrb[0].mxu0
    %v1741 = vpop.f32.mrb[0].mxu0
    %v1742 = vadd.f32 0.0, %v1741
    %v1743 = vpop.f32.mrb[0].mxu0
    %1744 = vmatprep.mubr.bf16.mxu0 0
    %1745 = vmatmul.mubr.bf16.gmra.mrb[0].mxu0 %v1653
    %v1746 = vpop.f32.mrb[0].mxu0
    %v1747 = vadd.f32 0.0, %v1746
    %v1748 = vpop.f32.mrb[0].mxu0
    %v1749 = vpop.f32.mrb[0].mxu0
    %v1750 = vadd.f32 0.0, %v1749
    %v1751 = vpop.f32.mrb[0].mxu0
    %1752 = vdwg.mxu0
    %v1753 = vadd.f32 %v1596, %v1739
    %v1754 = vadd.f32 %v1597, %v1742
    %v1755 = vadd.f32 %v1598, %v1747
    %v1756 = vadd.f32 %v1599, %v1750
    %v1757 = vlaneseq
    %v1758 = vshrl.u32 %v1757, 7
    %v1759 = vsub.s32 2, %v1758
    %v1760 = vrot.slane %v59, %v1759
    %v1761 = vadd.f32 %v1753, %v1760
    %v1762 = vadd.f32 %v1754, %v1760
    %v1763 = vadd.f32 %v1755, %v1760
    %v1764 = vadd.f32 %v1756, %v1760
    %v1765 = vadd.f32 %v1761, %v1762
    %v1766 = vadd.f32 %v1765, %v1763
    %v1767 = vadd.f32 %v1766, %v1764
    %v1768 = vrot.slane %v1767, 4
    %v1769 = vadd.f32 %v1767, %v1768
    %v1770 = vrot.slane %v1769, 2
    %v1771 = vadd.f32 %v1769, %v1770
    %v1772 = vrot.slane %v1771, 1
    %v1773 = vadd.f32 %v1771, %v1772
    %v1774 = vmul.f32 %v1773, %v73
    %1775 = vrot.lane.b32.xlu0 %v1774, 32
    %v1776 = vpop.permute.xlu0 %1775
    %v1777 = vadd.f32 %v1774, %v1776
    %1778 = vrot.lane.b32.xlu0 %v1774, 64
    %v1779 = vpop.permute.xlu0 %1778
    %v1780 = vadd.f32 %v1777, %v1779
    %1781 = vrot.lane.b32.xlu0 %v1774, 96
    %v1782 = vpop.permute.xlu0 %1781
    %v1783 = vadd.f32 %v1780, %v1782
    %v1784 = vmul.f32 %v1783, 0.25
    %v1785 = vlaneseq
    %v1786 = vshrl.u32 %v1785, 7
    %v1787 = vsub.s32 0, %v1786
    %v1788 = vrot.slane %v1784, %v1787
    %v1789 = vsub.f32 %v1761, %v1788
    %v1790 = vsub.f32 %v1762, %v1788
    %v1791 = vsub.f32 %v1763, %v1788
    %v1792 = vsub.f32 %v1764, %v1788
    %v1793 = vmul.f32 %v1789, %v1789
    %v1794 = vmul.f32 %v1790, %v1790
    %v1795 = vmul.f32 %v1791, %v1791
    %v1796 = vmul.f32 %v1792, %v1792
    %v1797 = vadd.f32 %v1793, %v1794
    %v1798 = vadd.f32 %v1797, %v1795
    %v1799 = vadd.f32 %v1798, %v1796
    %v1800 = vrot.slane %v1799, 4
    %v1801 = vadd.f32 %v1799, %v1800
    %v1802 = vrot.slane %v1801, 2
    %v1803 = vadd.f32 %v1801, %v1802
    %v1804 = vrot.slane %v1803, 1
    %v1805 = vadd.f32 %v1803, %v1804
    %v1806 = vmul.f32 %v1805, %v73
    %1807 = vrot.lane.b32.xlu0 %v1806, 32
    %v1808 = vpop.permute.xlu0 %1807
    %v1809 = vadd.f32 %v1806, %v1808
    %1810 = vrot.lane.b32.xlu0 %v1806, 64
    %v1811 = vpop.permute.xlu0 %1810
    %v1812 = vadd.f32 %v1809, %v1811
    %1813 = vrot.lane.b32.xlu0 %v1806, 96
    %v1814 = vpop.permute.xlu0 %1813
    %v1815 = vadd.f32 %v1812, %v1814
    %v1816 = vmul.f32 %v1815, 0.25
    %v1817 = vadd.f32 %v1816, 1e-05
    %v1818 = vrsqrt.pop %v1817
    %v1820 = vrot.slane %v1818, 5
    %v1822 = vmul.f32 %v59, %v1820
    %v1824 = vrot.slane %v1822, 3
    %v1826 = vmul.f32 %v1784, %v1824
    %v1828 = vrot.slane %v1826, 4
    %v1830 = vsub.f32 %v59, %v1828
    %v1831 = vlaneseq
    %v1832 = vshrl.u32 %v1831, 7
    %v1833 = vsub.s32 3, %v1832
    %v1834 = vrot.slane %v1822, %v1833
    %v1835 = vmul.f32 %v1761, %v1834
    %v1836 = vmul.f32 %v1762, %v1834
    %v1837 = vmul.f32 %v1763, %v1834
    %v1838 = vmul.f32 %v1764, %v1834
    %v1839 = vlaneseq
    %v1840 = vshrl.u32 %v1839, 7
    %v1841 = vsub.s32 4, %v1840
    %v1842 = vrot.slane %v1830, %v1841
    %v1843 = vadd.f32 %v1835, %v1842
    %v1844 = vadd.f32 %v1836, %v1842
    %v1845 = vadd.f32 %v1837, %v1842
    %v1846 = vadd.f32 %v1838, %v1842
    %v1847 = vmax.f32 %v1843, 0.0
    %v1848 = vmax.f32 %v1844, 0.0
    %v1849 = vmax.f32 %v1845, 0.0
    %v1850 = vmax.f32 %v1846, 0.0
    %v1851 = vpack.c.bf16 %v1848, %v1847
    %v1852 = vpack.c.bf16 %v1850, %v1849
    %v1855 = vrot.slane %v1851, 4
    %v1856 = vrot.slane %v1852, 4
    %1859 = vst [vmem:[#allocation2] sm:$0xf0] %v1855
    %1860 = vst [vmem:[#allocation2 + $0x8] sm:$0xf] %v1855
    %1861 = vst [vmem:[#allocation2 + $0x10] sm:$0xf0] %v1856
    %1862 = vst [vmem:[#allocation2 + $0x18] sm:$0xf] %v1856
    %v1863 = vld [vmem:[#allocation2] sm:$0xfe]
    %v1864 = vld [vmem:[#allocation2 + $0x8] sm:$0x3]
    %v1865 = vld [vmem:[#allocation2 + $0x10] sm:$0xfe]
    %v1866 = vld [vmem:[#allocation2 + $0x18] sm:$0x3]
    %s1867 = scalar_lea.vmem [#allocation8], 704
    %v1868 = vld [vmem:[%s1867] sm:$0xf]
    %v1869 = vld [vmem:[%s1867 + $0x4] sm:$0xf]
    %v1870 = vld [vmem:[%s1867 + $0x8] sm:$0xf]
    %v1871 = vld [vmem:[%s1867 + $0xc] sm:$0xf]
    %v1872 = vld [vmem:[%s1867 + $0x10] sm:$0xf]
    %v1873 = vld [vmem:[%s1867 + $0x14] sm:$0xf]
    %v1874 = vld [vmem:[%s1867 + $0x18] sm:$0xf]
    %v1875 = vld [vmem:[%s1867 + $0x1c] sm:$0xf]
    %v1876 = vld [vmem:[%s1867 + $0x20] sm:$0xf]
    %v1877 = vld [vmem:[%s1867 + $0x24] sm:$0xf]
    %v1878 = vld [vmem:[%s1867 + $0x28] sm:$0xf]
    %v1879 = vld [vmem:[%s1867 + $0x2c] sm:$0xf]
    %v1880 = vld [vmem:[%s1867 + $0x30] sm:$0xf]
    %v1881 = vld [vmem:[%s1867 + $0x34] sm:$0xf]
    %v1882 = vld [vmem:[%s1867 + $0x38] sm:$0xf]
    %v1883 = vld [vmem:[%s1867 + $0x3c] sm:$0xf]
    %v1884 = vld [vmem:[#allocation2] sm:$0xfc]
    %v1885 = vld [vmem:[#allocation2 + $0x10] sm:$0xfc]
    %s1886 = scalar_lea.vmem [#allocation8], 768
    %v1887 = vld [vmem:[%s1886] sm:$0xf]
    %v1888 = vld [vmem:[%s1886 + $0x4] sm:$0xf]
    %v1889 = vld [vmem:[%s1886 + $0x8] sm:$0xf]
    %v1890 = vld [vmem:[%s1886 + $0xc] sm:$0xf]
    %v1891 = vld [vmem:[%s1886 + $0x10] sm:$0xf]
    %v1892 = vld [vmem:[%s1886 + $0x14] sm:$0xf]
    %v1893 = vld [vmem:[%s1886 + $0x18] sm:$0xf]
    %v1894 = vld [vmem:[%s1886 + $0x1c] sm:$0xf]
    %v1895 = vld [vmem:[%s1886 + $0x20] sm:$0xf]
    %v1896 = vld [vmem:[%s1886 + $0x24] sm:$0xf]
    %v1897 = vld [vmem:[%s1886 + $0x28] sm:$0xf]
    %v1898 = vld [vmem:[%s1886 + $0x2c] sm:$0xf]
    %v1899 = vld [vmem:[%s1886 + $0x30] sm:$0xf]
    %v1900 = vld [vmem:[%s1886 + $0x34] sm:$0xf]
    %v1901 = vld [vmem:[%s1886 + $0x38] sm:$0xf]
    %v1902 = vld [vmem:[%s1886 + $0x3c] sm:$0xf]
    %v1907 = vrot.slane %v1884, 2
    %v1908 = vrot.slane %v1864, 2
    %v1909 = vsel %vm200, %v1907, %v1908
    %v1910 = vrot.slane %v1885, 2
    %v1911 = vrot.slane %v1866, 2
    %v1912 = vsel %vm200, %v1910, %v1911
    %v1931 = vunpack.c.l.b16 %v1887
    %v1932 = vunpack.c.l.b16 %v1888
    %v1933 = vunpack.c.l.b16 %v1889
    %v1934 = vunpack.c.l.b16 %v1890
    %v1935 = vunpack.c.l.b16 %v1891
    %v1936 = vunpack.c.l.b16 %v1892
    %v1937 = vunpack.c.l.b16 %v1893
    %v1938 = vunpack.c.l.b16 %v1894
    %v1939 = vunpack.c.l.b16 %v1895
    %v1940 = vunpack.c.l.b16 %v1896
    %v1941 = vunpack.c.l.b16 %v1897
    %v1942 = vunpack.c.l.b16 %v1898
    %v1943 = vunpack.c.l.b16 %v1899
    %v1944 = vunpack.c.l.b16 %v1900
    %v1945 = vunpack.c.l.b16 %v1901
    %v1946 = vunpack.c.l.b16 %v1902
    %v1947 = vpack.c.b16 %v1932, %v1931
    %v1948 = vpack.c.b16 %v1934, %v1933
    %v1949 = vpack.c.b16 %v1936, %v1935
    %v1950 = vpack.c.b16 %v1938, %v1937
    %v1951 = vpack.c.b16 %v1940, %v1939
    %v1952 = vpack.c.b16 %v1942, %v1941
    %v1953 = vpack.c.b16 %v1944, %v1943
    %v1954 = vpack.c.b16 %v1946, %v1945
    %1963 = vmatprep.subr.bf16.mxu0 0
    %1964 = vmatpush1.bf16.msra.mxu0 %v1947
    %1965 = vmatprep.subr.bf16.mxu0 0
    %1966 = vmatpush1.bf16.msra.mxu0 %v1948
    %1967 = vmatprep.subr.bf16.mxu0 0
    %1968 = vmatpush1.bf16.msra.mxu0 %v1949
    %1969 = vmatprep.subr.bf16.mxu0 0
    %1970 = vmatpush1.bf16.msra.mxu0 %v1950
    %1971 = vmatprep.subr.bf16.mxu0 0
    %1972 = vmatpush1.bf16.msra.mxu0 %v1951
    %1973 = vmatprep.subr.bf16.mxu0 0
    %1974 = vmatpush1.bf16.msra.mxu0 %v1952
    %1975 = vmatprep.subr.bf16.mxu0 0
    %1976 = vmatpush1.bf16.msra.mxu0 %v1953
    %1977 = vmatprep.subr.bf16.mxu0 0
    %1978 = vmatpush1.bf16.msra.mxu0 %v1954
    %1979 = vmatprep.subr.bf16.mxu0 0
    %1980 = vmatpush1.bf16.msra.mxu0 0
    %1981 = vmatprep.subr.bf16.mxu0 0
    %1982 = vmatpush1.bf16.msra.mxu0 0
    %1983 = vmatprep.subr.bf16.mxu0 0
    %1984 = vmatpush1.bf16.msra.mxu0 0
    %1985 = vmatprep.subr.bf16.mxu0 0
    %1986 = vmatpush1.bf16.msra.mxu0 0
    %1987 = vmatprep.subr.bf16.mxu0 0
    %1988 = vmatpush1.bf16.msra.mxu0 0
    %1989 = vmatprep.subr.bf16.mxu0 0
    %1990 = vmatpush1.bf16.msra.mxu0 0
    %1991 = vmatprep.subr.bf16.mxu0 0
    %1992 = vmatpush1.bf16.msra.mxu0 0
    %1993 = vmatprep.subr.bf16.mxu0 0
    %1994 = vmatpush1.bf16.msra.mxu0 0
    %1995 = vmatprep.mubr.bf16.mxu0 0
    %1996 = vmatmul.mubr.bf16.gmra.mrb[0].mxu0 %v1909
    %v1997 = vpop.f32.mrb[0].mxu0
    %v1998 = vadd.f32 0.0, %v1997
    %v1999 = vpop.f32.mrb[0].mxu0
    %v2000 = vpop.f32.mrb[0].mxu0
    %v2001 = vadd.f32 0.0, %v2000
    %v2002 = vpop.f32.mrb[0].mxu0
    %2003 = vmatprep.mubr.bf16.mxu0 0
    %2004 = vmatmul.mubr.bf16.gmra.mrb[0].mxu0 %v1912
    %v2005 = vpop.f32.mrb[0].mxu0
    %v2006 = vadd.f32 0.0, %v2005
    %v2007 = vpop.f32.mrb[0].mxu0
    %v2008 = vpop.f32.mrb[0].mxu0
    %v2009 = vadd.f32 0.0, %v2008
    %v2010 = vpop.f32.mrb[0].mxu0
    %2011 = vdwg.mxu0
    %v2013 = vshrl.u32 %v1863, 16
    %v2015 = vrot.slane %v2013, 1
    %v2016 = vshll.u32 %v1863, 16
    %v2018 = vrot.slane %v2016, 2
    %v2019 = vor.u32 %v2015, %v2018
    %v2021 = vshrl.u32 %v1864, 16
    %v2023 = vrot.slane %v2021, 1
    %v2024 = vshll.u32 %v1864, 16
    %v2026 = vrot.slane %v2024, 2
    %v2027 = vor.u32 %v2023, %v2026
    %v2028 = vsel %vm306, %v2019, %v2027
    %v2030 = vshrl.u32 %v1865, 16
    %v2032 = vrot.slane %v2030, 1
    %v2033 = vshll.u32 %v1865, 16
    %v2035 = vrot.slane %v2033, 2
    %v2036 = vor.u32 %v2032, %v2035
    %v2038 = vshrl.u32 %v1866, 16
    %v2040 = vrot.slane %v2038, 1
    %v2041 = vshll.u32 %v1866, 16
    %v2043 = vrot.slane %v2041, 2
    %v2044 = vor.u32 %v2040, %v2043
    %v2045 = vsel %vm306, %v2036, %v2044
    %v2064 = vunpack.c.l.b16 %v1868
    %v2065 = vunpack.c.l.b16 %v1869
    %v2066 = vunpack.c.l.b16 %v1870
    %v2067 = vunpack.c.l.b16 %v1871
    %v2068 = vunpack.c.l.b16 %v1872
    %v2069 = vunpack.c.l.b16 %v1873
    %v2070 = vunpack.c.l.b16 %v1874
    %v2071 = vunpack.c.l.b16 %v1875
    %v2072 = vunpack.c.l.b16 %v1876
    %v2073 = vunpack.c.l.b16 %v1877
    %v2074 = vunpack.c.l.b16 %v1878
    %v2075 = vunpack.c.l.b16 %v1879
    %v2076 = vunpack.c.l.b16 %v1880
    %v2077 = vunpack.c.l.b16 %v1881
    %v2078 = vunpack.c.l.b16 %v1882
    %v2079 = vunpack.c.l.b16 %v1883
    %v2080 = vpack.c.b16 %v2065, %v2064
    %v2081 = vpack.c.b16 %v2067, %v2066
    %v2082 = vpack.c.b16 %v2069, %v2068
    %v2083 = vpack.c.b16 %v2071, %v2070
    %v2084 = vpack.c.b16 %v2073, %v2072
    %v2085 = vpack.c.b16 %v2075, %v2074
    %v2086 = vpack.c.b16 %v2077, %v2076
    %v2087 = vpack.c.b16 %v2079, %v2078
    %2096 = vmatprep.subr.bf16.mxu0 0
    %2097 = vmatpush1.bf16.msra.mxu0 %v2080
    %2098 = vmatprep.subr.bf16.mxu0 0
    %2099 = vmatpush1.bf16.msra.mxu0 %v2081
    %2100 = vmatprep.subr.bf16.mxu0 0
    %2101 = vmatpush1.bf16.msra.mxu0 %v2082
    %2102 = vmatprep.subr.bf16.mxu0 0
    %2103 = vmatpush1.bf16.msra.mxu0 %v2083
    %2104 = vmatprep.subr.bf16.mxu0 0
    %2105 = vmatpush1.bf16.msra.mxu0 %v2084
    %2106 = vmatprep.subr.bf16.mxu0 0
    %2107 = vmatpush1.bf16.msra.mxu0 %v2085
    %2108 = vmatprep.subr.bf16.mxu0 0
    %2109 = vmatpush1.bf16.msra.mxu0 %v2086
    %2110 = vmatprep.subr.bf16.mxu0 0
    %2111 = vmatpush1.bf16.msra.mxu0 %v2087
    %2112 = vmatprep.subr.bf16.mxu0 0
    %2113 = vmatpush1.bf16.msra.mxu0 0
    %2114 = vmatprep.subr.bf16.mxu0 0
    %2115 = vmatpush1.bf16.msra.mxu0 0
    %2116 = vmatprep.subr.bf16.mxu0 0
    %2117 = vmatpush1.bf16.msra.mxu0 0
    %2118 = vmatprep.subr.bf16.mxu0 0
    %2119 = vmatpush1.bf16.msra.mxu0 0
    %2120 = vmatprep.subr.bf16.mxu0 0
    %2121 = vmatpush1.bf16.msra.mxu0 0
    %2122 = vmatprep.subr.bf16.mxu0 0
    %2123 = vmatpush1.bf16.msra.mxu0 0
    %2124 = vmatprep.subr.bf16.mxu0 0
    %2125 = vmatpush1.bf16.msra.mxu0 0
    %2126 = vmatprep.subr.bf16.mxu0 0
    %2127 = vmatpush1.bf16.msra.mxu0 0
    %2128 = vmatprep.mubr.bf16.mxu0 0
    %2129 = vmatmul.mubr.bf16.gmra.mrb[0].mxu0 %v2028
    %v2130 = vpop.f32.mrb[0].mxu0
    %v2131 = vadd.f32 %v1998, %v2130
    %v2132 = vpop.f32.mrb[0].mxu0
    %v2133 = vpop.f32.mrb[0].mxu0
    %v2134 = vadd.f32 %v2001, %v2133
    %v2135 = vpop.f32.mrb[0].mxu0
    %2136 = vmatprep.mubr.bf16.mxu0 0
    %2137 = vmatmul.mubr.bf16.gmra.mrb[0].mxu0 %v2045
    %v2138 = vpop.f32.mrb[0].mxu0
    %v2139 = vadd.f32 %v2006, %v2138
    %v2140 = vpop.f32.mrb[0].mxu0
    %v2141 = vpop.f32.mrb[0].mxu0
    %v2142 = vadd.f32 %v2009, %v2141
    %v2143 = vpop.f32.mrb[0].mxu0
    %2144 = vdwg.mxu0
    %v2145 = vld [vmem:[#allocation2 + $0x8] sm:$0x7]
    %v2146 = vld [vmem:[#allocation2 + $0x18] sm:$0x7]
    %s2147 = scalar_lea.vmem [#allocation8], 832
    %v2148 = vld [vmem:[%s2147] sm:$0xf]
    %v2149 = vld [vmem:[%s2147 + $0x4] sm:$0xf]
    %v2150 = vld [vmem:[%s2147 + $0x8] sm:$0xf]
    %v2151 = vld [vmem:[%s2147 + $0xc] sm:$0xf]
    %v2152 = vld [vmem:[%s2147 + $0x10] sm:$0xf]
    %v2153 = vld [vmem:[%s2147 + $0x14] sm:$0xf]
    %v2154 = vld [vmem:[%s2147 + $0x18] sm:$0xf]
    %v2155 = vld [vmem:[%s2147 + $0x1c] sm:$0xf]
    %v2156 = vld [vmem:[%s2147 + $0x20] sm:$0xf]
    %v2157 = vld [vmem:[%s2147 + $0x24] sm:$0xf]
    %v2158 = vld [vmem:[%s2147 + $0x28] sm:$0xf]
    %v2159 = vld [vmem:[%s2147 + $0x2c] sm:$0xf]
    %v2160 = vld [vmem:[%s2147 + $0x30] sm:$0xf]
    %v2161 = vld [vmem:[%s2147 + $0x34] sm:$0xf]
    %v2162 = vld [vmem:[%s2147 + $0x38] sm:$0xf]
    %v2163 = vld [vmem:[%s2147 + $0x3c] sm:$0xf]
    %v2165 = vshrl.u32 %v1884, 16
    %v2167 = vrot.slane %v2165, 2
    %v2168 = vshll.u32 %v1884, 16
    %v2170 = vrot.slane %v2168, 3
    %v2171 = vor.u32 %v2167, %v2170
    %v2173 = vshrl.u32 %v2145, 16
    %v2175 = vrot.slane %v2173, 2
    %v2176 = vshll.u32 %v2145, 16
    %v2178 = vrot.slane %v2176, 3
    %v2179 = vor.u32 %v2175, %v2178
    %v2180 = vsel %vm459, %v2171, %v2179
    %v2182 = vshrl.u32 %v1885, 16
    %v2184 = vrot.slane %v2182, 2
    %v2185 = vshll.u32 %v1885, 16
    %v2187 = vrot.slane %v2185, 3
    %v2188 = vor.u32 %v2184, %v2187
    %v2190 = vshrl.u32 %v2146, 16
    %v2192 = vrot.slane %v2190, 2
    %v2193 = vshll.u32 %v2146, 16
    %v2195 = vrot.slane %v2193, 3
    %v2196 = vor.u32 %v2192, %v2195
    %v2197 = vsel %vm459, %v2188, %v2196
    %v2216 = vunpack.c.l.b16 %v2148
    %v2217 = vunpack.c.l.b16 %v2149
    %v2218 = vunpack.c.l.b16 %v2150
    %v2219 = vunpack.c.l.b16 %v2151
    %v2220 = vunpack.c.l.b16 %v2152
    %v2221 = vunpack.c.l.b16 %v2153
    %v2222 = vunpack.c.l.b16 %v2154
    %v2223 = vunpack.c.l.b16 %v2155
    %v2224 = vunpack.c.l.b16 %v2156
    %v2225 = vunpack.c.l.b16 %v2157
    %v2226 = vunpack.c.l.b16 %v2158
    %v2227 = vunpack.c.l.b16 %v2159
    %v2228 = vunpack.c.l.b16 %v2160
    %v2229 = vunpack.c.l.b16 %v2161
    %v2230 = vunpack.c.l.b16 %v2162
    %v2231 = vunpack.c.l.b16 %v2163
    %v2232 = vpack.c.b16 %v2217, %v2216
    %v2233 = vpack.c.b16 %v2219, %v2218
    %v2234 = vpack.c.b16 %v2221, %v2220
    %v2235 = vpack.c.b16 %v2223, %v2222
    %v2236 = vpack.c.b16 %v2225, %v2224
    %v2237 = vpack.c.b16 %v2227, %v2226
    %v2238 = vpack.c.b16 %v2229, %v2228
    %v2239 = vpack.c.b16 %v2231, %v2230
    %2248 = vmatprep.subr.bf16.mxu0 0
    %2249 = vmatpush1.bf16.msra.mxu0 %v2232
    %2250 = vmatprep.subr.bf16.mxu0 0
    %2251 = vmatpush1.bf16.msra.mxu0 %v2233
    %2252 = vmatprep.subr.bf16.mxu0 0
    %2253 = vmatpush1.bf16.msra.mxu0 %v2234
    %2254 = vmatprep.subr.bf16.mxu0 0
    %2255 = vmatpush1.bf16.msra.mxu0 %v2235
    %2256 = vmatprep.subr.bf16.mxu0 0
    %2257 = vmatpush1.bf16.msra.mxu0 %v2236
    %2258 = vmatprep.subr.bf16.mxu0 0
    %2259 = vmatpush1.bf16.msra.mxu0 %v2237
    %2260 = vmatprep.subr.bf16.mxu0 0
    %2261 = vmatpush1.bf16.msra.mxu0 %v2238
    %2262 = vmatprep.subr.bf16.mxu0 0
    %2263 = vmatpush1.bf16.msra.mxu0 %v2239
    %2264 = vmatprep.subr.bf16.mxu0 0
    %2265 = vmatpush1.bf16.msra.mxu0 0
    %2266 = vmatprep.subr.bf16.mxu0 0
    %2267 = vmatpush1.bf16.msra.mxu0 0
    %2268 = vmatprep.subr.bf16.mxu0 0
    %2269 = vmatpush1.bf16.msra.mxu0 0
    %2270 = vmatprep.subr.bf16.mxu0 0
    %2271 = vmatpush1.bf16.msra.mxu0 0
    %2272 = vmatprep.subr.bf16.mxu0 0
    %2273 = vmatpush1.bf16.msra.mxu0 0
    %2274 = vmatprep.subr.bf16.mxu0 0
    %2275 = vmatpush1.bf16.msra.mxu0 0
    %2276 = vmatprep.subr.bf16.mxu0 0
    %2277 = vmatpush1.bf16.msra.mxu0 0
    %2278 = vmatprep.subr.bf16.mxu0 0
    %2279 = vmatpush1.bf16.msra.mxu0 0
    %2280 = vmatprep.mubr.bf16.mxu0 0
    %2281 = vmatmul.mubr.bf16.gmra.mrb[0].mxu0 %v2180
    %v2282 = vpop.f32.mrb[0].mxu0
    %v2283 = vadd.f32 0.0, %v2282
    %v2284 = vpop.f32.mrb[0].mxu0
    %v2285 = vpop.f32.mrb[0].mxu0
    %v2286 = vadd.f32 0.0, %v2285
    %v2287 = vpop.f32.mrb[0].mxu0
    %2288 = vmatprep.mubr.bf16.mxu0 0
    %2289 = vmatmul.mubr.bf16.gmra.mrb[0].mxu0 %v2197
    %v2290 = vpop.f32.mrb[0].mxu0
    %v2291 = vadd.f32 0.0, %v2290
    %v2292 = vpop.f32.mrb[0].mxu0
    %v2293 = vpop.f32.mrb[0].mxu0
    %v2294 = vadd.f32 0.0, %v2293
    %v2295 = vpop.f32.mrb[0].mxu0
    %2296 = vdwg.mxu0
    %v2297 = vadd.f32 %v2131, %v2283
    %v2298 = vadd.f32 %v2134, %v2286
    %v2299 = vadd.f32 %v2139, %v2291
    %v2300 = vadd.f32 %v2142, %v2294
    %v2301 = vld [vmem:[#allocation2] sm:$0xf8]
    %v2302 = vld [vmem:[#allocation2 + $0x10] sm:$0xf8]
    %s2303 = scalar_lea.vmem [#allocation8], 896
    %v2304 = vld [vmem:[%s2303] sm:$0xf]
    %v2305 = vld [vmem:[%s2303 + $0x4] sm:$0xf]
    %v2306 = vld [vmem:[%s2303 + $0x8] sm:$0xf]
    %v2307 = vld [vmem:[%s2303 + $0xc] sm:$0xf]
    %v2308 = vld [vmem:[%s2303 + $0x10] sm:$0xf]
    %v2309 = vld [vmem:[%s2303 + $0x14] sm:$0xf]
    %v2310 = vld [vmem:[%s2303 + $0x18] sm:$0xf]
    %v2311 = vld [vmem:[%s2303 + $0x1c] sm:$0xf]
    %v2312 = vld [vmem:[%s2303 + $0x20] sm:$0xf]
    %v2313 = vld [vmem:[%s2303 + $0x24] sm:$0xf]
    %v2314 = vld [vmem:[%s2303 + $0x28] sm:$0xf]
    %v2315 = vld [vmem:[%s2303 + $0x2c] sm:$0xf]
    %v2316 = vld [vmem:[%s2303 + $0x30] sm:$0xf]
    %v2317 = vld [vmem:[%s2303 + $0x34] sm:$0xf]
    %v2318 = vld [vmem:[%s2303 + $0x38] sm:$0xf]
    %v2319 = vld [vmem:[%s2303 + $0x3c] sm:$0xf]
    %v2324 = vrot.slane %v2301, 3
    %v2325 = vrot.slane %v2145, 3
    %v2326 = vsel %vm620, %v2324, %v2325
    %v2327 = vrot.slane %v2302, 3
    %v2328 = vrot.slane %v2146, 3
    %v2329 = vsel %vm620, %v2327, %v2328
    %v2348 = vunpack.c.l.b16 %v2304
    %v2349 = vunpack.c.l.b16 %v2305
    %v2350 = vunpack.c.l.b16 %v2306
    %v2351 = vunpack.c.l.b16 %v2307
    %v2352 = vunpack.c.l.b16 %v2308
    %v2353 = vunpack.c.l.b16 %v2309
    %v2354 = vunpack.c.l.b16 %v2310
    %v2355 = vunpack.c.l.b16 %v2311
    %v2356 = vunpack.c.l.b16 %v2312
    %v2357 = vunpack.c.l.b16 %v2313
    %v2358 = vunpack.c.l.b16 %v2314
    %v2359 = vunpack.c.l.b16 %v2315
    %v2360 = vunpack.c.l.b16 %v2316
    %v2361 = vunpack.c.l.b16 %v2317
    %v2362 = vunpack.c.l.b16 %v2318
    %v2363 = vunpack.c.l.b16 %v2319
    %v2364 = vpack.c.b16 %v2349, %v2348
    %v2365 = vpack.c.b16 %v2351, %v2350
    %v2366 = vpack.c.b16 %v2353, %v2352
    %v2367 = vpack.c.b16 %v2355, %v2354
    %v2368 = vpack.c.b16 %v2357, %v2356
    %v2369 = vpack.c.b16 %v2359, %v2358
    %v2370 = vpack.c.b16 %v2361, %v2360
    %v2371 = vpack.c.b16 %v2363, %v2362
    %2380 = vmatprep.subr.bf16.mxu0 0
    %2381 = vmatpush1.bf16.msra.mxu0 %v2364
    %2382 = vmatprep.subr.bf16.mxu0 0
    %2383 = vmatpush1.bf16.msra.mxu0 %v2365
    %2384 = vmatprep.subr.bf16.mxu0 0
    %2385 = vmatpush1.bf16.msra.mxu0 %v2366
    %2386 = vmatprep.subr.bf16.mxu0 0
    %2387 = vmatpush1.bf16.msra.mxu0 %v2367
    %2388 = vmatprep.subr.bf16.mxu0 0
    %2389 = vmatpush1.bf16.msra.mxu0 %v2368
    %2390 = vmatprep.subr.bf16.mxu0 0
    %2391 = vmatpush1.bf16.msra.mxu0 %v2369
    %2392 = vmatprep.subr.bf16.mxu0 0
    %2393 = vmatpush1.bf16.msra.mxu0 %v2370
    %2394 = vmatprep.subr.bf16.mxu0 0
    %2395 = vmatpush1.bf16.msra.mxu0 %v2371
    %2396 = vmatprep.subr.bf16.mxu0 0
    %2397 = vmatpush1.bf16.msra.mxu0 0
    %2398 = vmatprep.subr.bf16.mxu0 0
    %2399 = vmatpush1.bf16.msra.mxu0 0
    %2400 = vmatprep.subr.bf16.mxu0 0
    %2401 = vmatpush1.bf16.msra.mxu0 0
    %2402 = vmatprep.subr.bf16.mxu0 0
    %2403 = vmatpush1.bf16.msra.mxu0 0
    %2404 = vmatprep.subr.bf16.mxu0 0
    %2405 = vmatpush1.bf16.msra.mxu0 0
    %2406 = vmatprep.subr.bf16.mxu0 0
    %2407 = vmatpush1.bf16.msra.mxu0 0
    %2408 = vmatprep.subr.bf16.mxu0 0
    %2409 = vmatpush1.bf16.msra.mxu0 0
    %2410 = vmatprep.subr.bf16.mxu0 0
    %2411 = vmatpush1.bf16.msra.mxu0 0
    %2412 = vmatprep.mubr.bf16.mxu0 0
    %2413 = vmatmul.mubr.bf16.gmra.mrb[0].mxu0 %v2326
    %v2414 = vpop.f32.mrb[0].mxu0
    %v2415 = vadd.f32 0.0, %v2414
    %v2416 = vpop.f32.mrb[0].mxu0
    %v2417 = vpop.f32.mrb[0].mxu0
    %v2418 = vadd.f32 0.0, %v2417
    %v2419 = vpop.f32.mrb[0].mxu0
    %2420 = vmatprep.mubr.bf16.mxu0 0
    %2421 = vmatmul.mubr.bf16.gmra.mrb[0].mxu0 %v2329
    %v2422 = vpop.f32.mrb[0].mxu0
    %v2423 = vadd.f32 0.0, %v2422
    %v2424 = vpop.f32.mrb[0].mxu0
    %v2425 = vpop.f32.mrb[0].mxu0
    %v2426 = vadd.f32 0.0, %v2425
    %v2427 = vpop.f32.mrb[0].mxu0
    %2428 = vdwg.mxu0
    %v2429 = vadd.f32 %v2297, %v2415
    %v2430 = vadd.f32 %v2298, %v2418
    %v2431 = vadd.f32 %v2299, %v2423
    %v2432 = vadd.f32 %v2300, %v2426
    %v2433 = vld [vmem:[#allocation2 + $0x8] sm:$0xf]
    %v2434 = vld [vmem:[#allocation2 + $0x18] sm:$0xf]
    %s2435 = scalar_lea.vmem [#allocation8], 960
    %v2436 = vld [vmem:[%s2435] sm:$0xf]
    %v2437 = vld [vmem:[%s2435 + $0x4] sm:$0xf]
    %v2438 = vld [vmem:[%s2435 + $0x8] sm:$0xf]
    %v2439 = vld [vmem:[%s2435 + $0xc] sm:$0xf]
    %v2440 = vld [vmem:[%s2435 + $0x10] sm:$0xf]
    %v2441 = vld [vmem:[%s2435 + $0x14] sm:$0xf]
    %v2442 = vld [vmem:[%s2435 + $0x18] sm:$0xf]
    %v2443 = vld [vmem:[%s2435 + $0x1c] sm:$0xf]
    %v2444 = vld [vmem:[%s2435 + $0x20] sm:$0xf]
    %v2445 = vld [vmem:[%s2435 + $0x24] sm:$0xf]
    %v2446 = vld [vmem:[%s2435 + $0x28] sm:$0xf]
    %v2447 = vld [vmem:[%s2435 + $0x2c] sm:$0xf]
    %v2448 = vld [vmem:[%s2435 + $0x30] sm:$0xf]
    %v2449 = vld [vmem:[%s2435 + $0x34] sm:$0xf]
    %v2450 = vld [vmem:[%s2435 + $0x38] sm:$0xf]
    %v2451 = vld [vmem:[%s2435 + $0x3c] sm:$0xf]
    %v2453 = vshrl.u32 %v2301, 16
    %v2455 = vrot.slane %v2453, 3
    %v2456 = vshll.u32 %v2301, 16
    %v2458 = vrot.slane %v2456, 4
    %v2459 = vor.u32 %v2455, %v2458
    %v2461 = vshrl.u32 %v2433, 16
    %v2463 = vrot.slane %v2461, 3
    %v2464 = vshll.u32 %v2433, 16
    %v2466 = vrot.slane %v2464, 4
    %v2467 = vor.u32 %v2463, %v2466
    %v2468 = vsel %vm749, %v2459, %v2467
    %v2470 = vshrl.u32 %v2302, 16
    %v2472 = vrot.slane %v2470, 3
    %v2473 = vshll.u32 %v2302, 16
    %v2475 = vrot.slane %v2473, 4
    %v2476 = vor.u32 %v2472, %v2475
    %v2478 = vshrl.u32 %v2434, 16
    %v2480 = vrot.slane %v2478, 3
    %v2481 = vshll.u32 %v2434, 16
    %v2483 = vrot.slane %v2481, 4
    %v2484 = vor.u32 %v2480, %v2483
    %v2485 = vsel %vm749, %v2476, %v2484
    %v2504 = vunpack.c.l.b16 %v2436
    %v2505 = vunpack.c.l.b16 %v2437
    %v2506 = vunpack.c.l.b16 %v2438
    %v2507 = vunpack.c.l.b16 %v2439
    %v2508 = vunpack.c.l.b16 %v2440
    %v2509 = vunpack.c.l.b16 %v2441
    %v2510 = vunpack.c.l.b16 %v2442
    %v2511 = vunpack.c.l.b16 %v2443
    %v2512 = vunpack.c.l.b16 %v2444
    %v2513 = vunpack.c.l.b16 %v2445
    %v2514 = vunpack.c.l.b16 %v2446
    %v2515 = vunpack.c.l.b16 %v2447
    %v2516 = vunpack.c.l.b16 %v2448
    %v2517 = vunpack.c.l.b16 %v2449
    %v2518 = vunpack.c.l.b16 %v2450
    %v2519 = vunpack.c.l.b16 %v2451
    %v2520 = vpack.c.b16 %v2505, %v2504
    %v2521 = vpack.c.b16 %v2507, %v2506
    %v2522 = vpack.c.b16 %v2509, %v2508
    %v2523 = vpack.c.b16 %v2511, %v2510
    %v2524 = vpack.c.b16 %v2513, %v2512
    %v2525 = vpack.c.b16 %v2515, %v2514
    %v2526 = vpack.c.b16 %v2517, %v2516
    %v2527 = vpack.c.b16 %v2519, %v2518
    %2536 = vmatprep.subr.bf16.mxu0 0
    %2537 = vmatpush1.bf16.msra.mxu0 %v2520
    %2538 = vmatprep.subr.bf16.mxu0 0
    %2539 = vmatpush1.bf16.msra.mxu0 %v2521
    %2540 = vmatprep.subr.bf16.mxu0 0
    %2541 = vmatpush1.bf16.msra.mxu0 %v2522
    %2542 = vmatprep.subr.bf16.mxu0 0
    %2543 = vmatpush1.bf16.msra.mxu0 %v2523
    %2544 = vmatprep.subr.bf16.mxu0 0
    %2545 = vmatpush1.bf16.msra.mxu0 %v2524
    %2546 = vmatprep.subr.bf16.mxu0 0
    %2547 = vmatpush1.bf16.msra.mxu0 %v2525
    %2548 = vmatprep.subr.bf16.mxu0 0
    %2549 = vmatpush1.bf16.msra.mxu0 %v2526
    %2550 = vmatprep.subr.bf16.mxu0 0
    %2551 = vmatpush1.bf16.msra.mxu0 %v2527
    %2552 = vmatprep.subr.bf16.mxu0 0
    %2553 = vmatpush1.bf16.msra.mxu0 0
    %2554 = vmatprep.subr.bf16.mxu0 0
    %2555 = vmatpush1.bf16.msra.mxu0 0
    %2556 = vmatprep.subr.bf16.mxu0 0
    %2557 = vmatpush1.bf16.msra.mxu0 0
    %2558 = vmatprep.subr.bf16.mxu0 0
    %2559 = vmatpush1.bf16.msra.mxu0 0
    %2560 = vmatprep.subr.bf16.mxu0 0
    %2561 = vmatpush1.bf16.msra.mxu0 0
    %2562 = vmatprep.subr.bf16.mxu0 0
    %2563 = vmatpush1.bf16.msra.mxu0 0
    %2564 = vmatprep.subr.bf16.mxu0 0
    %2565 = vmatpush1.bf16.msra.mxu0 0
    %2566 = vmatprep.subr.bf16.mxu0 0
    %2567 = vmatpush1.bf16.msra.mxu0 0
    %2568 = vmatprep.mubr.bf16.mxu0 0
    %2569 = vmatmul.mubr.bf16.gmra.mrb[0].mxu0 %v2468
    %v2570 = vpop.f32.mrb[0].mxu0
    %v2571 = vadd.f32 0.0, %v2570
    %v2572 = vpop.f32.mrb[0].mxu0
    %v2573 = vpop.f32.mrb[0].mxu0
    %v2574 = vadd.f32 0.0, %v2573
    %v2575 = vpop.f32.mrb[0].mxu0
    %2576 = vmatprep.mubr.bf16.mxu0 0
    %2577 = vmatmul.mubr.bf16.gmra.mrb[0].mxu0 %v2485
    %v2578 = vpop.f32.mrb[0].mxu0
    %v2579 = vadd.f32 0.0, %v2578
    %v2580 = vpop.f32.mrb[0].mxu0
    %v2581 = vpop.f32.mrb[0].mxu0
    %v2582 = vadd.f32 0.0, %v2581
    %v2583 = vpop.f32.mrb[0].mxu0
    %2584 = vdwg.mxu0
    %v2585 = vadd.f32 %v2429, %v2571
    %v2586 = vadd.f32 %v2430, %v2574
    %v2587 = vadd.f32 %v2431, %v2579
    %v2588 = vadd.f32 %v2432, %v2582
    %v2589 = vld [vmem:[#allocation2] sm:$0xf0]
    %v2590 = vld [vmem:[#allocation2 + $0x10] sm:$0xf0]
    %s2591 = scalar_lea.vmem [#allocation8], 1024
    %v2592 = vld [vmem:[%s2591] sm:$0xf]
    %v2593 = vld [vmem:[%s2591 + $0x4] sm:$0xf]
    %v2594 = vld [vmem:[%s2591 + $0x8] sm:$0xf]
    %v2595 = vld [vmem:[%s2591 + $0xc] sm:$0xf]
    %v2596 = vld [vmem:[%s2591 + $0x10] sm:$0xf]
    %v2597 = vld [vmem:[%s2591 + $0x14] sm:$0xf]
    %v2598 = vld [vmem:[%s2591 + $0x18] sm:$0xf]
    %v2599 = vld [vmem:[%s2591 + $0x1c] sm:$0xf]
    %v2600 = vld [vmem:[%s2591 + $0x20] sm:$0xf]
    %v2601 = vld [vmem:[%s2591 + $0x24] sm:$0xf]
    %v2602 = vld [vmem:[%s2591 + $0x28] sm:$0xf]
    %v2603 = vld [vmem:[%s2591 + $0x2c] sm:$0xf]
    %v2604 = vld [vmem:[%s2591 + $0x30] sm:$0xf]
    %v2605 = vld [vmem:[%s2591 + $0x34] sm:$0xf]
    %v2606 = vld [vmem:[%s2591 + $0x38] sm:$0xf]
    %v2607 = vld [vmem:[%s2591 + $0x3c] sm:$0xf]
    %v2612 = vrot.slane %v2589, 4
    %v2613 = vrot.slane %v2433, 4
    %v2614 = vsel %vm910, %v2612, %v2613
    %v2615 = vrot.slane %v2590, 4
    %v2616 = vrot.slane %v2434, 4
    %v2617 = vsel %vm910, %v2615, %v2616
    %v2636 = vunpack.c.l.b16 %v2592
    %v2637 = vunpack.c.l.b16 %v2593
    %v2638 = vunpack.c.l.b16 %v2594
    %v2639 = vunpack.c.l.b16 %v2595
    %v2640 = vunpack.c.l.b16 %v2596
    %v2641 = vunpack.c.l.b16 %v2597
    %v2642 = vunpack.c.l.b16 %v2598
    %v2643 = vunpack.c.l.b16 %v2599
    %v2644 = vunpack.c.l.b16 %v2600
    %v2645 = vunpack.c.l.b16 %v2601
    %v2646 = vunpack.c.l.b16 %v2602
    %v2647 = vunpack.c.l.b16 %v2603
    %v2648 = vunpack.c.l.b16 %v2604
    %v2649 = vunpack.c.l.b16 %v2605
    %v2650 = vunpack.c.l.b16 %v2606
    %v2651 = vunpack.c.l.b16 %v2607
    %v2652 = vpack.c.b16 %v2637, %v2636
    %v2653 = vpack.c.b16 %v2639, %v2638
    %v2654 = vpack.c.b16 %v2641, %v2640
    %v2655 = vpack.c.b16 %v2643, %v2642
    %v2656 = vpack.c.b16 %v2645, %v2644
    %v2657 = vpack.c.b16 %v2647, %v2646
    %v2658 = vpack.c.b16 %v2649, %v2648
    %v2659 = vpack.c.b16 %v2651, %v2650
    %2668 = vmatprep.subr.bf16.mxu0 0
    %2669 = vmatpush1.bf16.msra.mxu0 %v2652
    %2670 = vmatprep.subr.bf16.mxu0 0
    %2671 = vmatpush1.bf16.msra.mxu0 %v2653
    %2672 = vmatprep.subr.bf16.mxu0 0
    %2673 = vmatpush1.bf16.msra.mxu0 %v2654
    %2674 = vmatprep.subr.bf16.mxu0 0
    %2675 = vmatpush1.bf16.msra.mxu0 %v2655
    %2676 = vmatprep.subr.bf16.mxu0 0
    %2677 = vmatpush1.bf16.msra.mxu0 %v2656
    %2678 = vmatprep.subr.bf16.mxu0 0
    %2679 = vmatpush1.bf16.msra.mxu0 %v2657
    %2680 = vmatprep.subr.bf16.mxu0 0
    %2681 = vmatpush1.bf16.msra.mxu0 %v2658
    %2682 = vmatprep.subr.bf16.mxu0 0
    %2683 = vmatpush1.bf16.msra.mxu0 %v2659
    %2684 = vmatprep.subr.bf16.mxu0 0
    %2685 = vmatpush1.bf16.msra.mxu0 0
    %2686 = vmatprep.subr.bf16.mxu0 0
    %2687 = vmatpush1.bf16.msra.mxu0 0
    %2688 = vmatprep.subr.bf16.mxu0 0
    %2689 = vmatpush1.bf16.msra.mxu0 0
    %2690 = vmatprep.subr.bf16.mxu0 0
    %2691 = vmatpush1.bf16.msra.mxu0 0
    %2692 = vmatprep.subr.bf16.mxu0 0
    %2693 = vmatpush1.bf16.msra.mxu0 0
    %2694 = vmatprep.subr.bf16.mxu0 0
    %2695 = vmatpush1.bf16.msra.mxu0 0
    %2696 = vmatprep.subr.bf16.mxu0 0
    %2697 = vmatpush1.bf16.msra.mxu0 0
    %2698 = vmatprep.subr.bf16.mxu0 0
    %2699 = vmatpush1.bf16.msra.mxu0 0
    %2700 = vmatprep.mubr.bf16.mxu0 0
    %2701 = vmatmul.mubr.bf16.gmra.mrb[0].mxu0 %v2614
    %v2702 = vpop.f32.mrb[0].mxu0
    %v2703 = vadd.f32 0.0, %v2702
    %v2704 = vpop.f32.mrb[0].mxu0
    %v2705 = vpop.f32.mrb[0].mxu0
    %v2706 = vadd.f32 0.0, %v2705
    %v2707 = vpop.f32.mrb[0].mxu0
    %2708 = vmatprep.mubr.bf16.mxu0 0
    %2709 = vmatmul.mubr.bf16.gmra.mrb[0].mxu0 %v2617
    %v2710 = vpop.f32.mrb[0].mxu0
    %v2711 = vadd.f32 0.0, %v2710
    %v2712 = vpop.f32.mrb[0].mxu0
    %v2713 = vpop.f32.mrb[0].mxu0
    %v2714 = vadd.f32 0.0, %v2713
    %v2715 = vpop.f32.mrb[0].mxu0
    %2716 = vdwg.mxu0
    %v2717 = vadd.f32 %v2585, %v2703
    %v2718 = vadd.f32 %v2586, %v2706
    %v2719 = vadd.f32 %v2587, %v2711
    %v2720 = vadd.f32 %v2588, %v2714
    %v2721 = vld [vmem:[#allocation2 + $0x8] sm:$0x1f]
    %v2722 = vld [vmem:[#allocation2 + $0x18] sm:$0x1f]
    %s2723 = scalar_lea.vmem [#allocation8], 1088
    %v2724 = vld [vmem:[%s2723] sm:$0xf]
    %v2725 = vld [vmem:[%s2723 + $0x4] sm:$0xf]
    %v2726 = vld [vmem:[%s2723 + $0x8] sm:$0xf]
    %v2727 = vld [vmem:[%s2723 + $0xc] sm:$0xf]
    %v2728 = vld [vmem:[%s2723 + $0x10] sm:$0xf]
    %v2729 = vld [vmem:[%s2723 + $0x14] sm:$0xf]
    %v2730 = vld [vmem:[%s2723 + $0x18] sm:$0xf]
    %v2731 = vld [vmem:[%s2723 + $0x1c] sm:$0xf]
    %v2732 = vld [vmem:[%s2723 + $0x20] sm:$0xf]
    %v2733 = vld [vmem:[%s2723 + $0x24] sm:$0xf]
    %v2734 = vld [vmem:[%s2723 + $0x28] sm:$0xf]
    %v2735 = vld [vmem:[%s2723 + $0x2c] sm:$0xf]
    %v2736 = vld [vmem:[%s2723 + $0x30] sm:$0xf]
    %v2737 = vld [vmem:[%s2723 + $0x34] sm:$0xf]
    %v2738 = vld [vmem:[%s2723 + $0x38] sm:$0xf]
    %v2739 = vld [vmem:[%s2723 + $0x3c] sm:$0xf]
    %v2741 = vshrl.u32 %v2589, 16
    %v2743 = vrot.slane %v2741, 4
    %v2744 = vshll.u32 %v2589, 16
    %v2746 = vrot.slane %v2744, 5
    %v2747 = vor.u32 %v2743, %v2746
    %v2749 = vshrl.u32 %v2721, 16
    %v2751 = vrot.slane %v2749, 4
    %v2752 = vshll.u32 %v2721, 16
    %v2754 = vrot.slane %v2752, 5
    %v2755 = vor.u32 %v2751, %v2754
    %v2756 = vsel %vm1039, %v2747, %v2755
    %v2758 = vshrl.u32 %v2590, 16
    %v2760 = vrot.slane %v2758, 4
    %v2761 = vshll.u32 %v2590, 16
    %v2763 = vrot.slane %v2761, 5
    %v2764 = vor.u32 %v2760, %v2763
    %v2766 = vshrl.u32 %v2722, 16
    %v2768 = vrot.slane %v2766, 4
    %v2769 = vshll.u32 %v2722, 16
    %v2771 = vrot.slane %v2769, 5
    %v2772 = vor.u32 %v2768, %v2771
    %v2773 = vsel %vm1039, %v2764, %v2772
    %v2792 = vunpack.c.l.b16 %v2724
    %v2793 = vunpack.c.l.b16 %v2725
    %v2794 = vunpack.c.l.b16 %v2726
    %v2795 = vunpack.c.l.b16 %v2727
    %v2796 = vunpack.c.l.b16 %v2728
    %v2797 = vunpack.c.l.b16 %v2729
    %v2798 = vunpack.c.l.b16 %v2730
    %v2799 = vunpack.c.l.b16 %v2731
    %v2800 = vunpack.c.l.b16 %v2732
    %v2801 = vunpack.c.l.b16 %v2733
    %v2802 = vunpack.c.l.b16 %v2734
    %v2803 = vunpack.c.l.b16 %v2735
    %v2804 = vunpack.c.l.b16 %v2736
    %v2805 = vunpack.c.l.b16 %v2737
    %v2806 = vunpack.c.l.b16 %v2738
    %v2807 = vunpack.c.l.b16 %v2739
    %v2808 = vpack.c.b16 %v2793, %v2792
    %v2809 = vpack.c.b16 %v2795, %v2794
    %v2810 = vpack.c.b16 %v2797, %v2796
    %v2811 = vpack.c.b16 %v2799, %v2798
    %v2812 = vpack.c.b16 %v2801, %v2800
    %v2813 = vpack.c.b16 %v2803, %v2802
    %v2814 = vpack.c.b16 %v2805, %v2804
    %v2815 = vpack.c.b16 %v2807, %v2806
    %2824 = vmatprep.subr.bf16.mxu0 0
    %2825 = vmatpush1.bf16.msra.mxu0 %v2808
    %2826 = vmatprep.subr.bf16.mxu0 0
    %2827 = vmatpush1.bf16.msra.mxu0 %v2809
    %2828 = vmatprep.subr.bf16.mxu0 0
    %2829 = vmatpush1.bf16.msra.mxu0 %v2810
    %2830 = vmatprep.subr.bf16.mxu0 0
    %2831 = vmatpush1.bf16.msra.mxu0 %v2811
    %2832 = vmatprep.subr.bf16.mxu0 0
    %2833 = vmatpush1.bf16.msra.mxu0 %v2812
    %2834 = vmatprep.subr.bf16.mxu0 0
    %2835 = vmatpush1.bf16.msra.mxu0 %v2813
    %2836 = vmatprep.subr.bf16.mxu0 0
    %2837 = vmatpush1.bf16.msra.mxu0 %v2814
    %2838 = vmatprep.subr.bf16.mxu0 0
    %2839 = vmatpush1.bf16.msra.mxu0 %v2815
    %2840 = vmatprep.subr.bf16.mxu0 0
    %2841 = vmatpush1.bf16.msra.mxu0 0
    %2842 = vmatprep.subr.bf16.mxu0 0
    %2843 = vmatpush1.bf16.msra.mxu0 0
    %2844 = vmatprep.subr.bf16.mxu0 0
    %2845 = vmatpush1.bf16.msra.mxu0 0
    %2846 = vmatprep.subr.bf16.mxu0 0
    %2847 = vmatpush1.bf16.msra.mxu0 0
    %2848 = vmatprep.subr.bf16.mxu0 0
    %2849 = vmatpush1.bf16.msra.mxu0 0
    %2850 = vmatprep.subr.bf16.mxu0 0
    %2851 = vmatpush1.bf16.msra.mxu0 0
    %2852 = vmatprep.subr.bf16.mxu0 0
    %2853 = vmatpush1.bf16.msra.mxu0 0
    %2854 = vmatprep.subr.bf16.mxu0 0
    %2855 = vmatpush1.bf16.msra.mxu0 0
    %2856 = vmatprep.mubr.bf16.mxu0 0
    %2857 = vmatmul.mubr.bf16.gmra.mrb[0].mxu0 %v2756
    %v2858 = vpop.f32.mrb[0].mxu0
    %v2859 = vadd.f32 0.0, %v2858
    %v2860 = vpop.f32.mrb[0].mxu0
    %v2861 = vpop.f32.mrb[0].mxu0
    %v2862 = vadd.f32 0.0, %v2861
    %v2863 = vpop.f32.mrb[0].mxu0
    %2864 = vmatprep.mubr.bf16.mxu0 0
    %2865 = vmatmul.mubr.bf16.gmra.mrb[0].mxu0 %v2773
    %v2866 = vpop.f32.mrb[0].mxu0
    %v2867 = vadd.f32 0.0, %v2866
    %v2868 = vpop.f32.mrb[0].mxu0
    %v2869 = vpop.f32.mrb[0].mxu0
    %v2870 = vadd.f32 0.0, %v2869
    %v2871 = vpop.f32.mrb[0].mxu0
    %2872 = vdwg.mxu0
    %v2873 = vadd.f32 %v2717, %v2859
    %v2874 = vadd.f32 %v2718, %v2862
    %v2875 = vadd.f32 %v2719, %v2867
    %v2876 = vadd.f32 %v2720, %v2870
    %v2877 = vld [vmem:[#allocation2] sm:$0xe0]
    %v2878 = vld [vmem:[#allocation2 + $0x10] sm:$0xe0]
    %s2879 = scalar_lea.vmem [#allocation8], 1152
    %v2880 = vld [vmem:[%s2879] sm:$0xf]
    %v2881 = vld [vmem:[%s2879 + $0x4] sm:$0xf]
    %v2882 = vld [vmem:[%s2879 + $0x8] sm:$0xf]
    %v2883 = vld [vmem:[%s2879 + $0xc] sm:$0xf]
    %v2884 = vld [vmem:[%s2879 + $0x10] sm:$0xf]
    %v2885 = vld [vmem:[%s2879 + $0x14] sm:$0xf]
    %v2886 = vld [vmem:[%s2879 + $0x18] sm:$0xf]
    %v2887 = vld [vmem:[%s2879 + $0x1c] sm:$0xf]
    %v2888 = vld [vmem:[%s2879 + $0x20] sm:$0xf]
    %v2889 = vld [vmem:[%s2879 + $0x24] sm:$0xf]
    %v2890 = vld [vmem:[%s2879 + $0x28] sm:$0xf]
    %v2891 = vld [vmem:[%s2879 + $0x2c] sm:$0xf]
    %v2892 = vld [vmem:[%s2879 + $0x30] sm:$0xf]
    %v2893 = vld [vmem:[%s2879 + $0x34] sm:$0xf]
    %v2894 = vld [vmem:[%s2879 + $0x38] sm:$0xf]
    %v2895 = vld [vmem:[%s2879 + $0x3c] sm:$0xf]
    %v2900 = vrot.slane %v2877, 5
    %v2901 = vrot.slane %v2721, 5
    %v2902 = vsel %vm1200, %v2900, %v2901
    %v2903 = vrot.slane %v2878, 5
    %v2904 = vrot.slane %v2722, 5
    %v2905 = vsel %vm1200, %v2903, %v2904
    %v2924 = vunpack.c.l.b16 %v2880
    %v2925 = vunpack.c.l.b16 %v2881
    %v2926 = vunpack.c.l.b16 %v2882
    %v2927 = vunpack.c.l.b16 %v2883
    %v2928 = vunpack.c.l.b16 %v2884
    %v2929 = vunpack.c.l.b16 %v2885
    %v2930 = vunpack.c.l.b16 %v2886
    %v2931 = vunpack.c.l.b16 %v2887
    %v2932 = vunpack.c.l.b16 %v2888
    %v2933 = vunpack.c.l.b16 %v2889
    %v2934 = vunpack.c.l.b16 %v2890
    %v2935 = vunpack.c.l.b16 %v2891
    %v2936 = vunpack.c.l.b16 %v2892
    %v2937 = vunpack.c.l.b16 %v2893
    %v2938 = vunpack.c.l.b16 %v2894
    %v2939 = vunpack.c.l.b16 %v2895
    %v2940 = vpack.c.b16 %v2925, %v2924
    %v2941 = vpack.c.b16 %v2927, %v2926
    %v2942 = vpack.c.b16 %v2929, %v2928
    %v2943 = vpack.c.b16 %v2931, %v2930
    %v2944 = vpack.c.b16 %v2933, %v2932
    %v2945 = vpack.c.b16 %v2935, %v2934
    %v2946 = vpack.c.b16 %v2937, %v2936
    %v2947 = vpack.c.b16 %v2939, %v2938
    %2956 = vmatprep.subr.bf16.mxu0 0
    %2957 = vmatpush1.bf16.msra.mxu0 %v2940
    %2958 = vmatprep.subr.bf16.mxu0 0
    %2959 = vmatpush1.bf16.msra.mxu0 %v2941
    %2960 = vmatprep.subr.bf16.mxu0 0
    %2961 = vmatpush1.bf16.msra.mxu0 %v2942
    %2962 = vmatprep.subr.bf16.mxu0 0
    %2963 = vmatpush1.bf16.msra.mxu0 %v2943
    %2964 = vmatprep.subr.bf16.mxu0 0
    %2965 = vmatpush1.bf16.msra.mxu0 %v2944
    %2966 = vmatprep.subr.bf16.mxu0 0
    %2967 = vmatpush1.bf16.msra.mxu0 %v2945
    %2968 = vmatprep.subr.bf16.mxu0 0
    %2969 = vmatpush1.bf16.msra.mxu0 %v2946
    %2970 = vmatprep.subr.bf16.mxu0 0
    %2971 = vmatpush1.bf16.msra.mxu0 %v2947
    %2972 = vmatprep.subr.bf16.mxu0 0
    %2973 = vmatpush1.bf16.msra.mxu0 0
    %2974 = vmatprep.subr.bf16.mxu0 0
    %2975 = vmatpush1.bf16.msra.mxu0 0
    %2976 = vmatprep.subr.bf16.mxu0 0
    %2977 = vmatpush1.bf16.msra.mxu0 0
    %2978 = vmatprep.subr.bf16.mxu0 0
    %2979 = vmatpush1.bf16.msra.mxu0 0
    %2980 = vmatprep.subr.bf16.mxu0 0
    %2981 = vmatpush1.bf16.msra.mxu0 0
    %2982 = vmatprep.subr.bf16.mxu0 0
    %2983 = vmatpush1.bf16.msra.mxu0 0
    %2984 = vmatprep.subr.bf16.mxu0 0
    %2985 = vmatpush1.bf16.msra.mxu0 0
    %2986 = vmatprep.subr.bf16.mxu0 0
    %2987 = vmatpush1.bf16.msra.mxu0 0
    %2988 = vmatprep.mubr.bf16.mxu0 0
    %2989 = vmatmul.mubr.bf16.gmra.mrb[0].mxu0 %v2902
    %v2990 = vpop.f32.mrb[0].mxu0
    %v2991 = vadd.f32 0.0, %v2990
    %v2992 = vpop.f32.mrb[0].mxu0
    %v2993 = vpop.f32.mrb[0].mxu0
    %v2994 = vadd.f32 0.0, %v2993
    %v2995 = vpop.f32.mrb[0].mxu0
    %2996 = vmatprep.mubr.bf16.mxu0 0
    %2997 = vmatmul.mubr.bf16.gmra.mrb[0].mxu0 %v2905
    %v2998 = vpop.f32.mrb[0].mxu0
    %v2999 = vadd.f32 0.0, %v2998
    %v3000 = vpop.f32.mrb[0].mxu0
    %v3001 = vpop.f32.mrb[0].mxu0
    %v3002 = vadd.f32 0.0, %v3001
    %v3003 = vpop.f32.mrb[0].mxu0
    %3004 = vdwg.mxu0
    %v3005 = vadd.f32 %v2873, %v2991
    %v3006 = vadd.f32 %v2874, %v2994
    %v3007 = vadd.f32 %v2875, %v2999
    %v3008 = vadd.f32 %v2876, %v3002
    %v3009 = vld [vmem:[#allocation2 + $0x8] sm:$0x3f]
    %v3010 = vld [vmem:[#allocation2 + $0x18] sm:$0x3f]
    %s3011 = scalar_lea.vmem [#allocation8], 1216
    %v3012 = vld [vmem:[%s3011] sm:$0xf]
    %v3013 = vld [vmem:[%s3011 + $0x4] sm:$0xf]
    %v3014 = vld [vmem:[%s3011 + $0x8] sm:$0xf]
    %v3015 = vld [vmem:[%s3011 + $0xc] sm:$0xf]
    %v3016 = vld [vmem:[%s3011 + $0x10] sm:$0xf]
    %v3017 = vld [vmem:[%s3011 + $0x14] sm:$0xf]
    %v3018 = vld [vmem:[%s3011 + $0x18] sm:$0xf]
    %v3019 = vld [vmem:[%s3011 + $0x1c] sm:$0xf]
    %v3020 = vld [vmem:[%s3011 + $0x20] sm:$0xf]
    %v3021 = vld [vmem:[%s3011 + $0x24] sm:$0xf]
    %v3022 = vld [vmem:[%s3011 + $0x28] sm:$0xf]
    %v3023 = vld [vmem:[%s3011 + $0x2c] sm:$0xf]
    %v3024 = vld [vmem:[%s3011 + $0x30] sm:$0xf]
    %v3025 = vld [vmem:[%s3011 + $0x34] sm:$0xf]
    %v3026 = vld [vmem:[%s3011 + $0x38] sm:$0xf]
    %v3027 = vld [vmem:[%s3011 + $0x3c] sm:$0xf]
    %v3029 = vshrl.u32 %v2877, 16
    %v3031 = vrot.slane %v3029, 5
    %v3032 = vshll.u32 %v2877, 16
    %v3034 = vrot.slane %v3032, 6
    %v3035 = vor.u32 %v3031, %v3034
    %v3037 = vshrl.u32 %v3009, 16
    %v3039 = vrot.slane %v3037, 5
    %v3040 = vshll.u32 %v3009, 16
    %v3042 = vrot.slane %v3040, 6
    %v3043 = vor.u32 %v3039, %v3042
    %v3044 = vsel %vm1329, %v3035, %v3043
    %v3046 = vshrl.u32 %v2878, 16
    %v3048 = vrot.slane %v3046, 5
    %v3049 = vshll.u32 %v2878, 16
    %v3051 = vrot.slane %v3049, 6
    %v3052 = vor.u32 %v3048, %v3051
    %v3054 = vshrl.u32 %v3010, 16
    %v3056 = vrot.slane %v3054, 5
    %v3057 = vshll.u32 %v3010, 16
    %v3059 = vrot.slane %v3057, 6
    %v3060 = vor.u32 %v3056, %v3059
    %v3061 = vsel %vm1329, %v3052, %v3060
    %v3080 = vunpack.c.l.b16 %v3012
    %v3081 = vunpack.c.l.b16 %v3013
    %v3082 = vunpack.c.l.b16 %v3014
    %v3083 = vunpack.c.l.b16 %v3015
    %v3084 = vunpack.c.l.b16 %v3016
    %v3085 = vunpack.c.l.b16 %v3017
    %v3086 = vunpack.c.l.b16 %v3018
    %v3087 = vunpack.c.l.b16 %v3019
    %v3088 = vunpack.c.l.b16 %v3020
    %v3089 = vunpack.c.l.b16 %v3021
    %v3090 = vunpack.c.l.b16 %v3022
    %v3091 = vunpack.c.l.b16 %v3023
    %v3092 = vunpack.c.l.b16 %v3024
    %v3093 = vunpack.c.l.b16 %v3025
    %v3094 = vunpack.c.l.b16 %v3026
    %v3095 = vunpack.c.l.b16 %v3027
    %v3096 = vpack.c.b16 %v3081, %v3080
    %v3097 = vpack.c.b16 %v3083, %v3082
    %v3098 = vpack.c.b16 %v3085, %v3084
    %v3099 = vpack.c.b16 %v3087, %v3086
    %v3100 = vpack.c.b16 %v3089, %v3088
    %v3101 = vpack.c.b16 %v3091, %v3090
    %v3102 = vpack.c.b16 %v3093, %v3092
    %v3103 = vpack.c.b16 %v3095, %v3094
    %3112 = vmatprep.subr.bf16.mxu0 0
    %3113 = vmatpush1.bf16.msra.mxu0 %v3096
    %3114 = vmatprep.subr.bf16.mxu0 0
    %3115 = vmatpush1.bf16.msra.mxu0 %v3097
    %3116 = vmatprep.subr.bf16.mxu0 0
    %3117 = vmatpush1.bf16.msra.mxu0 %v3098
    %3118 = vmatprep.subr.bf16.mxu0 0
    %3119 = vmatpush1.bf16.msra.mxu0 %v3099
    %3120 = vmatprep.subr.bf16.mxu0 0
    %3121 = vmatpush1.bf16.msra.mxu0 %v3100
    %3122 = vmatprep.subr.bf16.mxu0 0
    %3123 = vmatpush1.bf16.msra.mxu0 %v3101
    %3124 = vmatprep.subr.bf16.mxu0 0
    %3125 = vmatpush1.bf16.msra.mxu0 %v3102
    %3126 = vmatprep.subr.bf16.mxu0 0
    %3127 = vmatpush1.bf16.msra.mxu0 %v3103
    %3128 = vmatprep.subr.bf16.mxu0 0
    %3129 = vmatpush1.bf16.msra.mxu0 0
    %3130 = vmatprep.subr.bf16.mxu0 0
    %3131 = vmatpush1.bf16.msra.mxu0 0
    %3132 = vmatprep.subr.bf16.mxu0 0
    %3133 = vmatpush1.bf16.msra.mxu0 0
    %3134 = vmatprep.subr.bf16.mxu0 0
    %3135 = vmatpush1.bf16.msra.mxu0 0
    %3136 = vmatprep.subr.bf16.mxu0 0
    %3137 = vmatpush1.bf16.msra.mxu0 0
    %3138 = vmatprep.subr.bf16.mxu0 0
    %3139 = vmatpush1.bf16.msra.mxu0 0
    %3140 = vmatprep.subr.bf16.mxu0 0
    %3141 = vmatpush1.bf16.msra.mxu0 0
    %3142 = vmatprep.subr.bf16.mxu0 0
    %3143 = vmatpush1.bf16.msra.mxu0 0
    %3144 = vmatprep.mubr.bf16.mxu0 0
    %3145 = vmatmul.mubr.bf16.gmra.mrb[0].mxu0 %v3044
    %v3146 = vpop.f32.mrb[0].mxu0
    %v3147 = vadd.f32 0.0, %v3146
    %v3148 = vpop.f32.mrb[0].mxu0
    %v3149 = vpop.f32.mrb[0].mxu0
    %v3150 = vadd.f32 0.0, %v3149
    %v3151 = vpop.f32.mrb[0].mxu0
    %3152 = vmatprep.mubr.bf16.mxu0 0
    %3153 = vmatmul.mubr.bf16.gmra.mrb[0].mxu0 %v3061
    %v3154 = vpop.f32.mrb[0].mxu0
    %v3155 = vadd.f32 0.0, %v3154
    %v3156 = vpop.f32.mrb[0].mxu0
    %v3157 = vpop.f32.mrb[0].mxu0
    %v3158 = vadd.f32 0.0, %v3157
    %v3159 = vpop.f32.mrb[0].mxu0
    %3160 = vdwg.mxu0
    %v3161 = vadd.f32 %v3005, %v3147
    %v3162 = vadd.f32 %v3006, %v3150
    %v3163 = vadd.f32 %v3007, %v3155
    %v3164 = vadd.f32 %v3008, %v3158
    %v3165 = vld [vmem:[#allocation2] sm:$0xc0]
    %v3166 = vld [vmem:[#allocation2 + $0x10] sm:$0xc0]
    %s3167 = scalar_lea.vmem [#allocation8], 1280
    %v3168 = vld [vmem:[%s3167] sm:$0xf]
    %v3169 = vld [vmem:[%s3167 + $0x4] sm:$0xf]
    %v3170 = vld [vmem:[%s3167 + $0x8] sm:$0xf]
    %v3171 = vld [vmem:[%s3167 + $0xc] sm:$0xf]
    %v3172 = vld [vmem:[%s3167 + $0x10] sm:$0xf]
    %v3173 = vld [vmem:[%s3167 + $0x14] sm:$0xf]
    %v3174 = vld [vmem:[%s3167 + $0x18] sm:$0xf]
    %v3175 = vld [vmem:[%s3167 + $0x1c] sm:$0xf]
    %v3176 = vld [vmem:[%s3167 + $0x20] sm:$0xf]
    %v3177 = vld [vmem:[%s3167 + $0x24] sm:$0xf]
    %v3178 = vld [vmem:[%s3167 + $0x28] sm:$0xf]
    %v3179 = vld [vmem:[%s3167 + $0x2c] sm:$0xf]
    %v3180 = vld [vmem:[%s3167 + $0x30] sm:$0xf]
    %v3181 = vld [vmem:[%s3167 + $0x34] sm:$0xf]
    %v3182 = vld [vmem:[%s3167 + $0x38] sm:$0xf]
    %v3183 = vld [vmem:[%s3167 + $0x3c] sm:$0xf]
    %v3188 = vrot.slane %v3165, 6
    %v3189 = vrot.slane %v3009, 6
    %v3190 = vsel %vm1490, %v3188, %v3189
    %v3191 = vrot.slane %v3166, 6
    %v3192 = vrot.slane %v3010, 6
    %v3193 = vsel %vm1490, %v3191, %v3192
    %v3212 = vunpack.c.l.b16 %v3168
    %v3213 = vunpack.c.l.b16 %v3169
    %v3214 = vunpack.c.l.b16 %v3170
    %v3215 = vunpack.c.l.b16 %v3171
    %v3216 = vunpack.c.l.b16 %v3172
    %v3217 = vunpack.c.l.b16 %v3173
    %v3218 = vunpack.c.l.b16 %v3174
    %v3219 = vunpack.c.l.b16 %v3175
    %v3220 = vunpack.c.l.b16 %v3176
    %v3221 = vunpack.c.l.b16 %v3177
    %v3222 = vunpack.c.l.b16 %v3178
    %v3223 = vunpack.c.l.b16 %v3179
    %v3224 = vunpack.c.l.b16 %v3180
    %v3225 = vunpack.c.l.b16 %v3181
    %v3226 = vunpack.c.l.b16 %v3182
    %v3227 = vunpack.c.l.b16 %v3183
    %v3228 = vpack.c.b16 %v3213, %v3212
    %v3229 = vpack.c.b16 %v3215, %v3214
    %v3230 = vpack.c.b16 %v3217, %v3216
    %v3231 = vpack.c.b16 %v3219, %v3218
    %v3232 = vpack.c.b16 %v3221, %v3220
    %v3233 = vpack.c.b16 %v3223, %v3222
    %v3234 = vpack.c.b16 %v3225, %v3224
    %v3235 = vpack.c.b16 %v3227, %v3226
    %3244 = vmatprep.subr.bf16.mxu0 0
    %3245 = vmatpush1.bf16.msra.mxu0 %v3228
    %3246 = vmatprep.subr.bf16.mxu0 0
    %3247 = vmatpush1.bf16.msra.mxu0 %v3229
    %3248 = vmatprep.subr.bf16.mxu0 0
    %3249 = vmatpush1.bf16.msra.mxu0 %v3230
    %3250 = vmatprep.subr.bf16.mxu0 0
    %3251 = vmatpush1.bf16.msra.mxu0 %v3231
    %3252 = vmatprep.subr.bf16.mxu0 0
    %3253 = vmatpush1.bf16.msra.mxu0 %v3232
    %3254 = vmatprep.subr.bf16.mxu0 0
    %3255 = vmatpush1.bf16.msra.mxu0 %v3233
    %3256 = vmatprep.subr.bf16.mxu0 0
    %3257 = vmatpush1.bf16.msra.mxu0 %v3234
    %3258 = vmatprep.subr.bf16.mxu0 0
    %3259 = vmatpush1.bf16.msra.mxu0 %v3235
    %3260 = vmatprep.subr.bf16.mxu0 0
    %3261 = vmatpush1.bf16.msra.mxu0 0
    %3262 = vmatprep.subr.bf16.mxu0 0
    %3263 = vmatpush1.bf16.msra.mxu0 0
    %3264 = vmatprep.subr.bf16.mxu0 0
    %3265 = vmatpush1.bf16.msra.mxu0 0
    %3266 = vmatprep.subr.bf16.mxu0 0
    %3267 = vmatpush1.bf16.msra.mxu0 0
    %3268 = vmatprep.subr.bf16.mxu0 0
    %3269 = vmatpush1.bf16.msra.mxu0 0
    %3270 = vmatprep.subr.bf16.mxu0 0
    %3271 = vmatpush1.bf16.msra.mxu0 0
    %3272 = vmatprep.subr.bf16.mxu0 0
    %3273 = vmatpush1.bf16.msra.mxu0 0
    %3274 = vmatprep.subr.bf16.mxu0 0
    %3275 = vmatpush1.bf16.msra.mxu0 0
    %3276 = vmatprep.mubr.bf16.mxu0 0
    %3277 = vmatmul.mubr.bf16.gmra.mrb[0].mxu0 %v3190
    %v3278 = vpop.f32.mrb[0].mxu0
    %v3279 = vadd.f32 0.0, %v3278
    %v3280 = vpop.f32.mrb[0].mxu0
    %v3281 = vpop.f32.mrb[0].mxu0
    %v3282 = vadd.f32 0.0, %v3281
    %v3283 = vpop.f32.mrb[0].mxu0
    %3284 = vmatprep.mubr.bf16.mxu0 0
    %3285 = vmatmul.mubr.bf16.gmra.mrb[0].mxu0 %v3193
    %v3286 = vpop.f32.mrb[0].mxu0
    %v3287 = vadd.f32 0.0, %v3286
    %v3288 = vpop.f32.mrb[0].mxu0
    %v3289 = vpop.f32.mrb[0].mxu0
    %v3290 = vadd.f32 0.0, %v3289
    %v3291 = vpop.f32.mrb[0].mxu0
    %3292 = vdwg.mxu0
    %v3293 = vadd.f32 %v3161, %v3279
    %v3294 = vadd.f32 %v3162, %v3282
    %v3295 = vadd.f32 %v3163, %v3287
    %v3296 = vadd.f32 %v3164, %v3290
    %v3297 = vld [vmem:[#allocation2 + $0x8] sm:$0x7f]
    %v3298 = vld [vmem:[#allocation2 + $0x18] sm:$0x7f]
    %s3299 = scalar_lea.vmem [#allocation8], 1344
    %v3300 = vld [vmem:[%s3299] sm:$0xf]
    %v3301 = vld [vmem:[%s3299 + $0x4] sm:$0xf]
    %v3302 = vld [vmem:[%s3299 + $0x8] sm:$0xf]
    %v3303 = vld [vmem:[%s3299 + $0xc] sm:$0xf]
    %v3304 = vld [vmem:[%s3299 + $0x10] sm:$0xf]
    %v3305 = vld [vmem:[%s3299 + $0x14] sm:$0xf]
    %v3306 = vld [vmem:[%s3299 + $0x18] sm:$0xf]
    %v3307 = vld [vmem:[%s3299 + $0x1c] sm:$0xf]
    %v3308 = vld [vmem:[%s3299 + $0x20] sm:$0xf]
    %v3309 = vld [vmem:[%s3299 + $0x24] sm:$0xf]
    %v3310 = vld [vmem:[%s3299 + $0x28] sm:$0xf]
    %v3311 = vld [vmem:[%s3299 + $0x2c] sm:$0xf]
    %v3312 = vld [vmem:[%s3299 + $0x30] sm:$0xf]
    %v3313 = vld [vmem:[%s3299 + $0x34] sm:$0xf]
    %v3314 = vld [vmem:[%s3299 + $0x38] sm:$0xf]
    %v3315 = vld [vmem:[%s3299 + $0x3c] sm:$0xf]
    %v3317 = vshrl.u32 %v3165, 16
    %v3319 = vrot.slane %v3317, 6
    %v3320 = vshll.u32 %v3165, 16
    %v3322 = vrot.slane %v3320, 7
    %v3323 = vor.u32 %v3319, %v3322
    %v3325 = vshrl.u32 %v3297, 16
    %v3327 = vrot.slane %v3325, 6
    %v3328 = vshll.u32 %v3297, 16
    %v3330 = vrot.slane %v3328, 7
    %v3331 = vor.u32 %v3327, %v3330
    %v3332 = vsel %vm1619, %v3323, %v3331
    %v3334 = vshrl.u32 %v3166, 16
    %v3336 = vrot.slane %v3334, 6
    %v3337 = vshll.u32 %v3166, 16
    %v3339 = vrot.slane %v3337, 7
    %v3340 = vor.u32 %v3336, %v3339
    %v3342 = vshrl.u32 %v3298, 16
    %v3344 = vrot.slane %v3342, 6
    %v3345 = vshll.u32 %v3298, 16
    %v3347 = vrot.slane %v3345, 7
    %v3348 = vor.u32 %v3344, %v3347
    %v3349 = vsel %vm1619, %v3340, %v3348
    %v3368 = vunpack.c.l.b16 %v3300
    %v3369 = vunpack.c.l.b16 %v3301
    %v3370 = vunpack.c.l.b16 %v3302
    %v3371 = vunpack.c.l.b16 %v3303
    %v3372 = vunpack.c.l.b16 %v3304
    %v3373 = vunpack.c.l.b16 %v3305
    %v3374 = vunpack.c.l.b16 %v3306
    %v3375 = vunpack.c.l.b16 %v3307
    %v3376 = vunpack.c.l.b16 %v3308
    %v3377 = vunpack.c.l.b16 %v3309
    %v3378 = vunpack.c.l.b16 %v3310
    %v3379 = vunpack.c.l.b16 %v3311
    %v3380 = vunpack.c.l.b16 %v3312
    %v3381 = vunpack.c.l.b16 %v3313
    %v3382 = vunpack.c.l.b16 %v3314
    %v3383 = vunpack.c.l.b16 %v3315
    %v3384 = vpack.c.b16 %v3369, %v3368
    %v3385 = vpack.c.b16 %v3371, %v3370
    %v3386 = vpack.c.b16 %v3373, %v3372
    %v3387 = vpack.c.b16 %v3375, %v3374
    %v3388 = vpack.c.b16 %v3377, %v3376
    %v3389 = vpack.c.b16 %v3379, %v3378
    %v3390 = vpack.c.b16 %v3381, %v3380
    %v3391 = vpack.c.b16 %v3383, %v3382
    %3400 = vmatprep.subr.bf16.mxu0 0
    %3401 = vmatpush1.bf16.msra.mxu0 %v3384
    %3402 = vmatprep.subr.bf16.mxu0 0
    %3403 = vmatpush1.bf16.msra.mxu0 %v3385
    %3404 = vmatprep.subr.bf16.mxu0 0
    %3405 = vmatpush1.bf16.msra.mxu0 %v3386
    %3406 = vmatprep.subr.bf16.mxu0 0
    %3407 = vmatpush1.bf16.msra.mxu0 %v3387
    %3408 = vmatprep.subr.bf16.mxu0 0
    %3409 = vmatpush1.bf16.msra.mxu0 %v3388
    %3410 = vmatprep.subr.bf16.mxu0 0
    %3411 = vmatpush1.bf16.msra.mxu0 %v3389
    %3412 = vmatprep.subr.bf16.mxu0 0
    %3413 = vmatpush1.bf16.msra.mxu0 %v3390
    %3414 = vmatprep.subr.bf16.mxu0 0
    %3415 = vmatpush1.bf16.msra.mxu0 %v3391
    %3416 = vmatprep.subr.bf16.mxu0 0
    %3417 = vmatpush1.bf16.msra.mxu0 0
    %3418 = vmatprep.subr.bf16.mxu0 0
    %3419 = vmatpush1.bf16.msra.mxu0 0
    %3420 = vmatprep.subr.bf16.mxu0 0
    %3421 = vmatpush1.bf16.msra.mxu0 0
    %3422 = vmatprep.subr.bf16.mxu0 0
    %3423 = vmatpush1.bf16.msra.mxu0 0
    %3424 = vmatprep.subr.bf16.mxu0 0
    %3425 = vmatpush1.bf16.msra.mxu0 0
    %3426 = vmatprep.subr.bf16.mxu0 0
    %3427 = vmatpush1.bf16.msra.mxu0 0
    %3428 = vmatprep.subr.bf16.mxu0 0
    %3429 = vmatpush1.bf16.msra.mxu0 0
    %3430 = vmatprep.subr.bf16.mxu0 0
    %3431 = vmatpush1.bf16.msra.mxu0 0
    %3432 = vmatprep.mubr.bf16.mxu0 0
    %3433 = vmatmul.mubr.bf16.gmra.mrb[0].mxu0 %v3332
    %v3434 = vpop.f32.mrb[0].mxu0
    %v3435 = vadd.f32 0.0, %v3434
    %v3436 = vpop.f32.mrb[0].mxu0
    %v3437 = vpop.f32.mrb[0].mxu0
    %v3438 = vadd.f32 0.0, %v3437
    %v3439 = vpop.f32.mrb[0].mxu0
    %3440 = vmatprep.mubr.bf16.mxu0 0
    %3441 = vmatmul.mubr.bf16.gmra.mrb[0].mxu0 %v3349
    %v3442 = vpop.f32.mrb[0].mxu0
    %v3443 = vadd.f32 0.0, %v3442
    %v3444 = vpop.f32.mrb[0].mxu0
    %v3445 = vpop.f32.mrb[0].mxu0
    %v3446 = vadd.f32 0.0, %v3445
    %v3447 = vpop.f32.mrb[0].mxu0
    %3448 = vdwg.mxu0
    %v3449 = vadd.f32 %v3293, %v3435
    %v3450 = vadd.f32 %v3294, %v3438
    %v3451 = vadd.f32 %v3295, %v3443
    %v3452 = vadd.f32 %v3296, %v3446
    %v3453 = vlaneseq
    %v3454 = vshrl.u32 %v3453, 7
    %v3455 = vsub.s32 5, %v3454
    %v3456 = vrot.slane %v59, %v3455
    %v3457 = vadd.f32 %v3449, %v3456
    %v3458 = vadd.f32 %v3450, %v3456
    %v3459 = vadd.f32 %v3451, %v3456
    %v3460 = vadd.f32 %v3452, %v3456
    %v3461 = vadd.f32 %v3457, %v55
    %v3462 = vadd.f32 %v3458, %v56
    %v3463 = vadd.f32 %v3459, %v57
    %v3464 = vadd.f32 %v3460, %v58
    %3465 = vst [vmem:[#allocation9] sm:$0xff] %v3461
    %3466 = vst [vmem:[#allocation9 + $0x8] sm:$0xff] %v3462
    %3467 = vst [vmem:[#allocation9 + $0x10] sm:$0xff] %v3463
    %3468 = vst [vmem:[#allocation9 + $0x18] sm:$0xff] %v3464
    // Predicated region
    $region26: #{tpu_custom_call.1} parent=1 // pred_check
      _
    $region27: #{tpu_custom_call.1} parent=1 // pred_check_branch
      %3470 = sbr.rel (0) target = $region29
    $region28: #{tpu_custom_call.1} parent=1 // pred_region
      %s3472 = ssub.s32 512, 512
      %3473 = vsyncadd [#allocation5], %s3472
      %s3474 = sshll.u32 [#allocation9], 4
      %s3475 = int_to_ptr.vmem [resolvable:$true] %s3474
      %3480 = dma.vmem_to_hbm [thread:$0]  %s3475, 512, %s3, [#allocation5], 128, 128, 8
    $region29: #{tpu_custom_call.1} parent=1 // pred_fallthru
      _
    // Predicated region
    $region30: #{tpu_custom_call.1} parent=1 // pred_check
      _
    $region31: #{tpu_custom_call.1} parent=1 // pred_check_branch
      %3482 = sbr.rel (0) target = $region33
    $region32: #{tpu_custom_call.1} parent=1 // pred_region
      %3483 = dma.done [#allocation5], 512
    $region33: #{tpu_custom_call.1} parent=1 // pred_fallthru
      _
    %3484 = vsyncpa [#allocation4], 1
    %3485 = vsyncpa [#allocation7], 1
    %3486 = vsyncpa [#allocation5], 1

</llo_original>
